<compile_context>
chip_gen: v6e
topology: v6e:2x2x1
jax: 0.10.0
libtpu: 0.0.40
codegen_flags: <defaults>
</compile_context>

<pallas_src>
import math

import jax
import jax.numpy as jnp
from jax.experimental import pallas as pl
from jax.experimental.pallas import tpu as pltpu


def _round_up(x, m):
    return (x + m - 1) // m * m


# ----------------------------------------------------------------------------
# Fused kernel: conv1 -> ReLU -> conv2 -> ReLU -> mean_T -> fc1 -> ReLU
#               -> fc2 -> ReLU -> fc3   (dropouts are inference identity)
# ----------------------------------------------------------------------------
def _harcnn_kernel(x_ref, w1_ref, b1_ref, w2_ref, b2_ref,
                   w3_ref, b3_ref, w4_ref, b4_ref, w5_ref, b5_ref, o_ref):
    TB, T, _ = x_ref.shape

    def conv_relu(h, w_ref, b_ref):
        # h: (TB, T, Cin) f32.  w_ref: (K, Cin, OC) bf16.  b_ref: (1, OC) f32.
        K, Cin, OC = w_ref.shape
        P = K // 2
        pad = jnp.zeros((TB, P, Cin), jnp.float32)
        hp = jnp.concatenate([pad, h, pad], axis=1)          # (TB, T+2P, Cin)
        acc = jnp.zeros((TB * T, OC), jnp.float32)
        # K shifted-tap matmuls: out[:, t] += h[:, t+k-P] @ W_k  (zero outside).
        for k in range(K):
            tap = hp[:, k:k + T, :].reshape(TB * T, Cin).astype(jnp.bfloat16)
            acc = acc + jnp.dot(tap, w_ref[k],
                                preferred_element_type=jnp.float32)
        out = jnp.maximum(acc + b_ref[...], 0.0)             # bias + ReLU in f32
        return out.reshape(TB, T, OC)

    x = x_ref[...]                                           # (TB, T, CIN) f32
    h1 = conv_relu(x, w1_ref, b1_ref)                        # (TB, T, OC) f32
    h2 = conv_relu(h1, w2_ref, b2_ref)                       # (TB, T, OC) f32

    # Temporal mean pool (unrolled static sublane slices; T is small & static).
    feat = h2[:, 0, :]
    for t in range(1, T):
        feat = feat + h2[:, t, :]
    feat = feat * (1.0 / T)                                  # (TB, OC) f32

    h = jnp.dot(feat.astype(jnp.bfloat16), w3_ref[...],
                preferred_element_type=jnp.float32) + b3_ref[...]
    h = jnp.maximum(h, 0.0)                                  # (TB, 512)
    h = jnp.dot(h.astype(jnp.bfloat16), w4_ref[...],
                preferred_element_type=jnp.float32) + b4_ref[...]
    h = jnp.maximum(h, 0.0)                                  # (TB, 512)
    # Dropout(p/2) = identity at inference; lane-padded classifier.
    o_ref[...] = jnp.dot(h.astype(jnp.bfloat16), w5_ref[...],
                         preferred_element_type=jnp.float32) + b5_ref[...]


def _const_index_map(ndim):
    def imap(i):
        return (0,) * ndim
    return imap


def harcnn_forward(input_seq, packed, num_classes, *, tile_b=256):
    """input_seq: (B, T, C_in) -> logits (B, num_classes).

    tile_b: batch tile (MXU M-dim). 256 suits v6e/v7x; use 128 on v5e.
    """
    B, T, C = input_seq.shape
    tile_b = max(8, min(tile_b, _round_up(B, 8)))
    Bp = _round_up(B, tile_b)

    x = input_seq.astype(jnp.float32)
    if Bp != B:
        x = jnp.pad(x, ((0, Bp - B), (0, 0), (0, 0)))

    weights = [packed["W1"], packed["b1"], packed["W2"], packed["b2"],
               packed["W3"], packed["b3"], packed["W4"], packed["b4"],
               packed["W5"], packed["b5"]]

    K, _, OC = packed["W1"].shape
    H1 = packed["W3"].shape[1]
    NP = packed["W5"].shape[1]                               # lane-padded classes

    flops = 2 * Bp * (T * K * C * OC + T * K * OC * OC
                      + OC * H1 + H1 * H1 + H1 * NP)
    bytes_accessed = (x.size * x.dtype.itemsize
                      + sum(int(w.size) * w.dtype.itemsize for w in weights)
                      + Bp * NP * 4)

    out = pl.pallas_call(
        _harcnn_kernel,
        out_shape=jax.ShapeDtypeStruct((Bp, NP), jnp.float32),
        grid=(Bp // tile_b,),
        in_specs=[pl.BlockSpec((tile_b, T, C), lambda i: (i, 0, 0))]
                 + [pl.BlockSpec(w.shape, _const_index_map(w.ndim))
                    for w in weights],
        out_specs=pl.BlockSpec((tile_b, NP), lambda i: (i, 0)),
        compiler_params=pltpu.CompilerParams(
            dimension_semantics=("parallel",)),
        cost_estimate=pl.CostEstimate(flops=int(flops), transcendentals=0,
                                      bytes_accessed=int(bytes_accessed)),
    )(x, *weights)
    return out[:B, :num_classes]


# ----------------------------------------------------------------------------
# Weight preprocessing (done once): conv taps to (K, IC, OC), bf16 matmul
# weights, f32 biases, lane-padded classifier.
# ----------------------------------------------------------------------------
def pack_params(params, num_classes, lane=128):
    ncp = _round_up(num_classes, lane)
    W5 = params["fc3_w"].astype(jnp.float32)
    b5 = params["fc3_b"].astype(jnp.float32)
    W5p = jnp.zeros((W5.shape[0], ncp), jnp.float32).at[:, :num_classes].set(W5)
    b5p = jnp.zeros((ncp,), jnp.float32).at[:num_classes].set(b5)
    return {
        # (OC, IC, K) -> (K, IC, OC): tap k maps input at t+k-K//2 through (IC,OC)
        "W1": jnp.transpose(params["conv1_w"], (2, 1, 0)).astype(jnp.bfloat16),
        "b1": params["conv1_b"].astype(jnp.float32)[None, :],
        "W2": jnp.transpose(params["conv2_w"], (2, 1, 0)).astype(jnp.bfloat16),
        "b2": params["conv2_b"].astype(jnp.float32)[None, :],
        "W3": params["fc1_w"].astype(jnp.bfloat16),
        "b3": params["fc1_b"].astype(jnp.float32)[None, :],
        "W4": params["fc2_w"].astype(jnp.bfloat16),
        "b4": params["fc2_b"].astype(jnp.float32)[None, :],
        "W5": W5p.astype(jnp.bfloat16),
        "b5": b5p[None, :],
    }


# ----------------------------------------------------------------------------
# Parameter initialization (PyTorch-style uniform bounds, deterministic)
# ----------------------------------------------------------------------------
def init_params(key, input_size=6, num_kernels=64, kernel_sizes=(7, 7), num_classes=12):
    params = {}
    keys = jax.random.split(key, 2 * len(kernel_sizes) + 6)
    ki = 0
    in_ch = input_size
    for li, K in enumerate(kernel_sizes, start=1):
        bound = 1.0 / math.sqrt(in_ch * K)
        params[f"conv{li}_w"] = jax.random.uniform(
            keys[ki], (num_kernels, in_ch, K), jnp.float32, -bound, bound)
        params[f"conv{li}_b"] = jax.random.uniform(
            keys[ki + 1], (num_kernels,), jnp.float32, -bound, bound)
        ki += 2
        in_ch = num_kernels

    dims = [(num_kernels, 512), (512, 512), (512, num_classes)]
    for idx, (din, dout) in enumerate(dims, start=1):
        bound = 1.0 / math.sqrt(din)
        # Linear weights stored pre-transposed as (in, out)
        params[f"fc{idx}_w"] = jax.random.uniform(
            keys[ki], (din, dout), jnp.float32, -bound, bound)
        params[f"fc{idx}_b"] = jax.random.uniform(
            keys[ki + 1], (dout,), jnp.float32, -bound, bound)
        ki += 2
    return params


# ----------------------------------------------------------------------------
# Pure-JAX f32 reference (direct padded conv) for correctness checking
# ----------------------------------------------------------------------------
def _reference_forward(x, params):
    def conv1d_same(x_btc, w, b):      # w: (OC, IC, K)
        K = w.shape[2]
        p = K // 2
        T = x_btc.shape[1]
        x_pad = jnp.pad(x_btc, ((0, 0), (p, p), (0, 0)))
        cols = jnp.stack([x_pad[:, k:k + T, :] for k in range(K)], axis=-1)  # (B,T,IC,K)
        return jnp.einsum("btik,oik->bto", cols, w) + b

    h = jax.nn.relu(conv1d_same(x, params["conv1_w"], params["conv1_b"]))
    h = jax.nn.relu(conv1d_same(h, params["conv2_w"], params["conv2_b"]))
    feat = h.mean(axis=1)
    h = jax.nn.relu(feat @ params["fc1_w"] + params["fc1_b"])
    h = jax.nn.relu(h @ params["fc2_w"] + params["fc2_b"])
    return h @ params["fc3_w"] + params["fc3_b"]


if __name__ == "__main__":
    key = jax.random.PRNGKey(0)
    k_param, k_data = jax.random.split(key)

    batch, seq_len, input_size = 2, 8, 6
    num_kernels, num_classes = 64, 12

    params = init_params(k_param, input_size=input_size, num_kernels=num_kernels,
                         kernel_sizes=(7, 7), num_classes=num_classes)
    input_seq = jax.random.normal(k_data, (batch, seq_len, input_size), jnp.float32)

    packed = pack_params(params, num_classes)
    logits = harcnn_forward(input_seq, packed, num_classes)
    logits = jax.block_until_ready(logits)

    assert logits.shape == (batch, num_classes), logits.shape
    assert bool(jnp.all(jnp.isfinite(logits)))

    ref = _reference_forward(input_seq, params)
    # bf16 matmul operands (f32 accumulation) => loosened tolerance vs f32 ref.
    assert jnp.allclose(logits, ref, rtol=3e-2, atol=3e-2), \
        float(jnp.max(jnp.abs(logits - ref)))

    print("KERNEL_OK")
</pallas_src>

<mosaic_0001>
module attributes {stable_mosaic.version = 11 : i64} {
  func.func @_harcnn_kernel(%arg0: i32, %arg1: memref<8x8x6xf32, #tpu.memory_space<vmem>>, %arg2: memref<7x6x64xbf16, #tpu.memory_space<vmem>>, %arg3: memref<1x64xf32, #tpu.memory_space<vmem>>, %arg4: memref<7x64x64xbf16, #tpu.memory_space<vmem>>, %arg5: memref<1x64xf32, #tpu.memory_space<vmem>>, %arg6: memref<64x512xbf16, #tpu.memory_space<vmem>>, %arg7: memref<1x512xf32, #tpu.memory_space<vmem>>, %arg8: memref<512x512xbf16, #tpu.memory_space<vmem>>, %arg9: memref<1x512xf32, #tpu.memory_space<vmem>>, %arg10: memref<512x128xbf16, #tpu.memory_space<vmem>>, %arg11: memref<1x128xf32, #tpu.memory_space<vmem>>, %arg12: memref<8x128xf32, #tpu.memory_space<vmem>>) attributes {dimension_semantics = [#tpu.dimension_semantics<parallel>], iteration_bounds = array<i64: 1>, scalar_prefetch = 0 : i64, scratch_operands = 0 : i64, tpu.core_type = #tpu.core_type<tc>, window_params = [{transform_indices = @transform_0, window_bounds = array<i64: 8, 8, 6>}, {pipeline_mode = #tpu.pipeline_mode<synchronous>, transform_indices = @transform_1, window_bounds = array<i64: 7, 6, 64>}, {pipeline_mode = #tpu.pipeline_mode<synchronous>, transform_indices = @transform_2, window_bounds = array<i64: 1, 64>}, {pipeline_mode = #tpu.pipeline_mode<synchronous>, transform_indices = @transform_3, window_bounds = array<i64: 7, 64, 64>}, {pipeline_mode = #tpu.pipeline_mode<synchronous>, transform_indices = @transform_4, window_bounds = array<i64: 1, 64>}, {pipeline_mode = #tpu.pipeline_mode<synchronous>, transform_indices = @transform_5, window_bounds = array<i64: 64, 512>}, {pipeline_mode = #tpu.pipeline_mode<synchronous>, transform_indices = @transform_6, window_bounds = array<i64: 1, 512>}, {pipeline_mode = #tpu.pipeline_mode<synchronous>, transform_indices = @transform_7, window_bounds = array<i64: 512, 512>}, {pipeline_mode = #tpu.pipeline_mode<synchronous>, transform_indices = @transform_8, window_bounds = array<i64: 1, 512>}, {pipeline_mode = #tpu.pipeline_mode<synchronous>, transform_indices = @transform_9, window_bounds = array<i64: 512, 128>}, {pipeline_mode = #tpu.pipeline_mode<synchronous>, transform_indices = @transform_10, window_bounds = array<i64: 1, 128>}, {transform_indices = @transform_11, window_bounds = array<i64: 8, 128>}]} {
    %c0 = arith.constant 0 : index
    %c0_0 = arith.constant 0 : index
    %c0_1 = arith.constant 0 : index
    %0 = vector.load %arg1[%c0, %c0_0, %c0_1] : memref<8x8x6xf32, #tpu.memory_space<vmem>>, vector<8x8x6xf32>
    %cst = arith.constant 0.000000e+00 : f32
    %1 = vector.broadcast %cst : f32 to vector<8x3x6xf32>
    %2 = tpu.concatenate %1, %0, %1 in 1 : vector<8x3x6xf32>, vector<8x8x6xf32>, vector<8x3x6xf32> -> vector<8x14x6xf32>
    %cst_2 = arith.constant 0.000000e+00 : f32
    %3 = vector.broadcast %cst_2 : f32 to vector<64x64xf32>
    %4 = vector.extract_strided_slice %2 {offsets = [0, 0, 0], sizes = [8, 8, 6], strides = [1, 1, 1]} : vector<8x14x6xf32> to vector<8x8x6xf32>
    %5 = vector.shape_cast %4 : vector<8x8x6xf32> to vector<64x6xf32>
    %6 = arith.truncf %5 : vector<64x6xf32> to vector<64x6xbf16>
    %c0_3 = arith.constant 0 : index
    %c0_4 = arith.constant 0 : index
    %c0_5 = arith.constant 0 : index
    %7 = vector.load %arg2[%c0_3, %c0_4, %c0_5] : memref<7x6x64xbf16, #tpu.memory_space<vmem>>, vector<1x6x64xbf16>
    %8 = vector.shape_cast %7 : vector<1x6x64xbf16> to vector<6x64xbf16>
    %cst_6 = arith.constant dense<0.000000e+00> : vector<64x64xf32>
    %9 = tpu.matmul %6, %8, %cst_6 {dimension_numbers = #tpu.dot_dimension_numbers<[1], [0], [0], [1], [0, 0, 1, 1], [], []>} : vector<64x6xbf16>, vector<6x64xbf16>, vector<64x64xf32> -> vector<64x64xf32>
    %10 = arith.addf %3, %9 : vector<64x64xf32>
    %11 = vector.extract_strided_slice %2 {offsets = [0, 1, 0], sizes = [8, 8, 6], strides = [1, 1, 1]} : vector<8x14x6xf32> to vector<8x8x6xf32>
    %12 = vector.shape_cast %11 : vector<8x8x6xf32> to vector<64x6xf32>
    %13 = arith.truncf %12 : vector<64x6xf32> to vector<64x6xbf16>
    %c1 = arith.constant 1 : index
    %c0_7 = arith.constant 0 : index
    %c0_8 = arith.constant 0 : index
    %14 = vector.load %arg2[%c1, %c0_7, %c0_8] : memref<7x6x64xbf16, #tpu.memory_space<vmem>>, vector<1x6x64xbf16>
    %15 = vector.shape_cast %14 : vector<1x6x64xbf16> to vector<6x64xbf16>
    %cst_9 = arith.constant dense<0.000000e+00> : vector<64x64xf32>
    %16 = tpu.matmul %13, %15, %cst_9 {dimension_numbers = #tpu.dot_dimension_numbers<[1], [0], [0], [1], [0, 0, 1, 1], [], []>} : vector<64x6xbf16>, vector<6x64xbf16>, vector<64x64xf32> -> vector<64x64xf32>
    %17 = arith.addf %10, %16 : vector<64x64xf32>
    %18 = vector.extract_strided_slice %2 {offsets = [0, 2, 0], sizes = [8, 8, 6], strides = [1, 1, 1]} : vector<8x14x6xf32> to vector<8x8x6xf32>
    %19 = vector.shape_cast %18 : vector<8x8x6xf32> to vector<64x6xf32>
    %20 = arith.truncf %19 : vector<64x6xf32> to vector<64x6xbf16>
    %c2 = arith.constant 2 : index
    %c0_10 = arith.constant 0 : index
    %c0_11 = arith.constant 0 : index
    %21 = vector.load %arg2[%c2, %c0_10, %c0_11] : memref<7x6x64xbf16, #tpu.memory_space<vmem>>, vector<1x6x64xbf16>
    %22 = vector.shape_cast %21 : vector<1x6x64xbf16> to vector<6x64xbf16>
    %cst_12 = arith.constant dense<0.000000e+00> : vector<64x64xf32>
    %23 = tpu.matmul %20, %22, %cst_12 {dimension_numbers = #tpu.dot_dimension_numbers<[1], [0], [0], [1], [0, 0, 1, 1], [], []>} : vector<64x6xbf16>, vector<6x64xbf16>, vector<64x64xf32> -> vector<64x64xf32>
    %24 = arith.addf %17, %23 : vector<64x64xf32>
    %25 = vector.extract_strided_slice %2 {offsets = [0, 3, 0], sizes = [8, 8, 6], strides = [1, 1, 1]} : vector<8x14x6xf32> to vector<8x8x6xf32>
    %26 = vector.shape_cast %25 : vector<8x8x6xf32> to vector<64x6xf32>
    %27 = arith.truncf %26 : vector<64x6xf32> to vector<64x6xbf16>
    %c3 = arith.constant 3 : index
    %c0_13 = arith.constant 0 : index
    %c0_14 = arith.constant 0 : index
    %28 = vector.load %arg2[%c3, %c0_13, %c0_14] : memref<7x6x64xbf16, #tpu.memory_space<vmem>>, vector<1x6x64xbf16>
    %29 = vector.shape_cast %28 : vector<1x6x64xbf16> to vector<6x64xbf16>
    %cst_15 = arith.constant dense<0.000000e+00> : vector<64x64xf32>
    %30 = tpu.matmul %27, %29, %cst_15 {dimension_numbers = #tpu.dot_dimension_numbers<[1], [0], [0], [1], [0, 0, 1, 1], [], []>} : vector<64x6xbf16>, vector<6x64xbf16>, vector<64x64xf32> -> vector<64x64xf32>
    %31 = arith.addf %24, %30 : vector<64x64xf32>
    %32 = vector.extract_strided_slice %2 {offsets = [0, 4, 0], sizes = [8, 8, 6], strides = [1, 1, 1]} : vector<8x14x6xf32> to vector<8x8x6xf32>
    %33 = vector.shape_cast %32 : vector<8x8x6xf32> to vector<64x6xf32>
    %34 = arith.truncf %33 : vector<64x6xf32> to vector<64x6xbf16>
    %c4 = arith.constant 4 : index
    %c0_16 = arith.constant 0 : index
    %c0_17 = arith.constant 0 : index
    %35 = vector.load %arg2[%c4, %c0_16, %c0_17] : memref<7x6x64xbf16, #tpu.memory_space<vmem>>, vector<1x6x64xbf16>
    %36 = vector.shape_cast %35 : vector<1x6x64xbf16> to vector<6x64xbf16>
    %cst_18 = arith.constant dense<0.000000e+00> : vector<64x64xf32>
    %37 = tpu.matmul %34, %36, %cst_18 {dimension_numbers = #tpu.dot_dimension_numbers<[1], [0], [0], [1], [0, 0, 1, 1], [], []>} : vector<64x6xbf16>, vector<6x64xbf16>, vector<64x64xf32> -> vector<64x64xf32>
    %38 = arith.addf %31, %37 : vector<64x64xf32>
    %39 = vector.extract_strided_slice %2 {offsets = [0, 5, 0], sizes = [8, 8, 6], strides = [1, 1, 1]} : vector<8x14x6xf32> to vector<8x8x6xf32>
    %40 = vector.shape_cast %39 : vector<8x8x6xf32> to vector<64x6xf32>
    %41 = arith.truncf %40 : vector<64x6xf32> to vector<64x6xbf16>
    %c5 = arith.constant 5 : index
    %c0_19 = arith.constant 0 : index
    %c0_20 = arith.constant 0 : index
    %42 = vector.load %arg2[%c5, %c0_19, %c0_20] : memref<7x6x64xbf16, #tpu.memory_space<vmem>>, vector<1x6x64xbf16>
    %43 = vector.shape_cast %42 : vector<1x6x64xbf16> to vector<6x64xbf16>
    %cst_21 = arith.constant dense<0.000000e+00> : vector<64x64xf32>
    %44 = tpu.matmul %41, %43, %cst_21 {dimension_numbers = #tpu.dot_dimension_numbers<[1], [0], [0], [1], [0, 0, 1, 1], [], []>} : vector<64x6xbf16>, vector<6x64xbf16>, vector<64x64xf32> -> vector<64x64xf32>
    %45 = arith.addf %38, %44 : vector<64x64xf32>
    %46 = vector.extract_strided_slice %2 {offsets = [0, 6, 0], sizes = [8, 8, 6], strides = [1, 1, 1]} : vector<8x14x6xf32> to vector<8x8x6xf32>
    %47 = vector.shape_cast %46 : vector<8x8x6xf32> to vector<64x6xf32>
    %48 = arith.truncf %47 : vector<64x6xf32> to vector<64x6xbf16>
    %c6 = arith.constant 6 : index
    %c0_22 = arith.constant 0 : index
    %c0_23 = arith.constant 0 : index
    %49 = vector.load %arg2[%c6, %c0_22, %c0_23] : memref<7x6x64xbf16, #tpu.memory_space<vmem>>, vector<1x6x64xbf16>
    %50 = vector.shape_cast %49 : vector<1x6x64xbf16> to vector<6x64xbf16>
    %cst_24 = arith.constant dense<0.000000e+00> : vector<64x64xf32>
    %51 = tpu.matmul %48, %50, %cst_24 {dimension_numbers = #tpu.dot_dimension_numbers<[1], [0], [0], [1], [0, 0, 1, 1], [], []>} : vector<64x6xbf16>, vector<6x64xbf16>, vector<64x64xf32> -> vector<64x64xf32>
    %52 = arith.addf %45, %51 : vector<64x64xf32>
    %c0_25 = arith.constant 0 : index
    %c0_26 = arith.constant 0 : index
    %53 = vector.load %arg3[%c0_25, %c0_26] : memref<1x64xf32, #tpu.memory_space<vmem>>, vector<1x64xf32>
    %54 = vector.broadcast %53 : vector<1x64xf32> to vector<64x64xf32>
    %55 = arith.addf %52, %54 : vector<64x64xf32>
    %cst_27 = arith.constant 0.000000e+00 : f32
    %56 = vector.broadcast %cst_27 : f32 to vector<64x64xf32>
    %57 = arith.maximumf %55, %56 : vector<64x64xf32>
    %58 = vector.shape_cast %57 : vector<64x64xf32> to vector<8x8x64xf32>
    %cst_28 = arith.constant 0.000000e+00 : f32
    %59 = vector.broadcast %cst_28 : f32 to vector<8x3x64xf32>
    %60 = tpu.concatenate %59, %58, %59 in 1 : vector<8x3x64xf32>, vector<8x8x64xf32>, vector<8x3x64xf32> -> vector<8x14x64xf32>
    %cst_29 = arith.constant 0.000000e+00 : f32
    %61 = vector.broadcast %cst_29 : f32 to vector<64x64xf32>
    %62 = vector.extract_strided_slice %60 {offsets = [0, 0, 0], sizes = [8, 8, 64], strides = [1, 1, 1]} : vector<8x14x64xf32> to vector<8x8x64xf32>
    %63 = vector.shape_cast %62 : vector<8x8x64xf32> to vector<64x64xf32>
    %64 = arith.truncf %63 : vector<64x64xf32> to vector<64x64xbf16>
    %c0_30 = arith.constant 0 : index
    %c0_31 = arith.constant 0 : index
    %c0_32 = arith.constant 0 : index
    %65 = vector.load %arg4[%c0_30, %c0_31, %c0_32] : memref<7x64x64xbf16, #tpu.memory_space<vmem>>, vector<1x64x64xbf16>
    %66 = vector.shape_cast %65 : vector<1x64x64xbf16> to vector<64x64xbf16>
    %cst_33 = arith.constant dense<0.000000e+00> : vector<64x64xf32>
    %67 = tpu.matmul %64, %66, %cst_33 {dimension_numbers = #tpu.dot_dimension_numbers<[1], [0], [0], [1], [0, 0, 1, 1], [], []>} : vector<64x64xbf16>, vector<64x64xbf16>, vector<64x64xf32> -> vector<64x64xf32>
    %68 = arith.addf %61, %67 : vector<64x64xf32>
    %69 = vector.extract_strided_slice %60 {offsets = [0, 1, 0], sizes = [8, 8, 64], strides = [1, 1, 1]} : vector<8x14x64xf32> to vector<8x8x64xf32>
    %70 = vector.shape_cast %69 : vector<8x8x64xf32> to vector<64x64xf32>
    %71 = arith.truncf %70 : vector<64x64xf32> to vector<64x64xbf16>
    %c1_34 = arith.constant 1 : index
    %c0_35 = arith.constant 0 : index
    %c0_36 = arith.constant 0 : index
    %72 = vector.load %arg4[%c1_34, %c0_35, %c0_36] : memref<7x64x64xbf16, #tpu.memory_space<vmem>>, vector<1x64x64xbf16>
    %73 = vector.shape_cast %72 : vector<1x64x64xbf16> to vector<64x64xbf16>
    %cst_37 = arith.constant dense<0.000000e+00> : vector<64x64xf32>
    %74 = tpu.matmul %71, %73, %cst_37 {dimension_numbers = #tpu.dot_dimension_numbers<[1], [0], [0], [1], [0, 0, 1, 1], [], []>} : vector<64x64xbf16>, vector<64x64xbf16>, vector<64x64xf32> -> vector<64x64xf32>
    %75 = arith.addf %68, %74 : vector<64x64xf32>
    %76 = vector.extract_strided_slice %60 {offsets = [0, 2, 0], sizes = [8, 8, 64], strides = [1, 1, 1]} : vector<8x14x64xf32> to vector<8x8x64xf32>
    %77 = vector.shape_cast %76 : vector<8x8x64xf32> to vector<64x64xf32>
    %78 = arith.truncf %77 : vector<64x64xf32> to vector<64x64xbf16>
    %c2_38 = arith.constant 2 : index
    %c0_39 = arith.constant 0 : index
    %c0_40 = arith.constant 0 : index
    %79 = vector.load %arg4[%c2_38, %c0_39, %c0_40] : memref<7x64x64xbf16, #tpu.memory_space<vmem>>, vector<1x64x64xbf16>
    %80 = vector.shape_cast %79 : vector<1x64x64xbf16> to vector<64x64xbf16>
    %cst_41 = arith.constant dense<0.000000e+00> : vector<64x64xf32>
    %81 = tpu.matmul %78, %80, %cst_41 {dimension_numbers = #tpu.dot_dimension_numbers<[1], [0], [0], [1], [0, 0, 1, 1], [], []>} : vector<64x64xbf16>, vector<64x64xbf16>, vector<64x64xf32> -> vector<64x64xf32>
    %82 = arith.addf %75, %81 : vector<64x64xf32>
    %83 = vector.extract_strided_slice %60 {offsets = [0, 3, 0], sizes = [8, 8, 64], strides = [1, 1, 1]} : vector<8x14x64xf32> to vector<8x8x64xf32>
    %84 = vector.shape_cast %83 : vector<8x8x64xf32> to vector<64x64xf32>
    %85 = arith.truncf %84 : vector<64x64xf32> to vector<64x64xbf16>
    %c3_42 = arith.constant 3 : index
    %c0_43 = arith.constant 0 : index
    %c0_44 = arith.constant 0 : index
    %86 = vector.load %arg4[%c3_42, %c0_43, %c0_44] : memref<7x64x64xbf16, #tpu.memory_space<vmem>>, vector<1x64x64xbf16>
    %87 = vector.shape_cast %86 : vector<1x64x64xbf16> to vector<64x64xbf16>
    %cst_45 = arith.constant dense<0.000000e+00> : vector<64x64xf32>
    %88 = tpu.matmul %85, %87, %cst_45 {dimension_numbers = #tpu.dot_dimension_numbers<[1], [0], [0], [1], [0, 0, 1, 1], [], []>} : vector<64x64xbf16>, vector<64x64xbf16>, vector<64x64xf32> -> vector<64x64xf32>
    %89 = arith.addf %82, %88 : vector<64x64xf32>
    %90 = vector.extract_strided_slice %60 {offsets = [0, 4, 0], sizes = [8, 8, 64], strides = [1, 1, 1]} : vector<8x14x64xf32> to vector<8x8x64xf32>
    %91 = vector.shape_cast %90 : vector<8x8x64xf32> to vector<64x64xf32>
    %92 = arith.truncf %91 : vector<64x64xf32> to vector<64x64xbf16>
    %c4_46 = arith.constant 4 : index
    %c0_47 = arith.constant 0 : index
    %c0_48 = arith.constant 0 : index
    %93 = vector.load %arg4[%c4_46, %c0_47, %c0_48] : memref<7x64x64xbf16, #tpu.memory_space<vmem>>, vector<1x64x64xbf16>
    %94 = vector.shape_cast %93 : vector<1x64x64xbf16> to vector<64x64xbf16>
    %cst_49 = arith.constant dense<0.000000e+00> : vector<64x64xf32>
    %95 = tpu.matmul %92, %94, %cst_49 {dimension_numbers = #tpu.dot_dimension_numbers<[1], [0], [0], [1], [0, 0, 1, 1], [], []>} : vector<64x64xbf16>, vector<64x64xbf16>, vector<64x64xf32> -> vector<64x64xf32>
    %96 = arith.addf %89, %95 : vector<64x64xf32>
    %97 = vector.extract_strided_slice %60 {offsets = [0, 5, 0], sizes = [8, 8, 64], strides = [1, 1, 1]} : vector<8x14x64xf32> to vector<8x8x64xf32>
    %98 = vector.shape_cast %97 : vector<8x8x64xf32> to vector<64x64xf32>
    %99 = arith.truncf %98 : vector<64x64xf32> to vector<64x64xbf16>
    %c5_50 = arith.constant 5 : index
    %c0_51 = arith.constant 0 : index
    %c0_52 = arith.constant 0 : index
    %100 = vector.load %arg4[%c5_50, %c0_51, %c0_52] : memref<7x64x64xbf16, #tpu.memory_space<vmem>>, vector<1x64x64xbf16>
    %101 = vector.shape_cast %100 : vector<1x64x64xbf16> to vector<64x64xbf16>
    %cst_53 = arith.constant dense<0.000000e+00> : vector<64x64xf32>
    %102 = tpu.matmul %99, %101, %cst_53 {dimension_numbers = #tpu.dot_dimension_numbers<[1], [0], [0], [1], [0, 0, 1, 1], [], []>} : vector<64x64xbf16>, vector<64x64xbf16>, vector<64x64xf32> -> vector<64x64xf32>
    %103 = arith.addf %96, %102 : vector<64x64xf32>
    %104 = vector.extract_strided_slice %60 {offsets = [0, 6, 0], sizes = [8, 8, 64], strides = [1, 1, 1]} : vector<8x14x64xf32> to vector<8x8x64xf32>
    %105 = vector.shape_cast %104 : vector<8x8x64xf32> to vector<64x64xf32>
    %106 = arith.truncf %105 : vector<64x64xf32> to vector<64x64xbf16>
    %c6_54 = arith.constant 6 : index
    %c0_55 = arith.constant 0 : index
    %c0_56 = arith.constant 0 : index
    %107 = vector.load %arg4[%c6_54, %c0_55, %c0_56] : memref<7x64x64xbf16, #tpu.memory_space<vmem>>, vector<1x64x64xbf16>
    %108 = vector.shape_cast %107 : vector<1x64x64xbf16> to vector<64x64xbf16>
    %cst_57 = arith.constant dense<0.000000e+00> : vector<64x64xf32>
    %109 = tpu.matmul %106, %108, %cst_57 {dimension_numbers = #tpu.dot_dimension_numbers<[1], [0], [0], [1], [0, 0, 1, 1], [], []>} : vector<64x64xbf16>, vector<64x64xbf16>, vector<64x64xf32> -> vector<64x64xf32>
    %110 = arith.addf %103, %109 : vector<64x64xf32>
    %c0_58 = arith.constant 0 : index
    %c0_59 = arith.constant 0 : index
    %111 = vector.load %arg5[%c0_58, %c0_59] : memref<1x64xf32, #tpu.memory_space<vmem>>, vector<1x64xf32>
    %112 = vector.broadcast %111 : vector<1x64xf32> to vector<64x64xf32>
    %113 = arith.addf %110, %112 : vector<64x64xf32>
    %cst_60 = arith.constant 0.000000e+00 : f32
    %114 = vector.broadcast %cst_60 : f32 to vector<64x64xf32>
    %115 = arith.maximumf %113, %114 : vector<64x64xf32>
    %116 = vector.shape_cast %115 : vector<64x64xf32> to vector<8x8x64xf32>
    %117 = vector.extract_strided_slice %116 {offsets = [0, 0, 0], sizes = [8, 1, 64], strides = [1, 1, 1]} : vector<8x8x64xf32> to vector<8x1x64xf32>
    %118 = vector.shape_cast %117 : vector<8x1x64xf32> to vector<8x64xf32>
    %119 = vector.extract_strided_slice %116 {offsets = [0, 1, 0], sizes = [8, 1, 64], strides = [1, 1, 1]} : vector<8x8x64xf32> to vector<8x1x64xf32>
    %120 = vector.shape_cast %119 : vector<8x1x64xf32> to vector<8x64xf32>
    %121 = arith.addf %118, %120 : vector<8x64xf32>
    %122 = vector.extract_strided_slice %116 {offsets = [0, 2, 0], sizes = [8, 1, 64], strides = [1, 1, 1]} : vector<8x8x64xf32> to vector<8x1x64xf32>
    %123 = vector.shape_cast %122 : vector<8x1x64xf32> to vector<8x64xf32>
    %124 = arith.addf %121, %123 : vector<8x64xf32>
    %125 = vector.extract_strided_slice %116 {offsets = [0, 3, 0], sizes = [8, 1, 64], strides = [1, 1, 1]} : vector<8x8x64xf32> to vector<8x1x64xf32>
    %126 = vector.shape_cast %125 : vector<8x1x64xf32> to vector<8x64xf32>
    %127 = arith.addf %124, %126 : vector<8x64xf32>
    %128 = vector.extract_strided_slice %116 {offsets = [0, 4, 0], sizes = [8, 1, 64], strides = [1, 1, 1]} : vector<8x8x64xf32> to vector<8x1x64xf32>
    %129 = vector.shape_cast %128 : vector<8x1x64xf32> to vector<8x64xf32>
    %130 = arith.addf %127, %129 : vector<8x64xf32>
    %131 = vector.extract_strided_slice %116 {offsets = [0, 5, 0], sizes = [8, 1, 64], strides = [1, 1, 1]} : vector<8x8x64xf32> to vector<8x1x64xf32>
    %132 = vector.shape_cast %131 : vector<8x1x64xf32> to vector<8x64xf32>
    %133 = arith.addf %130, %132 : vector<8x64xf32>
    %134 = vector.extract_strided_slice %116 {offsets = [0, 6, 0], sizes = [8, 1, 64], strides = [1, 1, 1]} : vector<8x8x64xf32> to vector<8x1x64xf32>
    %135 = vector.shape_cast %134 : vector<8x1x64xf32> to vector<8x64xf32>
    %136 = arith.addf %133, %135 : vector<8x64xf32>
    %137 = vector.extract_strided_slice %116 {offsets = [0, 7, 0], sizes = [8, 1, 64], strides = [1, 1, 1]} : vector<8x8x64xf32> to vector<8x1x64xf32>
    %138 = vector.shape_cast %137 : vector<8x1x64xf32> to vector<8x64xf32>
    %139 = arith.addf %136, %138 : vector<8x64xf32>
    %cst_61 = arith.constant 1.250000e-01 : f32
    %140 = vector.broadcast %cst_61 : f32 to vector<8x64xf32>
    %141 = arith.mulf %139, %140 : vector<8x64xf32>
    %142 = arith.truncf %141 : vector<8x64xf32> to vector<8x64xbf16>
    %c0_62 = arith.constant 0 : index
    %c0_63 = arith.constant 0 : index
    %143 = vector.load %arg6[%c0_62, %c0_63] : memref<64x512xbf16, #tpu.memory_space<vmem>>, vector<64x512xbf16>
    %cst_64 = arith.constant dense<0.000000e+00> : vector<8x512xf32>
    %144 = tpu.matmul %142, %143, %cst_64 {dimension_numbers = #tpu.dot_dimension_numbers<[1], [0], [0], [1], [0, 0, 1, 1], [], []>} : vector<8x64xbf16>, vector<64x512xbf16>, vector<8x512xf32> -> vector<8x512xf32>
    %c0_65 = arith.constant 0 : index
    %c0_66 = arith.constant 0 : index
    %145 = vector.load %arg7[%c0_65, %c0_66] : memref<1x512xf32, #tpu.memory_space<vmem>>, vector<1x512xf32>
    %146 = vector.broadcast %145 : vector<1x512xf32> to vector<8x512xf32>
    %147 = arith.addf %144, %146 : vector<8x512xf32>
    %cst_67 = arith.constant 0.000000e+00 : f32
    %148 = vector.broadcast %cst_67 : f32 to vector<8x512xf32>
    %149 = arith.maximumf %147, %148 : vector<8x512xf32>
    %150 = arith.truncf %149 : vector<8x512xf32> to vector<8x512xbf16>
    %c0_68 = arith.constant 0 : index
    %c0_69 = arith.constant 0 : index
    %151 = vector.load %arg8[%c0_68, %c0_69] : memref<512x512xbf16, #tpu.memory_space<vmem>>, vector<512x512xbf16>
    %cst_70 = arith.constant dense<0.000000e+00> : vector<8x512xf32>
    %152 = tpu.matmul %150, %151, %cst_70 {dimension_numbers = #tpu.dot_dimension_numbers<[1], [0], [0], [1], [0, 0, 1, 1], [], []>} : vector<8x512xbf16>, vector<512x512xbf16>, vector<8x512xf32> -> vector<8x512xf32>
    %c0_71 = arith.constant 0 : index
    %c0_72 = arith.constant 0 : index
    %153 = vector.load %arg9[%c0_71, %c0_72] : memref<1x512xf32, #tpu.memory_space<vmem>>, vector<1x512xf32>
    %154 = vector.broadcast %153 : vector<1x512xf32> to vector<8x512xf32>
    %155 = arith.addf %152, %154 : vector<8x512xf32>
    %cst_73 = arith.constant 0.000000e+00 : f32
    %156 = vector.broadcast %cst_73 : f32 to vector<8x512xf32>
    %157 = arith.maximumf %155, %156 : vector<8x512xf32>
    %158 = arith.truncf %157 : vector<8x512xf32> to vector<8x512xbf16>
    %c0_74 = arith.constant 0 : index
    %c0_75 = arith.constant 0 : index
    %159 = vector.load %arg10[%c0_74, %c0_75] : memref<512x128xbf16, #tpu.memory_space<vmem>>, vector<512x128xbf16>
    %cst_76 = arith.constant dense<0.000000e+00> : vector<8x128xf32>
    %160 = tpu.matmul %158, %159, %cst_76 {dimension_numbers = #tpu.dot_dimension_numbers<[1], [0], [0], [1], [0, 0, 1, 1], [], []>} : vector<8x512xbf16>, vector<512x128xbf16>, vector<8x128xf32> -> vector<8x128xf32>
    %c0_77 = arith.constant 0 : index
    %c0_78 = arith.constant 0 : index
    %161 = vector.load %arg11[%c0_77, %c0_78] : memref<1x128xf32, #tpu.memory_space<vmem>>, vector<1x128xf32>
    %162 = vector.broadcast %161 : vector<1x128xf32> to vector<8x128xf32>
    %163 = arith.addf %160, %162 : vector<8x128xf32>
    %c0_79 = arith.constant 0 : index
    %c0_80 = arith.constant 0 : index
    %164 = vector.load %arg12[%c0_79, %c0_80] : memref<8x128xf32, #tpu.memory_space<vmem>>, vector<8x128xf32>
    tpu.vector_store %arg12[%c0_79, %c0_80], %163 {strides = array<i32>} : memref<8x128xf32, #tpu.memory_space<vmem>>, vector<8x128xf32>,
    return
  }
  func.func @transform_0(%arg0: i32) -> (i32, i32, i32) {
    %c0_i32 = arith.constant 0 : i32
    %c0_i32_0 = arith.constant 0 : i32
    %c0_i32_1 = arith.constant 0 : i32
    return %arg0, %c0_i32, %c0_i32_0 : i32, i32, i32
  }
  func.func @transform_1(%arg0: i32) -> (i32, i32, i32) {
    %c0_i32 = arith.constant 0 : i32
    %c0_i32_0 = arith.constant 0 : i32
    %c0_i32_1 = arith.constant 0 : i32
    %c0_i32_2 = arith.constant 0 : i32
    return %c0_i32, %c0_i32_0, %c0_i32_1 : i32, i32, i32
  }
  func.func @transform_2(%arg0: i32) -> (i32, i32) {
    %c0_i32 = arith.constant 0 : i32
    %c0_i32_0 = arith.constant 0 : i32
    %c0_i32_1 = arith.constant 0 : i32
    return %c0_i32, %c0_i32_0 : i32, i32
  }
  func.func @transform_3(%arg0: i32) -> (i32, i32, i32) {
    %c0_i32 = arith.constant 0 : i32
    %c0_i32_0 = arith.constant 0 : i32
    %c0_i32_1 = arith.constant 0 : i32
    %c0_i32_2 = arith.constant 0 : i32
    return %c0_i32, %c0_i32_0, %c0_i32_1 : i32, i32, i32
  }
  func.func @transform_4(%arg0: i32) -> (i32, i32) {
    %c0_i32 = arith.constant 0 : i32
    %c0_i32_0 = arith.constant 0 : i32
    %c0_i32_1 = arith.constant 0 : i32
    return %c0_i32, %c0_i32_0 : i32, i32
  }
  func.func @transform_5(%arg0: i32) -> (i32, i32) {
    %c0_i32 = arith.constant 0 : i32
    %c0_i32_0 = arith.constant 0 : i32
    %c0_i32_1 = arith.constant 0 : i32
    return %c0_i32, %c0_i32_0 : i32, i32
  }
  func.func @transform_6(%arg0: i32) -> (i32, i32) {
    %c0_i32 = arith.constant 0 : i32
    %c0_i32_0 = arith.constant 0 : i32
    %c0_i32_1 = arith.constant 0 : i32
    return %c0_i32, %c0_i32_0 : i32, i32
  }
  func.func @transform_7(%arg0: i32) -> (i32, i32) {
    %c0_i32 = arith.constant 0 : i32
    %c0_i32_0 = arith.constant 0 : i32
    %c0_i32_1 = arith.constant 0 : i32
    return %c0_i32, %c0_i32_0 : i32, i32
  }
  func.func @transform_8(%arg0: i32) -> (i32, i32) {
    %c0_i32 = arith.constant 0 : i32
    %c0_i32_0 = arith.constant 0 : i32
    %c0_i32_1 = arith.constant 0 : i32
    return %c0_i32, %c0_i32_0 : i32, i32
  }
  func.func @transform_9(%arg0: i32) -> (i32, i32) {
    %c0_i32 = arith.constant 0 : i32
    %c0_i32_0 = arith.constant 0 : i32
    %c0_i32_1 = arith.constant 0 : i32
    return %c0_i32, %c0_i32_0 : i32, i32
  }
  func.func @transform_10(%arg0: i32) -> (i32, i32) {
    %c0_i32 = arith.constant 0 : i32
    %c0_i32_0 = arith.constant 0 : i32
    %c0_i32_1 = arith.constant 0 : i32
    return %c0_i32, %c0_i32_0 : i32, i32
  }
  func.func @transform_11(%arg0: i32) -> (i32, i32) {
    %c0_i32 = arith.constant 0 : i32
    %c0_i32_0 = arith.constant 0 : i32
    return %arg0, %c0_i32 : i32, i32
  }
}

</mosaic_0001>

<llo_original>
// kernel: tpu_custom_call.1
$region0: #{tpu_custom_call.1}
  #allocation0 [shape = 'u32[]', space=smem, size = 0x4, offset = 0x4, fixed_abs, tag = 'smem constant byte address 0x4 - core index']
  #allocation1 [shape = 'u32[144,128]{1,0:T(1,128)}', space=vmem, size = 0x12000, scoped, tag = 'internal scratch']
  %s0 = inlined_call_operand.vmem [shape: f32[8,8,6], index: 0, kind: input, shape index: {}]
  %s1 = inlined_call_operand.vmem [shape: bf16[7,6,64], index: 1, kind: input, shape index: {}]
  %s2 = inlined_call_operand.vmem [shape: f32[1,64], index: 2, kind: input, shape index: {}]
  %s3 = inlined_call_operand.hbm [shape: bf16[7,64,64], index: 3, kind: input, shape index: {}]
  %s4 = inlined_call_operand.vmem [shape: f32[1,64], index: 4, kind: input, shape index: {}]
  %s5 = inlined_call_operand.vmem [shape: bf16[64,512], index: 5, kind: input, shape index: {}]
  %s6 = inlined_call_operand.vmem [shape: f32[1,512], index: 6, kind: input, shape index: {}]
  %s7 = inlined_call_operand.hbm [shape: bf16[512,512], index: 7, kind: input, shape index: {}]
  %s8 = inlined_call_operand.vmem [shape: f32[1,512], index: 8, kind: input, shape index: {}]
  %s9 = inlined_call_operand.hbm [shape: bf16[512,128], index: 9, kind: input, shape index: {}]
  %s10 = inlined_call_operand.vmem [shape: f32[1,128], index: 10, kind: input, shape index: {}]
  %s11 = inlined_call_operand.hbm [shape: f32[8,128], index: 11, kind: output, shape index: {}]
  %s12 = sld [smem:[#allocation0]]
  $region66: #{tpu_custom_call.1} parent=0
    _
  %s14 = ssub.s32 1, %s12
  %s15 = scalar_select 0, %s14, %s12
  $region1: #{tpu_custom_call.1} parent=0
    #allocation2 [shape = 'u8[114688]{0}', space=vmem, size = 0x1c000, scoped, tag = 'input window, operand 3, single buffered']
    #allocation3 [shape = 's32[1]{0}', space=sflag, size = 0x4, scoped, tag = 'scoped memory for tpu_custom_call.1']
    #allocation4 [shape = 's32[1]{0}', space=sflag, size = 0x4, scoped, tag = 'scoped memory for tpu_custom_call.1']
    #allocation5 [shape = 'u8[524288]{0}', space=vmem, size = 0x80000, scoped, tag = 'input window, operand 7, single buffered']
    #allocation6 [shape = 's32[1]{0}', space=sflag, size = 0x4, scoped, tag = 'scoped memory for tpu_custom_call.1']
    #allocation7 [shape = 'u8[131072]{0}', space=vmem, size = 0x20000, scoped, tag = 'input window, operand 9, single buffered']
    #allocation8 [shape = 'u8[4096]{0}', space=vmem, size = 0x1000, scoped, tag = 'output window, operand 0, single buffered']
    %16 = vsyncpa [#allocation3], 0
    %17 = vsyncpa [#allocation6], 0
    %18 = vsyncpa [#allocation4], 0
    // Predicated region
    $region2: #{tpu_custom_call.1} parent=1 // pred_check
      _
    $region3: #{tpu_custom_call.1} parent=1 // pred_check_branch
      %20 = sbr.rel (0) target = $region5
    $region4: #{tpu_custom_call.1} parent=1 // pred_region
      _
    $region5: #{tpu_custom_call.1} parent=1 // pred_fallthru
      _
    // Predicated region
    $region6: #{tpu_custom_call.1} parent=1 // pred_check
      _
    $region7: #{tpu_custom_call.1} parent=1 // pred_check_branch
      %22 = sbr.rel (0) target = $region9
    $region8: #{tpu_custom_call.1} parent=1 // pred_region
      _
    $region9: #{tpu_custom_call.1} parent=1 // pred_fallthru
      _
    // Predicated region
    $region10: #{tpu_custom_call.1} parent=1 // pred_check
      _
    $region11: #{tpu_custom_call.1} parent=1 // pred_check_branch
      %24 = sbr.rel (0) target = $region13
    $region12: #{tpu_custom_call.1} parent=1 // pred_region
      _
    $region13: #{tpu_custom_call.1} parent=1 // pred_fallthru
      _
    // Predicated region
    $region14: #{tpu_custom_call.1} parent=1 // pred_check
      _
    $region15: #{tpu_custom_call.1} parent=1 // pred_check_branch
      %26 = sbr.rel (0) target = $region17
    $region16: #{tpu_custom_call.1} parent=1 // pred_region
      %s28 = ssub.s32 3584, 3584
      %29 = vsyncadd [#allocation3], %s28
      %s30 = sshll.u32 [#allocation2], 4
      %s31 = int_to_ptr.vmem [resolvable:$true] %s30
      %36 = dma.hbm_to_vmem [thread:$0]  %s3, 3584, %s31, [#allocation3], 64, 64, 4
    $region17: #{tpu_custom_call.1} parent=1 // pred_fallthru
      _
    // Predicated region
    $region18: #{tpu_custom_call.1} parent=1 // pred_check
      _
    $region19: #{tpu_custom_call.1} parent=1 // pred_check_branch
      %38 = sbr.rel (0) target = $region21
    $region20: #{tpu_custom_call.1} parent=1 // pred_region
      _
    $region21: #{tpu_custom_call.1} parent=1 // pred_fallthru
      _
    // Predicated region
    $region22: #{tpu_custom_call.1} parent=1 // pred_check
      _
    $region23: #{tpu_custom_call.1} parent=1 // pred_check_branch
      %40 = sbr.rel (0) target = $region25
    $region24: #{tpu_custom_call.1} parent=1 // pred_region
      _
    $region25: #{tpu_custom_call.1} parent=1 // pred_fallthru
      _
    // Predicated region
    $region26: #{tpu_custom_call.1} parent=1 // pred_check
      _
    $region27: #{tpu_custom_call.1} parent=1 // pred_check_branch
      %42 = sbr.rel (0) target = $region29
    $region28: #{tpu_custom_call.1} parent=1 // pred_region
      _
    $region29: #{tpu_custom_call.1} parent=1 // pred_fallthru
      _
    // Predicated region
    $region30: #{tpu_custom_call.1} parent=1 // pred_check
      _
    $region31: #{tpu_custom_call.1} parent=1 // pred_check_branch
      %44 = sbr.rel (0) target = $region33
    $region32: #{tpu_custom_call.1} parent=1 // pred_region
      %s46 = ssub.s32 16384, 16384
      %47 = vsyncadd [#allocation6], %s46
      %s48 = sshll.u32 [#allocation5], 4
      %s49 = int_to_ptr.vmem [resolvable:$true] %s48
      %54 = dma.hbm_to_vmem [thread:$0]  %s7, 16384, %s49, [#allocation6], 256, 256, 16
    $region33: #{tpu_custom_call.1} parent=1 // pred_fallthru
      _
    // Predicated region
    $region34: #{tpu_custom_call.1} parent=1 // pred_check
      _
    $region35: #{tpu_custom_call.1} parent=1 // pred_check_branch
      %56 = sbr.rel (0) target = $region37
    $region36: #{tpu_custom_call.1} parent=1 // pred_region
      _
    $region37: #{tpu_custom_call.1} parent=1 // pred_fallthru
      _
    // Predicated region
    $region38: #{tpu_custom_call.1} parent=1 // pred_check
      _
    $region39: #{tpu_custom_call.1} parent=1 // pred_check_branch
      %58 = sbr.rel (0) target = $region41
    $region40: #{tpu_custom_call.1} parent=1 // pred_region
      %s60 = ssub.s32 4096, 4096
      %61 = vsyncadd [#allocation6], %s60
      %s62 = sshll.u32 [#allocation7], 4
      %s63 = int_to_ptr.vmem [resolvable:$true] %s62
      %68 = dma.hbm_to_vmem [thread:$0]  %s9, 4096, %s63, [#allocation6], 64, 64, 4
    $region41: #{tpu_custom_call.1} parent=1 // pred_fallthru
      _
    // Predicated region
    $region42: #{tpu_custom_call.1} parent=1 // pred_check
      _
    $region43: #{tpu_custom_call.1} parent=1 // pred_check_branch
      %70 = sbr.rel (0) target = $region45
    $region44: #{tpu_custom_call.1} parent=1 // pred_region
      _
    $region45: #{tpu_custom_call.1} parent=1 // pred_fallthru
      _
    // Predicated region
    $region46: #{tpu_custom_call.1} parent=1 // pred_check
      _
    $region47: #{tpu_custom_call.1} parent=1 // pred_check_branch
      %72 = sbr.rel (0) target = $region49
    $region48: #{tpu_custom_call.1} parent=1 // pred_region
      %73 = dma.done [#allocation3], 3584
    $region49: #{tpu_custom_call.1} parent=1 // pred_fallthru
      _
    // Predicated region
    $region50: #{tpu_custom_call.1} parent=1 // pred_check
      _
    $region51: #{tpu_custom_call.1} parent=1 // pred_check_branch
      %75 = sbr.rel (0) target = $region53
    $region52: #{tpu_custom_call.1} parent=1 // pred_region
      %76 = dma.done [#allocation6], 16384
    $region53: #{tpu_custom_call.1} parent=1 // pred_fallthru
      _
    // Predicated region
    $region54: #{tpu_custom_call.1} parent=1 // pred_check
      _
    $region55: #{tpu_custom_call.1} parent=1 // pred_check_branch
      %78 = sbr.rel (0) target = $region57
    $region56: #{tpu_custom_call.1} parent=1 // pred_region
      %79 = dma.done [#allocation6], 4096
    $region57: #{tpu_custom_call.1} parent=1 // pred_fallthru
      _
    %v81 = vld [vmem:[%s0] sm:$0xff]
    %v82 = vld [vmem:[%s0 + $0x8] sm:$0xff]
    %v83 = vld [vmem:[%s0 + $0x10] sm:$0xff]
    %v84 = vld [vmem:[%s0 + $0x18] sm:$0xff]
    %v85 = vld [vmem:[%s0 + $0x20] sm:$0xff]
    %v86 = vld [vmem:[%s0 + $0x28] sm:$0xff]
    %v87 = vld [vmem:[%s0 + $0x30] sm:$0xff]
    %v88 = vld [vmem:[%s0 + $0x38] sm:$0xff]
    %v97 = vrot.slane %v81, 5
    %v98 = vrot.slane %v82, 5
    %v99 = vrot.slane %v83, 5
    %v100 = vrot.slane %v84, 5
    %v101 = vrot.slane %v85, 5
    %v102 = vrot.slane %v86, 5
    %v103 = vrot.slane %v87, 5
    %v104 = vrot.slane %v88, 5
    %vm113 = vcmask 1042432
    %v114 = vsel %vm113, 0.0, %v97
    %v115 = vsel %vm113, 0.0, %v98
    %v116 = vsel %vm113, 0.0, %v99
    %v117 = vsel %vm113, 0.0, %v100
    %v118 = vsel %vm113, 0.0, %v101
    %v119 = vsel %vm113, 0.0, %v102
    %v120 = vsel %vm113, 0.0, %v103
    %v121 = vsel %vm113, 0.0, %v104
    %v122 = vsel %vm113, %v97, 0.0
    %v123 = vsel %vm113, %v98, 0.0
    %v124 = vsel %vm113, %v99, 0.0
    %v125 = vsel %vm113, %v100, 0.0
    %v126 = vsel %vm113, %v101, 0.0
    %v127 = vsel %vm113, %v102, 0.0
    %v128 = vsel %vm113, %v103, 0.0
    %v129 = vsel %vm113, %v104, 0.0
    %v130 = vpack.c.bf16 %v115, %v114
    %v131 = vpack.c.bf16 %v117, %v116
    %v132 = vpack.c.bf16 %v119, %v118
    %v133 = vpack.c.bf16 %v121, %v120
    %v134 = vld [vmem:[%s1] sm:$0x7]
    %vm151 = vcmask 1046528
    %v152 = vrot.slane %v114, 1
    %v153 = vrot.slane %v122, 1
    %v154 = vsel %vm151, %v152, %v153
    %v155 = vrot.slane %v115, 1
    %v156 = vrot.slane %v123, 1
    %v157 = vsel %vm151, %v155, %v156
    %v158 = vrot.slane %v116, 1
    %v159 = vrot.slane %v124, 1
    %v160 = vsel %vm151, %v158, %v159
    %v161 = vrot.slane %v117, 1
    %v162 = vrot.slane %v125, 1
    %v163 = vsel %vm151, %v161, %v162
    %v164 = vrot.slane %v118, 1
    %v165 = vrot.slane %v126, 1
    %v166 = vsel %vm151, %v164, %v165
    %v167 = vrot.slane %v119, 1
    %v168 = vrot.slane %v127, 1
    %v169 = vsel %vm151, %v167, %v168
    %v170 = vrot.slane %v120, 1
    %v171 = vrot.slane %v128, 1
    %v172 = vsel %vm151, %v170, %v171
    %v173 = vrot.slane %v121, 1
    %v174 = vrot.slane %v129, 1
    %v175 = vsel %vm151, %v173, %v174
    %v184 = vpack.c.bf16 %v157, %v154
    %v185 = vpack.c.bf16 %v163, %v160
    %v186 = vpack.c.bf16 %v169, %v166
    %v187 = vpack.c.bf16 %v175, %v172
    %s188 = scalar_lea.vmem %s1, 4
    %v189 = vld [vmem:[%s188] sm:$0x7]
    %vm190 = vcmask 48128
    %v192 = vsel %vm190, %v184, 0
    %v195 = vsel %vm190, %v185, 0
    %v198 = vsel %vm190, %v186, 0
    %v201 = vsel %vm190, %v187, 0
    %v204 = vsel %vm113, %v189, 0
    %206 = vmatprep.subr.bf16.mxu0 0
    %207 = vmatpush1.bf16.msra.mxu0 0
    %208 = vmatprep.subr.bf16.mxu0 0
    %209 = vmatpush1.bf16.msra.mxu0 0
    %210 = vmatprep.subr.bf16.mxu0 0
    %211 = vmatpush1.bf16.msra.mxu0 0
    %212 = vmatprep.subr.bf16.mxu0 0
    %213 = vmatpush1.bf16.msra.mxu0 0
    %214 = vmatprep.subr.bf16.mxu0 0
    %215 = vmatpush1.bf16.msra.mxu0 0
    %216 = vmatprep.subr.bf16.mxu0 0
    %217 = vmatpush1.bf16.msra.mxu0 0
    %218 = vmatprep.subr.bf16.mxu0 0
    %219 = vmatpush1.bf16.msra.mxu0 0
    %220 = vmatprep.subr.bf16.mxu0 0
    %221 = vmatpush1.bf16.msra.mxu0 %v204
    %222 = vmatprep.subr.bf16.mxu0 0
    %223 = vmatpush2.bf16.msra.mxu0 0
    %224 = vmatprep.subr.bf16.mxu0 0
    %225 = vmatpush2.bf16.msra.mxu0 0
    %226 = vmatprep.subr.bf16.mxu0 0
    %227 = vmatpush2.bf16.msra.mxu0 0
    %228 = vmatprep.subr.bf16.mxu0 0
    %229 = vmatpush2.bf16.msra.mxu0 0
    %230 = vmatprep.subr.bf16.mxu0 0
    %231 = vmatpush2.bf16.msra.mxu0 0
    %232 = vmatprep.subr.bf16.mxu0 0
    %233 = vmatpush2.bf16.msra.mxu0 0
    %234 = vmatprep.subr.bf16.mxu0 0
    %235 = vmatpush2.bf16.msra.mxu0 0
    %236 = vmatprep.subr.bf16.mxu0 0
    %237 = vmatpush2.bf16.msra.mxu0 0
    %238 = vmatprep.mubr.bf16.mxu0 0
    %239 = vmatmul.mubr.bf16.gmra.mxu0 %v192
    %v240 = vpop.f32.mrf.mxu0
    %v241 = vadd.f32 0.0, %v240
    %v242 = vpop.f32.mrf.mxu0
    %v243 = vpop.f32.mrf.mxu0
    %v244 = vadd.f32 0.0, %v243
    %v245 = vpop.f32.mrf.mxu0
    %246 = vmatprep.mubr.bf16.mxu0 0
    %247 = vmatmul.mubr.bf16.gmra.mxu0 %v195
    %v248 = vpop.f32.mrf.mxu0
    %v249 = vadd.f32 0.0, %v248
    %v250 = vpop.f32.mrf.mxu0
    %v251 = vpop.f32.mrf.mxu0
    %v252 = vadd.f32 0.0, %v251
    %v253 = vpop.f32.mrf.mxu0
    %254 = vmatprep.mubr.bf16.mxu0 0
    %255 = vmatmul.mubr.bf16.gmra.mxu0 %v198
    %v256 = vpop.f32.mrf.mxu0
    %v257 = vadd.f32 0.0, %v256
    %v258 = vpop.f32.mrf.mxu0
    %v259 = vpop.f32.mrf.mxu0
    %v260 = vadd.f32 0.0, %v259
    %v261 = vpop.f32.mrf.mxu0
    %262 = vmatprep.mubr.bf16.mxu0 0
    %263 = vmatmul.mubr.bf16.gmra.mxu0 %v201
    %v264 = vpop.f32.mrf.mxu0
    %v265 = vadd.f32 0.0, %v264
    %v266 = vpop.f32.mrf.mxu0
    %v267 = vpop.f32.mrf.mxu0
    %v268 = vadd.f32 0.0, %v267
    %v269 = vpop.f32.mrf.mxu0
    %270 = vdwg.mxu0
    %v272 = vsel %vm190, %v130, 0
    %v275 = vsel %vm190, %v131, 0
    %v278 = vsel %vm190, %v132, 0
    %v281 = vsel %vm190, %v133, 0
    %v284 = vsel %vm113, %v134, 0
    %286 = vmatprep.subr.bf16.mxu0 0
    %287 = vmatpush1.bf16.msra.mxu0 0
    %288 = vmatprep.subr.bf16.mxu0 0
    %289 = vmatpush1.bf16.msra.mxu0 0
    %290 = vmatprep.subr.bf16.mxu0 0
    %291 = vmatpush1.bf16.msra.mxu0 0
    %292 = vmatprep.subr.bf16.mxu0 0
    %293 = vmatpush1.bf16.msra.mxu0 0
    %294 = vmatprep.subr.bf16.mxu0 0
    %295 = vmatpush1.bf16.msra.mxu0 0
    %296 = vmatprep.subr.bf16.mxu0 0
    %297 = vmatpush1.bf16.msra.mxu0 0
    %298 = vmatprep.subr.bf16.mxu0 0
    %299 = vmatpush1.bf16.msra.mxu0 0
    %300 = vmatprep.subr.bf16.mxu0 0
    %301 = vmatpush1.bf16.msra.mxu0 %v284
    %302 = vmatprep.subr.bf16.mxu0 0
    %303 = vmatpush2.bf16.msra.mxu0 0
    %304 = vmatprep.subr.bf16.mxu0 0
    %305 = vmatpush2.bf16.msra.mxu0 0
    %306 = vmatprep.subr.bf16.mxu0 0
    %307 = vmatpush2.bf16.msra.mxu0 0
    %308 = vmatprep.subr.bf16.mxu0 0
    %309 = vmatpush2.bf16.msra.mxu0 0
    %310 = vmatprep.subr.bf16.mxu0 0
    %311 = vmatpush2.bf16.msra.mxu0 0
    %312 = vmatprep.subr.bf16.mxu0 0
    %313 = vmatpush2.bf16.msra.mxu0 0
    %314 = vmatprep.subr.bf16.mxu0 0
    %315 = vmatpush2.bf16.msra.mxu0 0
    %316 = vmatprep.subr.bf16.mxu0 0
    %317 = vmatpush2.bf16.msra.mxu0 0
    %318 = vmatprep.mubr.bf16.mxu0 0
    %319 = vmatmul.mubr.bf16.gmra.mxu0 %v272
    %v320 = vpop.f32.mrf.mxu0
    %v321 = vadd.f32 %v241, %v320
    %v322 = vpop.f32.mrf.mxu0
    %v323 = vpop.f32.mrf.mxu0
    %v324 = vadd.f32 %v244, %v323
    %v325 = vpop.f32.mrf.mxu0
    %326 = vmatprep.mubr.bf16.mxu0 0
    %327 = vmatmul.mubr.bf16.gmra.mxu0 %v275
    %v328 = vpop.f32.mrf.mxu0
    %v329 = vadd.f32 %v249, %v328
    %v330 = vpop.f32.mrf.mxu0
    %v331 = vpop.f32.mrf.mxu0
    %v332 = vadd.f32 %v252, %v331
    %v333 = vpop.f32.mrf.mxu0
    %334 = vmatprep.mubr.bf16.mxu0 0
    %335 = vmatmul.mubr.bf16.gmra.mxu0 %v278
    %v336 = vpop.f32.mrf.mxu0
    %v337 = vadd.f32 %v257, %v336
    %v338 = vpop.f32.mrf.mxu0
    %v339 = vpop.f32.mrf.mxu0
    %v340 = vadd.f32 %v260, %v339
    %v341 = vpop.f32.mrf.mxu0
    %342 = vmatprep.mubr.bf16.mxu0 0
    %343 = vmatmul.mubr.bf16.gmra.mxu0 %v281
    %v344 = vpop.f32.mrf.mxu0
    %v345 = vadd.f32 %v265, %v344
    %v346 = vpop.f32.mrf.mxu0
    %v347 = vpop.f32.mrf.mxu0
    %v348 = vadd.f32 %v268, %v347
    %v349 = vpop.f32.mrf.mxu0
    %350 = vdwg.mxu0
    %vm351 = vcmask 1045504
    %v352 = vrot.slane %v114, 2
    %v353 = vrot.slane %v122, 2
    %v354 = vsel %vm351, %v352, %v353
    %v355 = vrot.slane %v115, 2
    %v356 = vrot.slane %v123, 2
    %v357 = vsel %vm351, %v355, %v356
    %v358 = vrot.slane %v116, 2
    %v359 = vrot.slane %v124, 2
    %v360 = vsel %vm351, %v358, %v359
    %v361 = vrot.slane %v117, 2
    %v362 = vrot.slane %v125, 2
    %v363 = vsel %vm351, %v361, %v362
    %v364 = vrot.slane %v118, 2
    %v365 = vrot.slane %v126, 2
    %v366 = vsel %vm351, %v364, %v365
    %v367 = vrot.slane %v119, 2
    %v368 = vrot.slane %v127, 2
    %v369 = vsel %vm351, %v367, %v368
    %v370 = vrot.slane %v120, 2
    %v371 = vrot.slane %v128, 2
    %v372 = vsel %vm351, %v370, %v371
    %v373 = vrot.slane %v121, 2
    %v374 = vrot.slane %v129, 2
    %v375 = vsel %vm351, %v373, %v374
    %v384 = vpack.c.bf16 %v357, %v354
    %v385 = vpack.c.bf16 %v363, %v360
    %v386 = vpack.c.bf16 %v369, %v366
    %v387 = vpack.c.bf16 %v375, %v372
    %s388 = scalar_lea.vmem %s1, 8
    %v389 = vld [vmem:[%s388] sm:$0x7]
    %v391 = vsel %vm190, %v384, 0
    %v394 = vsel %vm190, %v385, 0
    %v397 = vsel %vm190, %v386, 0
    %v400 = vsel %vm190, %v387, 0
    %v403 = vsel %vm113, %v389, 0
    %405 = vmatprep.subr.bf16.mxu0 0
    %406 = vmatpush1.bf16.msra.mxu0 0
    %407 = vmatprep.subr.bf16.mxu0 0
    %408 = vmatpush1.bf16.msra.mxu0 0
    %409 = vmatprep.subr.bf16.mxu0 0
    %410 = vmatpush1.bf16.msra.mxu0 0
    %411 = vmatprep.subr.bf16.mxu0 0
    %412 = vmatpush1.bf16.msra.mxu0 0
    %413 = vmatprep.subr.bf16.mxu0 0
    %414 = vmatpush1.bf16.msra.mxu0 0
    %415 = vmatprep.subr.bf16.mxu0 0
    %416 = vmatpush1.bf16.msra.mxu0 0
    %417 = vmatprep.subr.bf16.mxu0 0
    %418 = vmatpush1.bf16.msra.mxu0 0
    %419 = vmatprep.subr.bf16.mxu0 0
    %420 = vmatpush1.bf16.msra.mxu0 %v403
    %421 = vmatprep.subr.bf16.mxu0 0
    %422 = vmatpush2.bf16.msra.mxu0 0
    %423 = vmatprep.subr.bf16.mxu0 0
    %424 = vmatpush2.bf16.msra.mxu0 0
    %425 = vmatprep.subr.bf16.mxu0 0
    %426 = vmatpush2.bf16.msra.mxu0 0
    %427 = vmatprep.subr.bf16.mxu0 0
    %428 = vmatpush2.bf16.msra.mxu0 0
    %429 = vmatprep.subr.bf16.mxu0 0
    %430 = vmatpush2.bf16.msra.mxu0 0
    %431 = vmatprep.subr.bf16.mxu0 0
    %432 = vmatpush2.bf16.msra.mxu0 0
    %433 = vmatprep.subr.bf16.mxu0 0
    %434 = vmatpush2.bf16.msra.mxu0 0
    %435 = vmatprep.subr.bf16.mxu0 0
    %436 = vmatpush2.bf16.msra.mxu0 0
    %437 = vmatprep.mubr.bf16.mxu0 0
    %438 = vmatmul.mubr.bf16.gmra.mxu0 %v391
    %v439 = vpop.f32.mrf.mxu0
    %v440 = vadd.f32 0.0, %v439
    %v441 = vpop.f32.mrf.mxu0
    %v442 = vpop.f32.mrf.mxu0
    %v443 = vadd.f32 0.0, %v442
    %v444 = vpop.f32.mrf.mxu0
    %445 = vmatprep.mubr.bf16.mxu0 0
    %446 = vmatmul.mubr.bf16.gmra.mxu0 %v394
    %v447 = vpop.f32.mrf.mxu0
    %v448 = vadd.f32 0.0, %v447
    %v449 = vpop.f32.mrf.mxu0
    %v450 = vpop.f32.mrf.mxu0
    %v451 = vadd.f32 0.0, %v450
    %v452 = vpop.f32.mrf.mxu0
    %453 = vmatprep.mubr.bf16.mxu0 0
    %454 = vmatmul.mubr.bf16.gmra.mxu0 %v397
    %v455 = vpop.f32.mrf.mxu0
    %v456 = vadd.f32 0.0, %v455
    %v457 = vpop.f32.mrf.mxu0
    %v458 = vpop.f32.mrf.mxu0
    %v459 = vadd.f32 0.0, %v458
    %v460 = vpop.f32.mrf.mxu0
    %461 = vmatprep.mubr.bf16.mxu0 0
    %462 = vmatmul.mubr.bf16.gmra.mxu0 %v400
    %v463 = vpop.f32.mrf.mxu0
    %v464 = vadd.f32 0.0, %v463
    %v465 = vpop.f32.mrf.mxu0
    %v466 = vpop.f32.mrf.mxu0
    %v467 = vadd.f32 0.0, %v466
    %v468 = vpop.f32.mrf.mxu0
    %469 = vdwg.mxu0
    %v470 = vadd.f32 %v321, %v440
    %v471 = vadd.f32 %v324, %v443
    %v472 = vadd.f32 %v329, %v448
    %v473 = vadd.f32 %v332, %v451
    %v474 = vadd.f32 %v337, %v456
    %v475 = vadd.f32 %v340, %v459
    %v476 = vadd.f32 %v345, %v464
    %v477 = vadd.f32 %v348, %v467
    %vm478 = vcmask 1044480
    %v479 = vrot.slane %v114, 3
    %v480 = vrot.slane %v122, 3
    %v481 = vsel %vm478, %v479, %v480
    %v482 = vrot.slane %v115, 3
    %v483 = vrot.slane %v123, 3
    %v484 = vsel %vm478, %v482, %v483
    %v485 = vrot.slane %v116, 3
    %v486 = vrot.slane %v124, 3
    %v487 = vsel %vm478, %v485, %v486
    %v488 = vrot.slane %v117, 3
    %v489 = vrot.slane %v125, 3
    %v490 = vsel %vm478, %v488, %v489
    %v491 = vrot.slane %v118, 3
    %v492 = vrot.slane %v126, 3
    %v493 = vsel %vm478, %v491, %v492
    %v494 = vrot.slane %v119, 3
    %v495 = vrot.slane %v127, 3
    %v496 = vsel %vm478, %v494, %v495
    %v497 = vrot.slane %v120, 3
    %v498 = vrot.slane %v128, 3
    %v499 = vsel %vm478, %v497, %v498
    %v500 = vrot.slane %v121, 3
    %v501 = vrot.slane %v129, 3
    %v502 = vsel %vm478, %v500, %v501
    %v511 = vpack.c.bf16 %v484, %v481
    %v512 = vpack.c.bf16 %v490, %v487
    %v513 = vpack.c.bf16 %v496, %v493
    %v514 = vpack.c.bf16 %v502, %v499
    %s515 = scalar_lea.vmem %s1, 12
    %v516 = vld [vmem:[%s515] sm:$0x7]
    %v518 = vsel %vm190, %v511, 0
    %v521 = vsel %vm190, %v512, 0
    %v524 = vsel %vm190, %v513, 0
    %v527 = vsel %vm190, %v514, 0
    %v530 = vsel %vm113, %v516, 0
    %532 = vmatprep.subr.bf16.mxu0 0
    %533 = vmatpush1.bf16.msra.mxu0 0
    %534 = vmatprep.subr.bf16.mxu0 0
    %535 = vmatpush1.bf16.msra.mxu0 0
    %536 = vmatprep.subr.bf16.mxu0 0
    %537 = vmatpush1.bf16.msra.mxu0 0
    %538 = vmatprep.subr.bf16.mxu0 0
    %539 = vmatpush1.bf16.msra.mxu0 0
    %540 = vmatprep.subr.bf16.mxu0 0
    %541 = vmatpush1.bf16.msra.mxu0 0
    %542 = vmatprep.subr.bf16.mxu0 0
    %543 = vmatpush1.bf16.msra.mxu0 0
    %544 = vmatprep.subr.bf16.mxu0 0
    %545 = vmatpush1.bf16.msra.mxu0 0
    %546 = vmatprep.subr.bf16.mxu0 0
    %547 = vmatpush1.bf16.msra.mxu0 %v530
    %548 = vmatprep.subr.bf16.mxu0 0
    %549 = vmatpush2.bf16.msra.mxu0 0
    %550 = vmatprep.subr.bf16.mxu0 0
    %551 = vmatpush2.bf16.msra.mxu0 0
    %552 = vmatprep.subr.bf16.mxu0 0
    %553 = vmatpush2.bf16.msra.mxu0 0
    %554 = vmatprep.subr.bf16.mxu0 0
    %555 = vmatpush2.bf16.msra.mxu0 0
    %556 = vmatprep.subr.bf16.mxu0 0
    %557 = vmatpush2.bf16.msra.mxu0 0
    %558 = vmatprep.subr.bf16.mxu0 0
    %559 = vmatpush2.bf16.msra.mxu0 0
    %560 = vmatprep.subr.bf16.mxu0 0
    %561 = vmatpush2.bf16.msra.mxu0 0
    %562 = vmatprep.subr.bf16.mxu0 0
    %563 = vmatpush2.bf16.msra.mxu0 0
    %564 = vmatprep.mubr.bf16.mxu0 0
    %565 = vmatmul.mubr.bf16.gmra.mxu0 %v518
    %v566 = vpop.f32.mrf.mxu0
    %v567 = vadd.f32 0.0, %v566
    %v568 = vpop.f32.mrf.mxu0
    %v569 = vpop.f32.mrf.mxu0
    %v570 = vadd.f32 0.0, %v569
    %v571 = vpop.f32.mrf.mxu0
    %572 = vmatprep.mubr.bf16.mxu0 0
    %573 = vmatmul.mubr.bf16.gmra.mxu0 %v521
    %v574 = vpop.f32.mrf.mxu0
    %v575 = vadd.f32 0.0, %v574
    %v576 = vpop.f32.mrf.mxu0
    %v577 = vpop.f32.mrf.mxu0
    %v578 = vadd.f32 0.0, %v577
    %v579 = vpop.f32.mrf.mxu0
    %580 = vmatprep.mubr.bf16.mxu0 0
    %581 = vmatmul.mubr.bf16.gmra.mxu0 %v524
    %v582 = vpop.f32.mrf.mxu0
    %v583 = vadd.f32 0.0, %v582
    %v584 = vpop.f32.mrf.mxu0
    %v585 = vpop.f32.mrf.mxu0
    %v586 = vadd.f32 0.0, %v585
    %v587 = vpop.f32.mrf.mxu0
    %588 = vmatprep.mubr.bf16.mxu0 0
    %589 = vmatmul.mubr.bf16.gmra.mxu0 %v527
    %v590 = vpop.f32.mrf.mxu0
    %v591 = vadd.f32 0.0, %v590
    %v592 = vpop.f32.mrf.mxu0
    %v593 = vpop.f32.mrf.mxu0
    %v594 = vadd.f32 0.0, %v593
    %v595 = vpop.f32.mrf.mxu0
    %596 = vdwg.mxu0
    %v597 = vadd.f32 %v470, %v567
    %v598 = vadd.f32 %v471, %v570
    %v599 = vadd.f32 %v472, %v575
    %v600 = vadd.f32 %v473, %v578
    %v601 = vadd.f32 %v474, %v583
    %v602 = vadd.f32 %v475, %v586
    %v603 = vadd.f32 %v476, %v591
    %v604 = vadd.f32 %v477, %v594
    %vm605 = vcmask 1043456
    %v606 = vrot.slane %v114, 4
    %v607 = vrot.slane %v122, 4
    %v608 = vsel %vm605, %v606, %v607
    %v609 = vrot.slane %v115, 4
    %v610 = vrot.slane %v123, 4
    %v611 = vsel %vm605, %v609, %v610
    %v612 = vrot.slane %v116, 4
    %v613 = vrot.slane %v124, 4
    %v614 = vsel %vm605, %v612, %v613
    %v615 = vrot.slane %v117, 4
    %v616 = vrot.slane %v125, 4
    %v617 = vsel %vm605, %v615, %v616
    %v618 = vrot.slane %v118, 4
    %v619 = vrot.slane %v126, 4
    %v620 = vsel %vm605, %v618, %v619
    %v621 = vrot.slane %v119, 4
    %v622 = vrot.slane %v127, 4
    %v623 = vsel %vm605, %v621, %v622
    %v624 = vrot.slane %v120, 4
    %v625 = vrot.slane %v128, 4
    %v626 = vsel %vm605, %v624, %v625
    %v627 = vrot.slane %v121, 4
    %v628 = vrot.slane %v129, 4
    %v629 = vsel %vm605, %v627, %v628
    %v638 = vpack.c.bf16 %v611, %v608
    %v639 = vpack.c.bf16 %v617, %v614
    %v640 = vpack.c.bf16 %v623, %v620
    %v641 = vpack.c.bf16 %v629, %v626
    %s642 = scalar_lea.vmem %s1, 16
    %v643 = vld [vmem:[%s642] sm:$0x7]
    %v645 = vsel %vm190, %v638, 0
    %v648 = vsel %vm190, %v639, 0
    %v651 = vsel %vm190, %v640, 0
    %v654 = vsel %vm190, %v641, 0
    %v657 = vsel %vm113, %v643, 0
    %659 = vmatprep.subr.bf16.mxu0 0
    %660 = vmatpush1.bf16.msra.mxu0 0
    %661 = vmatprep.subr.bf16.mxu0 0
    %662 = vmatpush1.bf16.msra.mxu0 0
    %663 = vmatprep.subr.bf16.mxu0 0
    %664 = vmatpush1.bf16.msra.mxu0 0
    %665 = vmatprep.subr.bf16.mxu0 0
    %666 = vmatpush1.bf16.msra.mxu0 0
    %667 = vmatprep.subr.bf16.mxu0 0
    %668 = vmatpush1.bf16.msra.mxu0 0
    %669 = vmatprep.subr.bf16.mxu0 0
    %670 = vmatpush1.bf16.msra.mxu0 0
    %671 = vmatprep.subr.bf16.mxu0 0
    %672 = vmatpush1.bf16.msra.mxu0 0
    %673 = vmatprep.subr.bf16.mxu0 0
    %674 = vmatpush1.bf16.msra.mxu0 %v657
    %675 = vmatprep.subr.bf16.mxu0 0
    %676 = vmatpush2.bf16.msra.mxu0 0
    %677 = vmatprep.subr.bf16.mxu0 0
    %678 = vmatpush2.bf16.msra.mxu0 0
    %679 = vmatprep.subr.bf16.mxu0 0
    %680 = vmatpush2.bf16.msra.mxu0 0
    %681 = vmatprep.subr.bf16.mxu0 0
    %682 = vmatpush2.bf16.msra.mxu0 0
    %683 = vmatprep.subr.bf16.mxu0 0
    %684 = vmatpush2.bf16.msra.mxu0 0
    %685 = vmatprep.subr.bf16.mxu0 0
    %686 = vmatpush2.bf16.msra.mxu0 0
    %687 = vmatprep.subr.bf16.mxu0 0
    %688 = vmatpush2.bf16.msra.mxu0 0
    %689 = vmatprep.subr.bf16.mxu0 0
    %690 = vmatpush2.bf16.msra.mxu0 0
    %691 = vmatprep.mubr.bf16.mxu0 0
    %692 = vmatmul.mubr.bf16.gmra.mxu0 %v645
    %v693 = vpop.f32.mrf.mxu0
    %v694 = vadd.f32 0.0, %v693
    %v695 = vpop.f32.mrf.mxu0
    %v696 = vpop.f32.mrf.mxu0
    %v697 = vadd.f32 0.0, %v696
    %v698 = vpop.f32.mrf.mxu0
    %699 = vmatprep.mubr.bf16.mxu0 0
    %700 = vmatmul.mubr.bf16.gmra.mxu0 %v648
    %v701 = vpop.f32.mrf.mxu0
    %v702 = vadd.f32 0.0, %v701
    %v703 = vpop.f32.mrf.mxu0
    %v704 = vpop.f32.mrf.mxu0
    %v705 = vadd.f32 0.0, %v704
    %v706 = vpop.f32.mrf.mxu0
    %707 = vmatprep.mubr.bf16.mxu0 0
    %708 = vmatmul.mubr.bf16.gmra.mxu0 %v651
    %v709 = vpop.f32.mrf.mxu0
    %v710 = vadd.f32 0.0, %v709
    %v711 = vpop.f32.mrf.mxu0
    %v712 = vpop.f32.mrf.mxu0
    %v713 = vadd.f32 0.0, %v712
    %v714 = vpop.f32.mrf.mxu0
    %715 = vmatprep.mubr.bf16.mxu0 0
    %716 = vmatmul.mubr.bf16.gmra.mxu0 %v654
    %v717 = vpop.f32.mrf.mxu0
    %v718 = vadd.f32 0.0, %v717
    %v719 = vpop.f32.mrf.mxu0
    %v720 = vpop.f32.mrf.mxu0
    %v721 = vadd.f32 0.0, %v720
    %v722 = vpop.f32.mrf.mxu0
    %723 = vdwg.mxu0
    %v724 = vadd.f32 %v597, %v694
    %v725 = vadd.f32 %v598, %v697
    %v726 = vadd.f32 %v599, %v702
    %v727 = vadd.f32 %v600, %v705
    %v728 = vadd.f32 %v601, %v710
    %v729 = vadd.f32 %v602, %v713
    %v730 = vadd.f32 %v603, %v718
    %v731 = vadd.f32 %v604, %v721
    %v732 = vrot.slane %v114, 5
    %v733 = vrot.slane %v122, 5
    %v734 = vsel %vm113, %v732, %v733
    %v735 = vrot.slane %v115, 5
    %v736 = vrot.slane %v123, 5
    %v737 = vsel %vm113, %v735, %v736
    %v738 = vrot.slane %v116, 5
    %v739 = vrot.slane %v124, 5
    %v740 = vsel %vm113, %v738, %v739
    %v741 = vrot.slane %v117, 5
    %v742 = vrot.slane %v125, 5
    %v743 = vsel %vm113, %v741, %v742
    %v744 = vrot.slane %v118, 5
    %v745 = vrot.slane %v126, 5
    %v746 = vsel %vm113, %v744, %v745
    %v747 = vrot.slane %v119, 5
    %v748 = vrot.slane %v127, 5
    %v749 = vsel %vm113, %v747, %v748
    %v750 = vrot.slane %v120, 5
    %v751 = vrot.slane %v128, 5
    %v752 = vsel %vm113, %v750, %v751
    %v753 = vrot.slane %v121, 5
    %v754 = vrot.slane %v129, 5
    %v755 = vsel %vm113, %v753, %v754
    %v764 = vpack.c.bf16 %v737, %v734
    %v765 = vpack.c.bf16 %v743, %v740
    %v766 = vpack.c.bf16 %v749, %v746
    %v767 = vpack.c.bf16 %v755, %v752
    %s768 = scalar_lea.vmem %s1, 20
    %v769 = vld [vmem:[%s768] sm:$0x7]
    %v771 = vsel %vm190, %v764, 0
    %v774 = vsel %vm190, %v765, 0
    %v777 = vsel %vm190, %v766, 0
    %v780 = vsel %vm190, %v767, 0
    %v783 = vsel %vm113, %v769, 0
    %785 = vmatprep.subr.bf16.mxu0 0
    %786 = vmatpush1.bf16.msra.mxu0 0
    %787 = vmatprep.subr.bf16.mxu0 0
    %788 = vmatpush1.bf16.msra.mxu0 0
    %789 = vmatprep.subr.bf16.mxu0 0
    %790 = vmatpush1.bf16.msra.mxu0 0
    %791 = vmatprep.subr.bf16.mxu0 0
    %792 = vmatpush1.bf16.msra.mxu0 0
    %793 = vmatprep.subr.bf16.mxu0 0
    %794 = vmatpush1.bf16.msra.mxu0 0
    %795 = vmatprep.subr.bf16.mxu0 0
    %796 = vmatpush1.bf16.msra.mxu0 0
    %797 = vmatprep.subr.bf16.mxu0 0
    %798 = vmatpush1.bf16.msra.mxu0 0
    %799 = vmatprep.subr.bf16.mxu0 0
    %800 = vmatpush1.bf16.msra.mxu0 %v783
    %801 = vmatprep.subr.bf16.mxu0 0
    %802 = vmatpush2.bf16.msra.mxu0 0
    %803 = vmatprep.subr.bf16.mxu0 0
    %804 = vmatpush2.bf16.msra.mxu0 0
    %805 = vmatprep.subr.bf16.mxu0 0
    %806 = vmatpush2.bf16.msra.mxu0 0
    %807 = vmatprep.subr.bf16.mxu0 0
    %808 = vmatpush2.bf16.msra.mxu0 0
    %809 = vmatprep.subr.bf16.mxu0 0
    %810 = vmatpush2.bf16.msra.mxu0 0
    %811 = vmatprep.subr.bf16.mxu0 0
    %812 = vmatpush2.bf16.msra.mxu0 0
    %813 = vmatprep.subr.bf16.mxu0 0
    %814 = vmatpush2.bf16.msra.mxu0 0
    %815 = vmatprep.subr.bf16.mxu0 0
    %816 = vmatpush2.bf16.msra.mxu0 0
    %817 = vmatprep.mubr.bf16.mxu0 0
    %818 = vmatmul.mubr.bf16.gmra.mxu0 %v771
    %v819 = vpop.f32.mrf.mxu0
    %v820 = vadd.f32 0.0, %v819
    %v821 = vpop.f32.mrf.mxu0
    %v822 = vpop.f32.mrf.mxu0
    %v823 = vadd.f32 0.0, %v822
    %v824 = vpop.f32.mrf.mxu0
    %825 = vmatprep.mubr.bf16.mxu0 0
    %826 = vmatmul.mubr.bf16.gmra.mxu0 %v774
    %v827 = vpop.f32.mrf.mxu0
    %v828 = vadd.f32 0.0, %v827
    %v829 = vpop.f32.mrf.mxu0
    %v830 = vpop.f32.mrf.mxu0
    %v831 = vadd.f32 0.0, %v830
    %v832 = vpop.f32.mrf.mxu0
    %833 = vmatprep.mubr.bf16.mxu0 0
    %834 = vmatmul.mubr.bf16.gmra.mxu0 %v777
    %v835 = vpop.f32.mrf.mxu0
    %v836 = vadd.f32 0.0, %v835
    %v837 = vpop.f32.mrf.mxu0
    %v838 = vpop.f32.mrf.mxu0
    %v839 = vadd.f32 0.0, %v838
    %v840 = vpop.f32.mrf.mxu0
    %841 = vmatprep.mubr.bf16.mxu0 0
    %842 = vmatmul.mubr.bf16.gmra.mxu0 %v780
    %v843 = vpop.f32.mrf.mxu0
    %v844 = vadd.f32 0.0, %v843
    %v845 = vpop.f32.mrf.mxu0
    %v846 = vpop.f32.mrf.mxu0
    %v847 = vadd.f32 0.0, %v846
    %v848 = vpop.f32.mrf.mxu0
    %849 = vdwg.mxu0
    %v850 = vadd.f32 %v724, %v820
    %v851 = vadd.f32 %v725, %v823
    %v852 = vadd.f32 %v726, %v828
    %v853 = vadd.f32 %v727, %v831
    %v854 = vadd.f32 %v728, %v836
    %v855 = vadd.f32 %v729, %v839
    %v856 = vadd.f32 %v730, %v844
    %v857 = vadd.f32 %v731, %v847
    %vm858 = vcmask 1041408
    %v859 = vrot.slane %v114, 6
    %v860 = vrot.slane %v122, 6
    %v861 = vsel %vm858, %v859, %v860
    %v862 = vrot.slane %v115, 6
    %v863 = vrot.slane %v123, 6
    %v864 = vsel %vm858, %v862, %v863
    %v865 = vrot.slane %v116, 6
    %v866 = vrot.slane %v124, 6
    %v867 = vsel %vm858, %v865, %v866
    %v868 = vrot.slane %v117, 6
    %v869 = vrot.slane %v125, 6
    %v870 = vsel %vm858, %v868, %v869
    %v871 = vrot.slane %v118, 6
    %v872 = vrot.slane %v126, 6
    %v873 = vsel %vm858, %v871, %v872
    %v874 = vrot.slane %v119, 6
    %v875 = vrot.slane %v127, 6
    %v876 = vsel %vm858, %v874, %v875
    %v877 = vrot.slane %v120, 6
    %v878 = vrot.slane %v128, 6
    %v879 = vsel %vm858, %v877, %v878
    %v880 = vrot.slane %v121, 6
    %v881 = vrot.slane %v129, 6
    %v882 = vsel %vm858, %v880, %v881
    %v891 = vpack.c.bf16 %v864, %v861
    %v892 = vpack.c.bf16 %v870, %v867
    %v893 = vpack.c.bf16 %v876, %v873
    %v894 = vpack.c.bf16 %v882, %v879
    %s895 = scalar_lea.vmem %s1, 24
    %v896 = vld [vmem:[%s895] sm:$0x7]
    %v898 = vsel %vm190, %v891, 0
    %v901 = vsel %vm190, %v892, 0
    %v904 = vsel %vm190, %v893, 0
    %v907 = vsel %vm190, %v894, 0
    %v910 = vsel %vm113, %v896, 0
    %912 = vmatprep.subr.bf16.mxu0 0
    %913 = vmatpush1.bf16.msra.mxu0 0
    %914 = vmatprep.subr.bf16.mxu0 0
    %915 = vmatpush1.bf16.msra.mxu0 0
    %916 = vmatprep.subr.bf16.mxu0 0
    %917 = vmatpush1.bf16.msra.mxu0 0
    %918 = vmatprep.subr.bf16.mxu0 0
    %919 = vmatpush1.bf16.msra.mxu0 0
    %920 = vmatprep.subr.bf16.mxu0 0
    %921 = vmatpush1.bf16.msra.mxu0 0
    %922 = vmatprep.subr.bf16.mxu0 0
    %923 = vmatpush1.bf16.msra.mxu0 0
    %924 = vmatprep.subr.bf16.mxu0 0
    %925 = vmatpush1.bf16.msra.mxu0 0
    %926 = vmatprep.subr.bf16.mxu0 0
    %927 = vmatpush1.bf16.msra.mxu0 %v910
    %928 = vmatprep.subr.bf16.mxu0 0
    %929 = vmatpush2.bf16.msra.mxu0 0
    %930 = vmatprep.subr.bf16.mxu0 0
    %931 = vmatpush2.bf16.msra.mxu0 0
    %932 = vmatprep.subr.bf16.mxu0 0
    %933 = vmatpush2.bf16.msra.mxu0 0
    %934 = vmatprep.subr.bf16.mxu0 0
    %935 = vmatpush2.bf16.msra.mxu0 0
    %936 = vmatprep.subr.bf16.mxu0 0
    %937 = vmatpush2.bf16.msra.mxu0 0
    %938 = vmatprep.subr.bf16.mxu0 0
    %939 = vmatpush2.bf16.msra.mxu0 0
    %940 = vmatprep.subr.bf16.mxu0 0
    %941 = vmatpush2.bf16.msra.mxu0 0
    %942 = vmatprep.subr.bf16.mxu0 0
    %943 = vmatpush2.bf16.msra.mxu0 0
    %944 = vmatprep.mubr.bf16.mxu0 0
    %945 = vmatmul.mubr.bf16.gmra.mxu0 %v898
    %v946 = vpop.f32.mrf.mxu0
    %v947 = vadd.f32 0.0, %v946
    %v948 = vpop.f32.mrf.mxu0
    %v949 = vpop.f32.mrf.mxu0
    %v950 = vadd.f32 0.0, %v949
    %v951 = vpop.f32.mrf.mxu0
    %952 = vmatprep.mubr.bf16.mxu0 0
    %953 = vmatmul.mubr.bf16.gmra.mxu0 %v901
    %v954 = vpop.f32.mrf.mxu0
    %v955 = vadd.f32 0.0, %v954
    %v956 = vpop.f32.mrf.mxu0
    %v957 = vpop.f32.mrf.mxu0
    %v958 = vadd.f32 0.0, %v957
    %v959 = vpop.f32.mrf.mxu0
    %960 = vmatprep.mubr.bf16.mxu0 0
    %961 = vmatmul.mubr.bf16.gmra.mxu0 %v904
    %v962 = vpop.f32.mrf.mxu0
    %v963 = vadd.f32 0.0, %v962
    %v964 = vpop.f32.mrf.mxu0
    %v965 = vpop.f32.mrf.mxu0
    %v966 = vadd.f32 0.0, %v965
    %v967 = vpop.f32.mrf.mxu0
    %968 = vmatprep.mubr.bf16.mxu0 0
    %969 = vmatmul.mubr.bf16.gmra.mxu0 %v907
    %v970 = vpop.f32.mrf.mxu0
    %v971 = vadd.f32 0.0, %v970
    %v972 = vpop.f32.mrf.mxu0
    %v973 = vpop.f32.mrf.mxu0
    %v974 = vadd.f32 0.0, %v973
    %v975 = vpop.f32.mrf.mxu0
    %976 = vdwg.mxu0
    %v977 = vadd.f32 %v850, %v947
    %v978 = vadd.f32 %v851, %v950
    %v979 = vadd.f32 %v852, %v955
    %v980 = vadd.f32 %v853, %v958
    %v981 = vadd.f32 %v854, %v963
    %v982 = vadd.f32 %v855, %v966
    %v983 = vadd.f32 %v856, %v971
    %v984 = vadd.f32 %v857, %v974
    %v985 = vld [vmem:[%s2] sm:$0x1]
    %v987 = vlaneseq
    %v988 = vshrl.u32 %v987, 7
    %v989 = vsub.s32 0, %v988
    %v990 = vrot.slane %v985, %v989
    %v992 = vadd.f32 %v977, %v990
    %v993 = vadd.f32 %v978, %v990
    %v994 = vadd.f32 %v979, %v990
    %v995 = vadd.f32 %v980, %v990
    %v996 = vadd.f32 %v981, %v990
    %v997 = vadd.f32 %v982, %v990
    %v998 = vadd.f32 %v983, %v990
    %v999 = vadd.f32 %v984, %v990
    %v1000 = vmax.f32 %v992, 0.0
    %v1001 = vmax.f32 %v993, 0.0
    %v1002 = vmax.f32 %v994, 0.0
    %v1003 = vmax.f32 %v995, 0.0
    %v1004 = vmax.f32 %v996, 0.0
    %v1005 = vmax.f32 %v997, 0.0
    %v1006 = vmax.f32 %v998, 0.0
    %v1007 = vmax.f32 %v999, 0.0
    %v1016 = vrot.slane %v1000, 5
    %v1017 = vrot.slane %v1001, 5
    %v1018 = vrot.slane %v1002, 5
    %v1019 = vrot.slane %v1003, 5
    %v1020 = vrot.slane %v1004, 5
    %v1021 = vrot.slane %v1005, 5
    %v1022 = vrot.slane %v1006, 5
    %v1023 = vrot.slane %v1007, 5
    %v1032 = vsel %vm113, 0.0, %v1016
    %v1033 = vsel %vm113, 0.0, %v1017
    %v1034 = vsel %vm113, 0.0, %v1018
    %v1035 = vsel %vm113, 0.0, %v1019
    %v1036 = vsel %vm113, 0.0, %v1020
    %v1037 = vsel %vm113, 0.0, %v1021
    %v1038 = vsel %vm113, 0.0, %v1022
    %v1039 = vsel %vm113, 0.0, %v1023
    %v1040 = vsel %vm113, %v1016, 0.0
    %v1041 = vsel %vm113, %v1017, 0.0
    %v1042 = vsel %vm113, %v1018, 0.0
    %v1043 = vsel %vm113, %v1019, 0.0
    %v1044 = vsel %vm113, %v1020, 0.0
    %v1045 = vsel %vm113, %v1021, 0.0
    %v1046 = vsel %vm113, %v1022, 0.0
    %v1047 = vsel %vm113, %v1023, 0.0
    %v1048 = vpack.c.bf16 %v1033, %v1032
    %v1049 = vpack.c.bf16 %v1035, %v1034
    %v1050 = vpack.c.bf16 %v1037, %v1036
    %v1051 = vpack.c.bf16 %v1039, %v1038
    %v1052 = vld [vmem:[#allocation2] sm:$0xf]
    %v1053 = vld [vmem:[#allocation2 + $0x4] sm:$0xf]
    %v1054 = vld [vmem:[#allocation2 + $0x8] sm:$0xf]
    %v1055 = vld [vmem:[#allocation2 + $0xc] sm:$0xf]
    %v1056 = vld [vmem:[#allocation2 + $0x10] sm:$0xf]
    %v1057 = vld [vmem:[#allocation2 + $0x14] sm:$0xf]
    %v1058 = vld [vmem:[#allocation2 + $0x18] sm:$0xf]
    %v1059 = vld [vmem:[#allocation2 + $0x1c] sm:$0xf]
    %v1076 = vrot.slane %v1032, 1
    %v1077 = vrot.slane %v1040, 1
    %v1078 = vsel %vm151, %v1076, %v1077
    %v1079 = vrot.slane %v1033, 1
    %v1080 = vrot.slane %v1041, 1
    %v1081 = vsel %vm151, %v1079, %v1080
    %v1082 = vrot.slane %v1034, 1
    %v1083 = vrot.slane %v1042, 1
    %v1084 = vsel %vm151, %v1082, %v1083
    %v1085 = vrot.slane %v1035, 1
    %v1086 = vrot.slane %v1043, 1
    %v1087 = vsel %vm151, %v1085, %v1086
    %v1088 = vrot.slane %v1036, 1
    %v1089 = vrot.slane %v1044, 1
    %v1090 = vsel %vm151, %v1088, %v1089
    %v1091 = vrot.slane %v1037, 1
    %v1092 = vrot.slane %v1045, 1
    %v1093 = vsel %vm151, %v1091, %v1092
    %v1094 = vrot.slane %v1038, 1
    %v1095 = vrot.slane %v1046, 1
    %v1096 = vsel %vm151, %v1094, %v1095
    %v1097 = vrot.slane %v1039, 1
    %v1098 = vrot.slane %v1047, 1
    %v1099 = vsel %vm151, %v1097, %v1098
    %v1108 = vpack.c.bf16 %v1081, %v1078
    %v1109 = vpack.c.bf16 %v1087, %v1084
    %v1110 = vpack.c.bf16 %v1093, %v1090
    %v1111 = vpack.c.bf16 %v1099, %v1096
    %s1112 = scalar_lea.vmem [#allocation2], 32
    %v1113 = vld [vmem:[%s1112] sm:$0xf]
    %v1114 = vld [vmem:[%s1112 + $0x4] sm:$0xf]
    %v1115 = vld [vmem:[%s1112 + $0x8] sm:$0xf]
    %v1116 = vld [vmem:[%s1112 + $0xc] sm:$0xf]
    %v1117 = vld [vmem:[%s1112 + $0x10] sm:$0xf]
    %v1118 = vld [vmem:[%s1112 + $0x14] sm:$0xf]
    %v1119 = vld [vmem:[%s1112 + $0x18] sm:$0xf]
    %v1120 = vld [vmem:[%s1112 + $0x1c] sm:$0xf]
    %v1129 = vunpack.c.l.b16 %v1113
    %v1130 = vunpack.c.l.b16 %v1114
    %v1131 = vunpack.c.l.b16 %v1115
    %v1132 = vunpack.c.l.b16 %v1116
    %v1133 = vunpack.c.l.b16 %v1117
    %v1134 = vunpack.c.l.b16 %v1118
    %v1135 = vunpack.c.l.b16 %v1119
    %v1136 = vunpack.c.l.b16 %v1120
    %v1137 = vpack.c.b16 %v1130, %v1129
    %v1138 = vpack.c.b16 %v1132, %v1131
    %v1139 = vpack.c.b16 %v1134, %v1133
    %v1140 = vpack.c.b16 %v1136, %v1135
    %vm1145 = vcmask 523264
    %v1147 = vsel %vm1145, %v1108, 0
    %v1150 = vsel %vm1145, %v1109, 0
    %v1153 = vsel %vm1145, %v1110, 0
    %v1156 = vsel %vm1145, %v1111, 0
    %1158 = vmatprep.subr.bf16.mxu0 0
    %1159 = vmatpush1.bf16.msra.mxu0 0
    %1160 = vmatprep.subr.bf16.mxu0 0
    %1161 = vmatpush1.bf16.msra.mxu0 0
    %1162 = vmatprep.subr.bf16.mxu0 0
    %1163 = vmatpush1.bf16.msra.mxu0 0
    %1164 = vmatprep.subr.bf16.mxu0 0
    %1165 = vmatpush1.bf16.msra.mxu0 0
    %1166 = vmatprep.subr.bf16.mxu0 0
    %1167 = vmatpush1.bf16.msra.mxu0 %v1140
    %1168 = vmatprep.subr.bf16.mxu0 0
    %1169 = vmatpush1.bf16.msra.mxu0 %v1139
    %1170 = vmatprep.subr.bf16.mxu0 0
    %1171 = vmatpush1.bf16.msra.mxu0 %v1138
    %1172 = vmatprep.subr.bf16.mxu0 0
    %1173 = vmatpush1.bf16.msra.mxu0 %v1137
    %1174 = vmatprep.subr.bf16.mxu0 0
    %1175 = vmatpush2.bf16.msra.mxu0 0
    %1176 = vmatprep.subr.bf16.mxu0 0
    %1177 = vmatpush2.bf16.msra.mxu0 0
    %1178 = vmatprep.subr.bf16.mxu0 0
    %1179 = vmatpush2.bf16.msra.mxu0 0
    %1180 = vmatprep.subr.bf16.mxu0 0
    %1181 = vmatpush2.bf16.msra.mxu0 0
    %1182 = vmatprep.subr.bf16.mxu0 0
    %1183 = vmatpush2.bf16.msra.mxu0 0
    %1184 = vmatprep.subr.bf16.mxu0 0
    %1185 = vmatpush2.bf16.msra.mxu0 0
    %1186 = vmatprep.subr.bf16.mxu0 0
    %1187 = vmatpush2.bf16.msra.mxu0 0
    %1188 = vmatprep.subr.bf16.mxu0 0
    %1189 = vmatpush2.bf16.msra.mxu0 0
    %1190 = vmatprep.mubr.bf16.mxu0 0
    %1191 = vmatmul.mubr.bf16.gmra.mxu0 %v1147
    %v1192 = vpop.f32.mrf.mxu0
    %v1193 = vadd.f32 0.0, %v1192
    %v1194 = vpop.f32.mrf.mxu0
    %v1195 = vpop.f32.mrf.mxu0
    %v1196 = vadd.f32 0.0, %v1195
    %v1197 = vpop.f32.mrf.mxu0
    %1198 = vmatprep.mubr.bf16.mxu0 0
    %1199 = vmatmul.mubr.bf16.gmra.mxu0 %v1150
    %v1200 = vpop.f32.mrf.mxu0
    %v1201 = vadd.f32 0.0, %v1200
    %v1202 = vpop.f32.mrf.mxu0
    %v1203 = vpop.f32.mrf.mxu0
    %v1204 = vadd.f32 0.0, %v1203
    %v1205 = vpop.f32.mrf.mxu0
    %1206 = vmatprep.mubr.bf16.mxu0 0
    %1207 = vmatmul.mubr.bf16.gmra.mxu0 %v1153
    %v1208 = vpop.f32.mrf.mxu0
    %v1209 = vadd.f32 0.0, %v1208
    %v1210 = vpop.f32.mrf.mxu0
    %v1211 = vpop.f32.mrf.mxu0
    %v1212 = vadd.f32 0.0, %v1211
    %v1213 = vpop.f32.mrf.mxu0
    %1214 = vmatprep.mubr.bf16.mxu0 0
    %1215 = vmatmul.mubr.bf16.gmra.mxu0 %v1156
    %v1216 = vpop.f32.mrf.mxu0
    %v1217 = vadd.f32 0.0, %v1216
    %v1218 = vpop.f32.mrf.mxu0
    %v1219 = vpop.f32.mrf.mxu0
    %v1220 = vadd.f32 0.0, %v1219
    %v1221 = vpop.f32.mrf.mxu0
    %1222 = vdwg.mxu0
    %v1231 = vunpack.c.l.b16 %v1052
    %v1232 = vunpack.c.l.b16 %v1053
    %v1233 = vunpack.c.l.b16 %v1054
    %v1234 = vunpack.c.l.b16 %v1055
    %v1235 = vunpack.c.l.b16 %v1056
    %v1236 = vunpack.c.l.b16 %v1057
    %v1237 = vunpack.c.l.b16 %v1058
    %v1238 = vunpack.c.l.b16 %v1059
    %v1239 = vpack.c.b16 %v1232, %v1231
    %v1240 = vpack.c.b16 %v1234, %v1233
    %v1241 = vpack.c.b16 %v1236, %v1235
    %v1242 = vpack.c.b16 %v1238, %v1237
    %v1248 = vsel %vm1145, %v1048, 0
    %v1251 = vsel %vm1145, %v1049, 0
    %v1254 = vsel %vm1145, %v1050, 0
    %v1257 = vsel %vm1145, %v1051, 0
    %1259 = vmatprep.subr.bf16.mxu0 0
    %1260 = vmatpush1.bf16.msra.mxu0 0
    %1261 = vmatprep.subr.bf16.mxu0 0
    %1262 = vmatpush1.bf16.msra.mxu0 0
    %1263 = vmatprep.subr.bf16.mxu0 0
    %1264 = vmatpush1.bf16.msra.mxu0 0
    %1265 = vmatprep.subr.bf16.mxu0 0
    %1266 = vmatpush1.bf16.msra.mxu0 0
    %1267 = vmatprep.subr.bf16.mxu0 0
    %1268 = vmatpush1.bf16.msra.mxu0 %v1242
    %1269 = vmatprep.subr.bf16.mxu0 0
    %1270 = vmatpush1.bf16.msra.mxu0 %v1241
    %1271 = vmatprep.subr.bf16.mxu0 0
    %1272 = vmatpush1.bf16.msra.mxu0 %v1240
    %1273 = vmatprep.subr.bf16.mxu0 0
    %1274 = vmatpush1.bf16.msra.mxu0 %v1239
    %1275 = vmatprep.subr.bf16.mxu0 0
    %1276 = vmatpush2.bf16.msra.mxu0 0
    %1277 = vmatprep.subr.bf16.mxu0 0
    %1278 = vmatpush2.bf16.msra.mxu0 0
    %1279 = vmatprep.subr.bf16.mxu0 0
    %1280 = vmatpush2.bf16.msra.mxu0 0
    %1281 = vmatprep.subr.bf16.mxu0 0
    %1282 = vmatpush2.bf16.msra.mxu0 0
    %1283 = vmatprep.subr.bf16.mxu0 0
    %1284 = vmatpush2.bf16.msra.mxu0 0
    %1285 = vmatprep.subr.bf16.mxu0 0
    %1286 = vmatpush2.bf16.msra.mxu0 0
    %1287 = vmatprep.subr.bf16.mxu0 0
    %1288 = vmatpush2.bf16.msra.mxu0 0
    %1289 = vmatprep.subr.bf16.mxu0 0
    %1290 = vmatpush2.bf16.msra.mxu0 0
    %1291 = vmatprep.mubr.bf16.mxu0 0
    %1292 = vmatmul.mubr.bf16.gmra.mxu0 %v1248
    %v1293 = vpop.f32.mrf.mxu0
    %v1294 = vadd.f32 %v1193, %v1293
    %v1295 = vpop.f32.mrf.mxu0
    %v1296 = vpop.f32.mrf.mxu0
    %v1297 = vadd.f32 %v1196, %v1296
    %v1298 = vpop.f32.mrf.mxu0
    %1299 = vmatprep.mubr.bf16.mxu0 0
    %1300 = vmatmul.mubr.bf16.gmra.mxu0 %v1251
    %v1301 = vpop.f32.mrf.mxu0
    %v1302 = vadd.f32 %v1201, %v1301
    %v1303 = vpop.f32.mrf.mxu0
    %v1304 = vpop.f32.mrf.mxu0
    %v1305 = vadd.f32 %v1204, %v1304
    %v1306 = vpop.f32.mrf.mxu0
    %1307 = vmatprep.mubr.bf16.mxu0 0
    %1308 = vmatmul.mubr.bf16.gmra.mxu0 %v1254
    %v1309 = vpop.f32.mrf.mxu0
    %v1310 = vadd.f32 %v1209, %v1309
    %v1311 = vpop.f32.mrf.mxu0
    %v1312 = vpop.f32.mrf.mxu0
    %v1313 = vadd.f32 %v1212, %v1312
    %v1314 = vpop.f32.mrf.mxu0
    %1315 = vmatprep.mubr.bf16.mxu0 0
    %1316 = vmatmul.mubr.bf16.gmra.mxu0 %v1257
    %v1317 = vpop.f32.mrf.mxu0
    %v1318 = vadd.f32 %v1217, %v1317
    %v1319 = vpop.f32.mrf.mxu0
    %v1320 = vpop.f32.mrf.mxu0
    %v1321 = vadd.f32 %v1220, %v1320
    %v1322 = vpop.f32.mrf.mxu0
    %1323 = vdwg.mxu0
    %v1324 = vrot.slane %v1032, 2
    %v1325 = vrot.slane %v1040, 2
    %v1326 = vsel %vm351, %v1324, %v1325
    %v1327 = vrot.slane %v1033, 2
    %v1328 = vrot.slane %v1041, 2
    %v1329 = vsel %vm351, %v1327, %v1328
    %v1330 = vrot.slane %v1034, 2
    %v1331 = vrot.slane %v1042, 2
    %v1332 = vsel %vm351, %v1330, %v1331
    %v1333 = vrot.slane %v1035, 2
    %v1334 = vrot.slane %v1043, 2
    %v1335 = vsel %vm351, %v1333, %v1334
    %v1336 = vrot.slane %v1036, 2
    %v1337 = vrot.slane %v1044, 2
    %v1338 = vsel %vm351, %v1336, %v1337
    %v1339 = vrot.slane %v1037, 2
    %v1340 = vrot.slane %v1045, 2
    %v1341 = vsel %vm351, %v1339, %v1340
    %v1342 = vrot.slane %v1038, 2
    %v1343 = vrot.slane %v1046, 2
    %v1344 = vsel %vm351, %v1342, %v1343
    %v1345 = vrot.slane %v1039, 2
    %v1346 = vrot.slane %v1047, 2
    %v1347 = vsel %vm351, %v1345, %v1346
    %v1356 = vpack.c.bf16 %v1329, %v1326
    %v1357 = vpack.c.bf16 %v1335, %v1332
    %v1358 = vpack.c.bf16 %v1341, %v1338
    %v1359 = vpack.c.bf16 %v1347, %v1344
    %s1360 = scalar_lea.vmem [#allocation2], 64
    %v1361 = vld [vmem:[%s1360] sm:$0xf]
    %v1362 = vld [vmem:[%s1360 + $0x4] sm:$0xf]
    %v1363 = vld [vmem:[%s1360 + $0x8] sm:$0xf]
    %v1364 = vld [vmem:[%s1360 + $0xc] sm:$0xf]
    %v1365 = vld [vmem:[%s1360 + $0x10] sm:$0xf]
    %v1366 = vld [vmem:[%s1360 + $0x14] sm:$0xf]
    %v1367 = vld [vmem:[%s1360 + $0x18] sm:$0xf]
    %v1368 = vld [vmem:[%s1360 + $0x1c] sm:$0xf]
    %v1377 = vunpack.c.l.b16 %v1361
    %v1378 = vunpack.c.l.b16 %v1362
    %v1379 = vunpack.c.l.b16 %v1363
    %v1380 = vunpack.c.l.b16 %v1364
    %v1381 = vunpack.c.l.b16 %v1365
    %v1382 = vunpack.c.l.b16 %v1366
    %v1383 = vunpack.c.l.b16 %v1367
    %v1384 = vunpack.c.l.b16 %v1368
    %v1385 = vpack.c.b16 %v1378, %v1377
    %v1386 = vpack.c.b16 %v1380, %v1379
    %v1387 = vpack.c.b16 %v1382, %v1381
    %v1388 = vpack.c.b16 %v1384, %v1383
    %v1394 = vsel %vm1145, %v1356, 0
    %v1397 = vsel %vm1145, %v1357, 0
    %v1400 = vsel %vm1145, %v1358, 0
    %v1403 = vsel %vm1145, %v1359, 0
    %1405 = vmatprep.subr.bf16.mxu0 0
    %1406 = vmatpush1.bf16.msra.mxu0 0
    %1407 = vmatprep.subr.bf16.mxu0 0
    %1408 = vmatpush1.bf16.msra.mxu0 0
    %1409 = vmatprep.subr.bf16.mxu0 0
    %1410 = vmatpush1.bf16.msra.mxu0 0
    %1411 = vmatprep.subr.bf16.mxu0 0
    %1412 = vmatpush1.bf16.msra.mxu0 0
    %1413 = vmatprep.subr.bf16.mxu0 0
    %1414 = vmatpush1.bf16.msra.mxu0 %v1388
    %1415 = vmatprep.subr.bf16.mxu0 0
    %1416 = vmatpush1.bf16.msra.mxu0 %v1387
    %1417 = vmatprep.subr.bf16.mxu0 0
    %1418 = vmatpush1.bf16.msra.mxu0 %v1386
    %1419 = vmatprep.subr.bf16.mxu0 0
    %1420 = vmatpush1.bf16.msra.mxu0 %v1385
    %1421 = vmatprep.subr.bf16.mxu0 0
    %1422 = vmatpush2.bf16.msra.mxu0 0
    %1423 = vmatprep.subr.bf16.mxu0 0
    %1424 = vmatpush2.bf16.msra.mxu0 0
    %1425 = vmatprep.subr.bf16.mxu0 0
    %1426 = vmatpush2.bf16.msra.mxu0 0
    %1427 = vmatprep.subr.bf16.mxu0 0
    %1428 = vmatpush2.bf16.msra.mxu0 0
    %1429 = vmatprep.subr.bf16.mxu0 0
    %1430 = vmatpush2.bf16.msra.mxu0 0
    %1431 = vmatprep.subr.bf16.mxu0 0
    %1432 = vmatpush2.bf16.msra.mxu0 0
    %1433 = vmatprep.subr.bf16.mxu0 0
    %1434 = vmatpush2.bf16.msra.mxu0 0
    %1435 = vmatprep.subr.bf16.mxu0 0
    %1436 = vmatpush2.bf16.msra.mxu0 0
    %1437 = vmatprep.mubr.bf16.mxu0 0
    %1438 = vmatmul.mubr.bf16.gmra.mxu0 %v1394
    %v1439 = vpop.f32.mrf.mxu0
    %v1440 = vadd.f32 0.0, %v1439
    %v1441 = vpop.f32.mrf.mxu0
    %v1442 = vpop.f32.mrf.mxu0
    %v1443 = vadd.f32 0.0, %v1442
    %v1444 = vpop.f32.mrf.mxu0
    %1445 = vmatprep.mubr.bf16.mxu0 0
    %1446 = vmatmul.mubr.bf16.gmra.mxu0 %v1397
    %v1447 = vpop.f32.mrf.mxu0
    %v1448 = vadd.f32 0.0, %v1447
    %v1449 = vpop.f32.mrf.mxu0
    %v1450 = vpop.f32.mrf.mxu0
    %v1451 = vadd.f32 0.0, %v1450
    %v1452 = vpop.f32.mrf.mxu0
    %1453 = vmatprep.mubr.bf16.mxu0 0
    %1454 = vmatmul.mubr.bf16.gmra.mxu0 %v1400
    %v1455 = vpop.f32.mrf.mxu0
    %v1456 = vadd.f32 0.0, %v1455
    %v1457 = vpop.f32.mrf.mxu0
    %v1458 = vpop.f32.mrf.mxu0
    %v1459 = vadd.f32 0.0, %v1458
    %v1460 = vpop.f32.mrf.mxu0
    %1461 = vmatprep.mubr.bf16.mxu0 0
    %1462 = vmatmul.mubr.bf16.gmra.mxu0 %v1403
    %v1463 = vpop.f32.mrf.mxu0
    %v1464 = vadd.f32 0.0, %v1463
    %v1465 = vpop.f32.mrf.mxu0
    %v1466 = vpop.f32.mrf.mxu0
    %v1467 = vadd.f32 0.0, %v1466
    %v1468 = vpop.f32.mrf.mxu0
    %1469 = vdwg.mxu0
    %v1470 = vadd.f32 %v1294, %v1440
    %v1471 = vadd.f32 %v1297, %v1443
    %v1472 = vadd.f32 %v1302, %v1448
    %v1473 = vadd.f32 %v1305, %v1451
    %v1474 = vadd.f32 %v1310, %v1456
    %v1475 = vadd.f32 %v1313, %v1459
    %v1476 = vadd.f32 %v1318, %v1464
    %v1477 = vadd.f32 %v1321, %v1467
    %v1478 = vrot.slane %v1032, 3
    %v1479 = vrot.slane %v1040, 3
    %v1480 = vsel %vm478, %v1478, %v1479
    %v1481 = vrot.slane %v1033, 3
    %v1482 = vrot.slane %v1041, 3
    %v1483 = vsel %vm478, %v1481, %v1482
    %v1484 = vrot.slane %v1034, 3
    %v1485 = vrot.slane %v1042, 3
    %v1486 = vsel %vm478, %v1484, %v1485
    %v1487 = vrot.slane %v1035, 3
    %v1488 = vrot.slane %v1043, 3
    %v1489 = vsel %vm478, %v1487, %v1488
    %v1490 = vrot.slane %v1036, 3
    %v1491 = vrot.slane %v1044, 3
    %v1492 = vsel %vm478, %v1490, %v1491
    %v1493 = vrot.slane %v1037, 3
    %v1494 = vrot.slane %v1045, 3
    %v1495 = vsel %vm478, %v1493, %v1494
    %v1496 = vrot.slane %v1038, 3
    %v1497 = vrot.slane %v1046, 3
    %v1498 = vsel %vm478, %v1496, %v1497
    %v1499 = vrot.slane %v1039, 3
    %v1500 = vrot.slane %v1047, 3
    %v1501 = vsel %vm478, %v1499, %v1500
    %v1510 = vpack.c.bf16 %v1483, %v1480
    %v1511 = vpack.c.bf16 %v1489, %v1486
    %v1512 = vpack.c.bf16 %v1495, %v1492
    %v1513 = vpack.c.bf16 %v1501, %v1498
    %s1514 = scalar_lea.vmem [#allocation2], 96
    %v1515 = vld [vmem:[%s1514] sm:$0xf]
    %v1516 = vld [vmem:[%s1514 + $0x4] sm:$0xf]
    %v1517 = vld [vmem:[%s1514 + $0x8] sm:$0xf]
    %v1518 = vld [vmem:[%s1514 + $0xc] sm:$0xf]
    %v1519 = vld [vmem:[%s1514 + $0x10] sm:$0xf]
    %v1520 = vld [vmem:[%s1514 + $0x14] sm:$0xf]
    %v1521 = vld [vmem:[%s1514 + $0x18] sm:$0xf]
    %v1522 = vld [vmem:[%s1514 + $0x1c] sm:$0xf]
    %v1531 = vunpack.c.l.b16 %v1515
    %v1532 = vunpack.c.l.b16 %v1516
    %v1533 = vunpack.c.l.b16 %v1517
    %v1534 = vunpack.c.l.b16 %v1518
    %v1535 = vunpack.c.l.b16 %v1519
    %v1536 = vunpack.c.l.b16 %v1520
    %v1537 = vunpack.c.l.b16 %v1521
    %v1538 = vunpack.c.l.b16 %v1522
    %v1539 = vpack.c.b16 %v1532, %v1531
    %v1540 = vpack.c.b16 %v1534, %v1533
    %v1541 = vpack.c.b16 %v1536, %v1535
    %v1542 = vpack.c.b16 %v1538, %v1537
    %v1548 = vsel %vm1145, %v1510, 0
    %v1551 = vsel %vm1145, %v1511, 0
    %v1554 = vsel %vm1145, %v1512, 0
    %v1557 = vsel %vm1145, %v1513, 0
    %1559 = vmatprep.subr.bf16.mxu0 0
    %1560 = vmatpush1.bf16.msra.mxu0 0
    %1561 = vmatprep.subr.bf16.mxu0 0
    %1562 = vmatpush1.bf16.msra.mxu0 0
    %1563 = vmatprep.subr.bf16.mxu0 0
    %1564 = vmatpush1.bf16.msra.mxu0 0
    %1565 = vmatprep.subr.bf16.mxu0 0
    %1566 = vmatpush1.bf16.msra.mxu0 0
    %1567 = vmatprep.subr.bf16.mxu0 0
    %1568 = vmatpush1.bf16.msra.mxu0 %v1542
    %1569 = vmatprep.subr.bf16.mxu0 0
    %1570 = vmatpush1.bf16.msra.mxu0 %v1541
    %1571 = vmatprep.subr.bf16.mxu0 0
    %1572 = vmatpush1.bf16.msra.mxu0 %v1540
    %1573 = vmatprep.subr.bf16.mxu0 0
    %1574 = vmatpush1.bf16.msra.mxu0 %v1539
    %1575 = vmatprep.subr.bf16.mxu0 0
    %1576 = vmatpush2.bf16.msra.mxu0 0
    %1577 = vmatprep.subr.bf16.mxu0 0
    %1578 = vmatpush2.bf16.msra.mxu0 0
    %1579 = vmatprep.subr.bf16.mxu0 0
    %1580 = vmatpush2.bf16.msra.mxu0 0
    %1581 = vmatprep.subr.bf16.mxu0 0
    %1582 = vmatpush2.bf16.msra.mxu0 0
    %1583 = vmatprep.subr.bf16.mxu0 0
    %1584 = vmatpush2.bf16.msra.mxu0 0
    %1585 = vmatprep.subr.bf16.mxu0 0
    %1586 = vmatpush2.bf16.msra.mxu0 0
    %1587 = vmatprep.subr.bf16.mxu0 0
    %1588 = vmatpush2.bf16.msra.mxu0 0
    %1589 = vmatprep.subr.bf16.mxu0 0
    %1590 = vmatpush2.bf16.msra.mxu0 0
    %1591 = vmatprep.mubr.bf16.mxu0 0
    %1592 = vmatmul.mubr.bf16.gmra.mxu0 %v1548
    %v1593 = vpop.f32.mrf.mxu0
    %v1594 = vadd.f32 0.0, %v1593
    %v1595 = vpop.f32.mrf.mxu0
    %v1596 = vpop.f32.mrf.mxu0
    %v1597 = vadd.f32 0.0, %v1596
    %v1598 = vpop.f32.mrf.mxu0
    %1599 = vmatprep.mubr.bf16.mxu0 0
    %1600 = vmatmul.mubr.bf16.gmra.mxu0 %v1551
    %v1601 = vpop.f32.mrf.mxu0
    %v1602 = vadd.f32 0.0, %v1601
    %v1603 = vpop.f32.mrf.mxu0
    %v1604 = vpop.f32.mrf.mxu0
    %v1605 = vadd.f32 0.0, %v1604
    %v1606 = vpop.f32.mrf.mxu0
    %1607 = vmatprep.mubr.bf16.mxu0 0
    %1608 = vmatmul.mubr.bf16.gmra.mxu0 %v1554
    %v1609 = vpop.f32.mrf.mxu0
    %v1610 = vadd.f32 0.0, %v1609
    %v1611 = vpop.f32.mrf.mxu0
    %v1612 = vpop.f32.mrf.mxu0
    %v1613 = vadd.f32 0.0, %v1612
    %v1614 = vpop.f32.mrf.mxu0
    %1615 = vmatprep.mubr.bf16.mxu0 0
    %1616 = vmatmul.mubr.bf16.gmra.mxu0 %v1557
    %v1617 = vpop.f32.mrf.mxu0
    %v1618 = vadd.f32 0.0, %v1617
    %v1619 = vpop.f32.mrf.mxu0
    %v1620 = vpop.f32.mrf.mxu0
    %v1621 = vadd.f32 0.0, %v1620
    %v1622 = vpop.f32.mrf.mxu0
    %1623 = vdwg.mxu0
    %v1624 = vadd.f32 %v1470, %v1594
    %v1625 = vadd.f32 %v1471, %v1597
    %v1626 = vadd.f32 %v1472, %v1602
    %v1627 = vadd.f32 %v1473, %v1605
    %v1628 = vadd.f32 %v1474, %v1610
    %v1629 = vadd.f32 %v1475, %v1613
    %v1630 = vadd.f32 %v1476, %v1618
    %v1631 = vadd.f32 %v1477, %v1621
    %v1632 = vrot.slane %v1032, 4
    %v1633 = vrot.slane %v1040, 4
    %v1634 = vsel %vm605, %v1632, %v1633
    %v1635 = vrot.slane %v1033, 4
    %v1636 = vrot.slane %v1041, 4
    %v1637 = vsel %vm605, %v1635, %v1636
    %v1638 = vrot.slane %v1034, 4
    %v1639 = vrot.slane %v1042, 4
    %v1640 = vsel %vm605, %v1638, %v1639
    %v1641 = vrot.slane %v1035, 4
    %v1642 = vrot.slane %v1043, 4
    %v1643 = vsel %vm605, %v1641, %v1642
    %v1644 = vrot.slane %v1036, 4
    %v1645 = vrot.slane %v1044, 4
    %v1646 = vsel %vm605, %v1644, %v1645
    %v1647 = vrot.slane %v1037, 4
    %v1648 = vrot.slane %v1045, 4
    %v1649 = vsel %vm605, %v1647, %v1648
    %v1650 = vrot.slane %v1038, 4
    %v1651 = vrot.slane %v1046, 4
    %v1652 = vsel %vm605, %v1650, %v1651
    %v1653 = vrot.slane %v1039, 4
    %v1654 = vrot.slane %v1047, 4
    %v1655 = vsel %vm605, %v1653, %v1654
    %v1664 = vpack.c.bf16 %v1637, %v1634
    %v1665 = vpack.c.bf16 %v1643, %v1640
    %v1666 = vpack.c.bf16 %v1649, %v1646
    %v1667 = vpack.c.bf16 %v1655, %v1652
    %s1668 = scalar_lea.vmem [#allocation2], 128
    %v1669 = vld [vmem:[%s1668] sm:$0xf]
    %v1670 = vld [vmem:[%s1668 + $0x4] sm:$0xf]
    %v1671 = vld [vmem:[%s1668 + $0x8] sm:$0xf]
    %v1672 = vld [vmem:[%s1668 + $0xc] sm:$0xf]
    %v1673 = vld [vmem:[%s1668 + $0x10] sm:$0xf]
    %v1674 = vld [vmem:[%s1668 + $0x14] sm:$0xf]
    %v1675 = vld [vmem:[%s1668 + $0x18] sm:$0xf]
    %v1676 = vld [vmem:[%s1668 + $0x1c] sm:$0xf]
    %v1685 = vunpack.c.l.b16 %v1669
    %v1686 = vunpack.c.l.b16 %v1670
    %v1687 = vunpack.c.l.b16 %v1671
    %v1688 = vunpack.c.l.b16 %v1672
    %v1689 = vunpack.c.l.b16 %v1673
    %v1690 = vunpack.c.l.b16 %v1674
    %v1691 = vunpack.c.l.b16 %v1675
    %v1692 = vunpack.c.l.b16 %v1676
    %v1693 = vpack.c.b16 %v1686, %v1685
    %v1694 = vpack.c.b16 %v1688, %v1687
    %v1695 = vpack.c.b16 %v1690, %v1689
    %v1696 = vpack.c.b16 %v1692, %v1691
    %v1702 = vsel %vm1145, %v1664, 0
    %v1705 = vsel %vm1145, %v1665, 0
    %v1708 = vsel %vm1145, %v1666, 0
    %v1711 = vsel %vm1145, %v1667, 0
    %1713 = vmatprep.subr.bf16.mxu0 0
    %1714 = vmatpush1.bf16.msra.mxu0 0
    %1715 = vmatprep.subr.bf16.mxu0 0
    %1716 = vmatpush1.bf16.msra.mxu0 0
    %1717 = vmatprep.subr.bf16.mxu0 0
    %1718 = vmatpush1.bf16.msra.mxu0 0
    %1719 = vmatprep.subr.bf16.mxu0 0
    %1720 = vmatpush1.bf16.msra.mxu0 0
    %1721 = vmatprep.subr.bf16.mxu0 0
    %1722 = vmatpush1.bf16.msra.mxu0 %v1696
    %1723 = vmatprep.subr.bf16.mxu0 0
    %1724 = vmatpush1.bf16.msra.mxu0 %v1695
    %1725 = vmatprep.subr.bf16.mxu0 0
    %1726 = vmatpush1.bf16.msra.mxu0 %v1694
    %1727 = vmatprep.subr.bf16.mxu0 0
    %1728 = vmatpush1.bf16.msra.mxu0 %v1693
    %1729 = vmatprep.subr.bf16.mxu0 0
    %1730 = vmatpush2.bf16.msra.mxu0 0
    %1731 = vmatprep.subr.bf16.mxu0 0
    %1732 = vmatpush2.bf16.msra.mxu0 0
    %1733 = vmatprep.subr.bf16.mxu0 0
    %1734 = vmatpush2.bf16.msra.mxu0 0
    %1735 = vmatprep.subr.bf16.mxu0 0
    %1736 = vmatpush2.bf16.msra.mxu0 0
    %1737 = vmatprep.subr.bf16.mxu0 0
    %1738 = vmatpush2.bf16.msra.mxu0 0
    %1739 = vmatprep.subr.bf16.mxu0 0
    %1740 = vmatpush2.bf16.msra.mxu0 0
    %1741 = vmatprep.subr.bf16.mxu0 0
    %1742 = vmatpush2.bf16.msra.mxu0 0
    %1743 = vmatprep.subr.bf16.mxu0 0
    %1744 = vmatpush2.bf16.msra.mxu0 0
    %1745 = vmatprep.mubr.bf16.mxu0 0
    %1746 = vmatmul.mubr.bf16.gmra.mxu0 %v1702
    %v1747 = vpop.f32.mrf.mxu0
    %v1748 = vadd.f32 0.0, %v1747
    %v1749 = vpop.f32.mrf.mxu0
    %v1750 = vpop.f32.mrf.mxu0
    %v1751 = vadd.f32 0.0, %v1750
    %v1752 = vpop.f32.mrf.mxu0
    %1753 = vmatprep.mubr.bf16.mxu0 0
    %1754 = vmatmul.mubr.bf16.gmra.mxu0 %v1705
    %v1755 = vpop.f32.mrf.mxu0
    %v1756 = vadd.f32 0.0, %v1755
    %v1757 = vpop.f32.mrf.mxu0
    %v1758 = vpop.f32.mrf.mxu0
    %v1759 = vadd.f32 0.0, %v1758
    %v1760 = vpop.f32.mrf.mxu0
    %1761 = vmatprep.mubr.bf16.mxu0 0
    %1762 = vmatmul.mubr.bf16.gmra.mxu0 %v1708
    %v1763 = vpop.f32.mrf.mxu0
    %v1764 = vadd.f32 0.0, %v1763
    %v1765 = vpop.f32.mrf.mxu0
    %v1766 = vpop.f32.mrf.mxu0
    %v1767 = vadd.f32 0.0, %v1766
    %v1768 = vpop.f32.mrf.mxu0
    %1769 = vmatprep.mubr.bf16.mxu0 0
    %1770 = vmatmul.mubr.bf16.gmra.mxu0 %v1711
    %v1771 = vpop.f32.mrf.mxu0
    %v1772 = vadd.f32 0.0, %v1771
    %v1773 = vpop.f32.mrf.mxu0
    %v1774 = vpop.f32.mrf.mxu0
    %v1775 = vadd.f32 0.0, %v1774
    %v1776 = vpop.f32.mrf.mxu0
    %1777 = vdwg.mxu0
    %v1778 = vadd.f32 %v1624, %v1748
    %v1779 = vadd.f32 %v1625, %v1751
    %v1780 = vadd.f32 %v1626, %v1756
    %v1781 = vadd.f32 %v1627, %v1759
    %v1782 = vadd.f32 %v1628, %v1764
    %v1783 = vadd.f32 %v1629, %v1767
    %v1784 = vadd.f32 %v1630, %v1772
    %v1785 = vadd.f32 %v1631, %v1775
    %v1786 = vrot.slane %v1032, 5
    %v1787 = vrot.slane %v1040, 5
    %v1788 = vsel %vm113, %v1786, %v1787
    %v1789 = vrot.slane %v1033, 5
    %v1790 = vrot.slane %v1041, 5
    %v1791 = vsel %vm113, %v1789, %v1790
    %v1792 = vrot.slane %v1034, 5
    %v1793 = vrot.slane %v1042, 5
    %v1794 = vsel %vm113, %v1792, %v1793
    %v1795 = vrot.slane %v1035, 5
    %v1796 = vrot.slane %v1043, 5
    %v1797 = vsel %vm113, %v1795, %v1796
    %v1798 = vrot.slane %v1036, 5
    %v1799 = vrot.slane %v1044, 5
    %v1800 = vsel %vm113, %v1798, %v1799
    %v1801 = vrot.slane %v1037, 5
    %v1802 = vrot.slane %v1045, 5
    %v1803 = vsel %vm113, %v1801, %v1802
    %v1804 = vrot.slane %v1038, 5
    %v1805 = vrot.slane %v1046, 5
    %v1806 = vsel %vm113, %v1804, %v1805
    %v1807 = vrot.slane %v1039, 5
    %v1808 = vrot.slane %v1047, 5
    %v1809 = vsel %vm113, %v1807, %v1808
    %v1818 = vpack.c.bf16 %v1791, %v1788
    %v1819 = vpack.c.bf16 %v1797, %v1794
    %v1820 = vpack.c.bf16 %v1803, %v1800
    %v1821 = vpack.c.bf16 %v1809, %v1806
    %s1822 = scalar_lea.vmem [#allocation2], 160
    %v1823 = vld [vmem:[%s1822] sm:$0xf]
    %v1824 = vld [vmem:[%s1822 + $0x4] sm:$0xf]
    %v1825 = vld [vmem:[%s1822 + $0x8] sm:$0xf]
    %v1826 = vld [vmem:[%s1822 + $0xc] sm:$0xf]
    %v1827 = vld [vmem:[%s1822 + $0x10] sm:$0xf]
    %v1828 = vld [vmem:[%s1822 + $0x14] sm:$0xf]
    %v1829 = vld [vmem:[%s1822 + $0x18] sm:$0xf]
    %v1830 = vld [vmem:[%s1822 + $0x1c] sm:$0xf]
    %v1839 = vunpack.c.l.b16 %v1823
    %v1840 = vunpack.c.l.b16 %v1824
    %v1841 = vunpack.c.l.b16 %v1825
    %v1842 = vunpack.c.l.b16 %v1826
    %v1843 = vunpack.c.l.b16 %v1827
    %v1844 = vunpack.c.l.b16 %v1828
    %v1845 = vunpack.c.l.b16 %v1829
    %v1846 = vunpack.c.l.b16 %v1830
    %v1847 = vpack.c.b16 %v1840, %v1839
    %v1848 = vpack.c.b16 %v1842, %v1841
    %v1849 = vpack.c.b16 %v1844, %v1843
    %v1850 = vpack.c.b16 %v1846, %v1845
    %v1856 = vsel %vm1145, %v1818, 0
    %v1859 = vsel %vm1145, %v1819, 0
    %v1862 = vsel %vm1145, %v1820, 0
    %v1865 = vsel %vm1145, %v1821, 0
    %1867 = vmatprep.subr.bf16.mxu0 0
    %1868 = vmatpush1.bf16.msra.mxu0 0
    %1869 = vmatprep.subr.bf16.mxu0 0
    %1870 = vmatpush1.bf16.msra.mxu0 0
    %1871 = vmatprep.subr.bf16.mxu0 0
    %1872 = vmatpush1.bf16.msra.mxu0 0
    %1873 = vmatprep.subr.bf16.mxu0 0
    %1874 = vmatpush1.bf16.msra.mxu0 0
    %1875 = vmatprep.subr.bf16.mxu0 0
    %1876 = vmatpush1.bf16.msra.mxu0 %v1850
    %1877 = vmatprep.subr.bf16.mxu0 0
    %1878 = vmatpush1.bf16.msra.mxu0 %v1849
    %1879 = vmatprep.subr.bf16.mxu0 0
    %1880 = vmatpush1.bf16.msra.mxu0 %v1848
    %1881 = vmatprep.subr.bf16.mxu0 0
    %1882 = vmatpush1.bf16.msra.mxu0 %v1847
    %1883 = vmatprep.subr.bf16.mxu0 0
    %1884 = vmatpush2.bf16.msra.mxu0 0
    %1885 = vmatprep.subr.bf16.mxu0 0
    %1886 = vmatpush2.bf16.msra.mxu0 0
    %1887 = vmatprep.subr.bf16.mxu0 0
    %1888 = vmatpush2.bf16.msra.mxu0 0
    %1889 = vmatprep.subr.bf16.mxu0 0
    %1890 = vmatpush2.bf16.msra.mxu0 0
    %1891 = vmatprep.subr.bf16.mxu0 0
    %1892 = vmatpush2.bf16.msra.mxu0 0
    %1893 = vmatprep.subr.bf16.mxu0 0
    %1894 = vmatpush2.bf16.msra.mxu0 0
    %1895 = vmatprep.subr.bf16.mxu0 0
    %1896 = vmatpush2.bf16.msra.mxu0 0
    %1897 = vmatprep.subr.bf16.mxu0 0
    %1898 = vmatpush2.bf16.msra.mxu0 0
    %1899 = vmatprep.mubr.bf16.mxu0 0
    %1900 = vmatmul.mubr.bf16.gmra.mxu0 %v1856
    %v1901 = vpop.f32.mrf.mxu0
    %v1902 = vadd.f32 0.0, %v1901
    %v1903 = vpop.f32.mrf.mxu0
    %v1904 = vpop.f32.mrf.mxu0
    %v1905 = vadd.f32 0.0, %v1904
    %v1906 = vpop.f32.mrf.mxu0
    %1907 = vmatprep.mubr.bf16.mxu0 0
    %1908 = vmatmul.mubr.bf16.gmra.mxu0 %v1859
    %v1909 = vpop.f32.mrf.mxu0
    %v1910 = vadd.f32 0.0, %v1909
    %v1911 = vpop.f32.mrf.mxu0
    %v1912 = vpop.f32.mrf.mxu0
    %v1913 = vadd.f32 0.0, %v1912
    %v1914 = vpop.f32.mrf.mxu0
    %1915 = vmatprep.mubr.bf16.mxu0 0
    %1916 = vmatmul.mubr.bf16.gmra.mxu0 %v1862
    %v1917 = vpop.f32.mrf.mxu0
    %v1918 = vadd.f32 0.0, %v1917
    %v1919 = vpop.f32.mrf.mxu0
    %v1920 = vpop.f32.mrf.mxu0
    %v1921 = vadd.f32 0.0, %v1920
    %v1922 = vpop.f32.mrf.mxu0
    %1923 = vmatprep.mubr.bf16.mxu0 0
    %1924 = vmatmul.mubr.bf16.gmra.mxu0 %v1865
    %v1925 = vpop.f32.mrf.mxu0
    %v1926 = vadd.f32 0.0, %v1925
    %v1927 = vpop.f32.mrf.mxu0
    %v1928 = vpop.f32.mrf.mxu0
    %v1929 = vadd.f32 0.0, %v1928
    %v1930 = vpop.f32.mrf.mxu0
    %1931 = vdwg.mxu0
    %v1932 = vadd.f32 %v1778, %v1902
    %v1933 = vadd.f32 %v1779, %v1905
    %v1934 = vadd.f32 %v1780, %v1910
    %v1935 = vadd.f32 %v1781, %v1913
    %v1936 = vadd.f32 %v1782, %v1918
    %v1937 = vadd.f32 %v1783, %v1921
    %v1938 = vadd.f32 %v1784, %v1926
    %v1939 = vadd.f32 %v1785, %v1929
    %v1940 = vrot.slane %v1032, 6
    %v1941 = vrot.slane %v1040, 6
    %v1942 = vsel %vm858, %v1940, %v1941
    %v1943 = vrot.slane %v1033, 6
    %v1944 = vrot.slane %v1041, 6
    %v1945 = vsel %vm858, %v1943, %v1944
    %v1946 = vrot.slane %v1034, 6
    %v1947 = vrot.slane %v1042, 6
    %v1948 = vsel %vm858, %v1946, %v1947
    %v1949 = vrot.slane %v1035, 6
    %v1950 = vrot.slane %v1043, 6
    %v1951 = vsel %vm858, %v1949, %v1950
    %v1952 = vrot.slane %v1036, 6
    %v1953 = vrot.slane %v1044, 6
    %v1954 = vsel %vm858, %v1952, %v1953
    %v1955 = vrot.slane %v1037, 6
    %v1956 = vrot.slane %v1045, 6
    %v1957 = vsel %vm858, %v1955, %v1956
    %v1958 = vrot.slane %v1038, 6
    %v1959 = vrot.slane %v1046, 6
    %v1960 = vsel %vm858, %v1958, %v1959
    %v1961 = vrot.slane %v1039, 6
    %v1962 = vrot.slane %v1047, 6
    %v1963 = vsel %vm858, %v1961, %v1962
    %v1972 = vpack.c.bf16 %v1945, %v1942
    %v1973 = vpack.c.bf16 %v1951, %v1948
    %v1974 = vpack.c.bf16 %v1957, %v1954
    %v1975 = vpack.c.bf16 %v1963, %v1960
    %s1976 = scalar_lea.vmem [#allocation2], 192
    %v1977 = vld [vmem:[%s1976] sm:$0xf]
    %v1978 = vld [vmem:[%s1976 + $0x4] sm:$0xf]
    %v1979 = vld [vmem:[%s1976 + $0x8] sm:$0xf]
    %v1980 = vld [vmem:[%s1976 + $0xc] sm:$0xf]
    %v1981 = vld [vmem:[%s1976 + $0x10] sm:$0xf]
    %v1982 = vld [vmem:[%s1976 + $0x14] sm:$0xf]
    %v1983 = vld [vmem:[%s1976 + $0x18] sm:$0xf]
    %v1984 = vld [vmem:[%s1976 + $0x1c] sm:$0xf]
    %v1993 = vunpack.c.l.b16 %v1977
    %v1994 = vunpack.c.l.b16 %v1978
    %v1995 = vunpack.c.l.b16 %v1979
    %v1996 = vunpack.c.l.b16 %v1980
    %v1997 = vunpack.c.l.b16 %v1981
    %v1998 = vunpack.c.l.b16 %v1982
    %v1999 = vunpack.c.l.b16 %v1983
    %v2000 = vunpack.c.l.b16 %v1984
    %v2001 = vpack.c.b16 %v1994, %v1993
    %v2002 = vpack.c.b16 %v1996, %v1995
    %v2003 = vpack.c.b16 %v1998, %v1997
    %v2004 = vpack.c.b16 %v2000, %v1999
    %v2010 = vsel %vm1145, %v1972, 0
    %v2013 = vsel %vm1145, %v1973, 0
    %v2016 = vsel %vm1145, %v1974, 0
    %v2019 = vsel %vm1145, %v1975, 0
    %2021 = vmatprep.subr.bf16.mxu0 0
    %2022 = vmatpush1.bf16.msra.mxu0 0
    %2023 = vmatprep.subr.bf16.mxu0 0
    %2024 = vmatpush1.bf16.msra.mxu0 0
    %2025 = vmatprep.subr.bf16.mxu0 0
    %2026 = vmatpush1.bf16.msra.mxu0 0
    %2027 = vmatprep.subr.bf16.mxu0 0
    %2028 = vmatpush1.bf16.msra.mxu0 0
    %2029 = vmatprep.subr.bf16.mxu0 0
    %2030 = vmatpush1.bf16.msra.mxu0 %v2004
    %2031 = vmatprep.subr.bf16.mxu0 0
    %2032 = vmatpush1.bf16.msra.mxu0 %v2003
    %2033 = vmatprep.subr.bf16.mxu0 0
    %2034 = vmatpush1.bf16.msra.mxu0 %v2002
    %2035 = vmatprep.subr.bf16.mxu0 0
    %2036 = vmatpush1.bf16.msra.mxu0 %v2001
    %2037 = vmatprep.subr.bf16.mxu0 0
    %2038 = vmatpush2.bf16.msra.mxu0 0
    %2039 = vmatprep.subr.bf16.mxu0 0
    %2040 = vmatpush2.bf16.msra.mxu0 0
    %2041 = vmatprep.subr.bf16.mxu0 0
    %2042 = vmatpush2.bf16.msra.mxu0 0
    %2043 = vmatprep.subr.bf16.mxu0 0
    %2044 = vmatpush2.bf16.msra.mxu0 0
    %2045 = vmatprep.subr.bf16.mxu0 0
    %2046 = vmatpush2.bf16.msra.mxu0 0
    %2047 = vmatprep.subr.bf16.mxu0 0
    %2048 = vmatpush2.bf16.msra.mxu0 0
    %2049 = vmatprep.subr.bf16.mxu0 0
    %2050 = vmatpush2.bf16.msra.mxu0 0
    %2051 = vmatprep.subr.bf16.mxu0 0
    %2052 = vmatpush2.bf16.msra.mxu0 0
    %2053 = vmatprep.mubr.bf16.mxu0 0
    %2054 = vmatmul.mubr.bf16.gmra.mxu0 %v2010
    %v2055 = vpop.f32.mrf.mxu0
    %v2056 = vadd.f32 0.0, %v2055
    %v2057 = vpop.f32.mrf.mxu0
    %v2058 = vpop.f32.mrf.mxu0
    %v2059 = vadd.f32 0.0, %v2058
    %v2060 = vpop.f32.mrf.mxu0
    %2061 = vmatprep.mubr.bf16.mxu0 0
    %2062 = vmatmul.mubr.bf16.gmra.mxu0 %v2013
    %v2063 = vpop.f32.mrf.mxu0
    %v2064 = vadd.f32 0.0, %v2063
    %v2065 = vpop.f32.mrf.mxu0
    %v2066 = vpop.f32.mrf.mxu0
    %v2067 = vadd.f32 0.0, %v2066
    %v2068 = vpop.f32.mrf.mxu0
    %2069 = vmatprep.mubr.bf16.mxu0 0
    %2070 = vmatmul.mubr.bf16.gmra.mxu0 %v2016
    %v2071 = vpop.f32.mrf.mxu0
    %v2072 = vadd.f32 0.0, %v2071
    %v2073 = vpop.f32.mrf.mxu0
    %v2074 = vpop.f32.mrf.mxu0
    %v2075 = vadd.f32 0.0, %v2074
    %v2076 = vpop.f32.mrf.mxu0
    %2077 = vmatprep.mubr.bf16.mxu0 0
    %2078 = vmatmul.mubr.bf16.gmra.mxu0 %v2019
    %v2079 = vpop.f32.mrf.mxu0
    %v2080 = vadd.f32 0.0, %v2079
    %v2081 = vpop.f32.mrf.mxu0
    %v2082 = vpop.f32.mrf.mxu0
    %v2083 = vadd.f32 0.0, %v2082
    %v2084 = vpop.f32.mrf.mxu0
    %2085 = vdwg.mxu0
    %v2086 = vadd.f32 %v1932, %v2056
    %v2087 = vadd.f32 %v1933, %v2059
    %v2088 = vadd.f32 %v1934, %v2064
    %v2089 = vadd.f32 %v1935, %v2067
    %v2090 = vadd.f32 %v1936, %v2072
    %v2091 = vadd.f32 %v1937, %v2075
    %v2092 = vadd.f32 %v1938, %v2080
    %v2093 = vadd.f32 %v1939, %v2083
    %v2094 = vld [vmem:[%s4] sm:$0x1]
    %v2096 = vlaneseq
    %v2097 = vshrl.u32 %v2096, 7
    %v2098 = vsub.s32 0, %v2097
    %v2099 = vrot.slane %v2094, %v2098
    %v2101 = vadd.f32 %v2086, %v2099
    %v2102 = vadd.f32 %v2087, %v2099
    %v2103 = vadd.f32 %v2088, %v2099
    %v2104 = vadd.f32 %v2089, %v2099
    %v2105 = vadd.f32 %v2090, %v2099
    %v2106 = vadd.f32 %v2091, %v2099
    %v2107 = vadd.f32 %v2092, %v2099
    %v2108 = vadd.f32 %v2093, %v2099
    %v2109 = vmax.f32 %v2101, 0.0
    %v2110 = vmax.f32 %v2102, 0.0
    %v2111 = vmax.f32 %v2103, 0.0
    %v2112 = vmax.f32 %v2104, 0.0
    %v2113 = vmax.f32 %v2105, 0.0
    %v2114 = vmax.f32 %v2106, 0.0
    %v2115 = vmax.f32 %v2107, 0.0
    %v2116 = vmax.f32 %v2108, 0.0
    %v2125 = vrot.slane %v2109, 1
    %v2126 = vrot.slane %v2110, 1
    %v2127 = vrot.slane %v2111, 1
    %v2128 = vrot.slane %v2112, 1
    %v2129 = vrot.slane %v2113, 1
    %v2130 = vrot.slane %v2114, 1
    %v2131 = vrot.slane %v2115, 1
    %v2132 = vrot.slane %v2116, 1
    %v2141 = vadd.f32 %v2109, %v2125
    %v2142 = vadd.f32 %v2110, %v2126
    %v2143 = vadd.f32 %v2111, %v2127
    %v2144 = vadd.f32 %v2112, %v2128
    %v2145 = vadd.f32 %v2113, %v2129
    %v2146 = vadd.f32 %v2114, %v2130
    %v2147 = vadd.f32 %v2115, %v2131
    %v2148 = vadd.f32 %v2116, %v2132
    %v2149 = vrot.slane %v2109, 2
    %v2150 = vrot.slane %v2110, 2
    %v2151 = vrot.slane %v2111, 2
    %v2152 = vrot.slane %v2112, 2
    %v2153 = vrot.slane %v2113, 2
    %v2154 = vrot.slane %v2114, 2
    %v2155 = vrot.slane %v2115, 2
    %v2156 = vrot.slane %v2116, 2
    %v2165 = vadd.f32 %v2141, %v2149
    %v2166 = vadd.f32 %v2142, %v2150
    %v2167 = vadd.f32 %v2143, %v2151
    %v2168 = vadd.f32 %v2144, %v2152
    %v2169 = vadd.f32 %v2145, %v2153
    %v2170 = vadd.f32 %v2146, %v2154
    %v2171 = vadd.f32 %v2147, %v2155
    %v2172 = vadd.f32 %v2148, %v2156
    %v2173 = vrot.slane %v2109, 3
    %v2174 = vrot.slane %v2110, 3
    %v2175 = vrot.slane %v2111, 3
    %v2176 = vrot.slane %v2112, 3
    %v2177 = vrot.slane %v2113, 3
    %v2178 = vrot.slane %v2114, 3
    %v2179 = vrot.slane %v2115, 3
    %v2180 = vrot.slane %v2116, 3
    %v2189 = vadd.f32 %v2165, %v2173
    %v2190 = vadd.f32 %v2166, %v2174
    %v2191 = vadd.f32 %v2167, %v2175
    %v2192 = vadd.f32 %v2168, %v2176
    %v2193 = vadd.f32 %v2169, %v2177
    %v2194 = vadd.f32 %v2170, %v2178
    %v2195 = vadd.f32 %v2171, %v2179
    %v2196 = vadd.f32 %v2172, %v2180
    %v2197 = vrot.slane %v2109, 4
    %v2198 = vrot.slane %v2110, 4
    %v2199 = vrot.slane %v2111, 4
    %v2200 = vrot.slane %v2112, 4
    %v2201 = vrot.slane %v2113, 4
    %v2202 = vrot.slane %v2114, 4
    %v2203 = vrot.slane %v2115, 4
    %v2204 = vrot.slane %v2116, 4
    %v2213 = vadd.f32 %v2189, %v2197
    %v2214 = vadd.f32 %v2190, %v2198
    %v2215 = vadd.f32 %v2191, %v2199
    %v2216 = vadd.f32 %v2192, %v2200
    %v2217 = vadd.f32 %v2193, %v2201
    %v2218 = vadd.f32 %v2194, %v2202
    %v2219 = vadd.f32 %v2195, %v2203
    %v2220 = vadd.f32 %v2196, %v2204
    %v2221 = vrot.slane %v2109, 5
    %v2222 = vrot.slane %v2110, 5
    %v2223 = vrot.slane %v2111, 5
    %v2224 = vrot.slane %v2112, 5
    %v2225 = vrot.slane %v2113, 5
    %v2226 = vrot.slane %v2114, 5
    %v2227 = vrot.slane %v2115, 5
    %v2228 = vrot.slane %v2116, 5
    %v2237 = vadd.f32 %v2213, %v2221
    %v2238 = vadd.f32 %v2214, %v2222
    %v2239 = vadd.f32 %v2215, %v2223
    %v2240 = vadd.f32 %v2216, %v2224
    %v2241 = vadd.f32 %v2217, %v2225
    %v2242 = vadd.f32 %v2218, %v2226
    %v2243 = vadd.f32 %v2219, %v2227
    %v2244 = vadd.f32 %v2220, %v2228
    %v2245 = vrot.slane %v2109, 6
    %v2246 = vrot.slane %v2110, 6
    %v2247 = vrot.slane %v2111, 6
    %v2248 = vrot.slane %v2112, 6
    %v2249 = vrot.slane %v2113, 6
    %v2250 = vrot.slane %v2114, 6
    %v2251 = vrot.slane %v2115, 6
    %v2252 = vrot.slane %v2116, 6
    %v2261 = vadd.f32 %v2237, %v2245
    %v2262 = vadd.f32 %v2238, %v2246
    %v2263 = vadd.f32 %v2239, %v2247
    %v2264 = vadd.f32 %v2240, %v2248
    %v2265 = vadd.f32 %v2241, %v2249
    %v2266 = vadd.f32 %v2242, %v2250
    %v2267 = vadd.f32 %v2243, %v2251
    %v2268 = vadd.f32 %v2244, %v2252
    %v2269 = vrot.slane %v2109, 7
    %v2270 = vrot.slane %v2110, 7
    %v2271 = vrot.slane %v2111, 7
    %v2272 = vrot.slane %v2112, 7
    %v2273 = vrot.slane %v2113, 7
    %v2274 = vrot.slane %v2114, 7
    %v2275 = vrot.slane %v2115, 7
    %v2276 = vrot.slane %v2116, 7
    %v2285 = vadd.f32 %v2261, %v2269
    %v2286 = vadd.f32 %v2262, %v2270
    %v2287 = vadd.f32 %v2263, %v2271
    %v2288 = vadd.f32 %v2264, %v2272
    %v2289 = vadd.f32 %v2265, %v2273
    %v2290 = vadd.f32 %v2266, %v2274
    %v2291 = vadd.f32 %v2267, %v2275
    %v2292 = vadd.f32 %v2268, %v2276
    %v2293 = vmul.f32 %v2285, 0.125
    %v2294 = vmul.f32 %v2286, 0.125
    %v2295 = vmul.f32 %v2287, 0.125
    %v2296 = vmul.f32 %v2288, 0.125
    %v2297 = vmul.f32 %v2289, 0.125
    %v2298 = vmul.f32 %v2290, 0.125
    %v2299 = vmul.f32 %v2291, 0.125
    %v2300 = vmul.f32 %v2292, 0.125
    %v2301 = vpack.c.bf16 %v2293, %v2293
    %v2302 = vpack.c.bf16 %v2294, %v2294
    %v2303 = vpack.c.bf16 %v2295, %v2295
    %v2304 = vpack.c.bf16 %v2296, %v2296
    %v2305 = vpack.c.bf16 %v2297, %v2297
    %v2306 = vpack.c.bf16 %v2298, %v2298
    %v2307 = vpack.c.bf16 %v2299, %v2299
    %v2308 = vpack.c.bf16 %v2300, %v2300
    %v2309 = vld [vmem:[%s5] sm:$0xff]
    %v2310 = vld [vmem:[%s5 + $0x8] sm:$0xff]
    %v2311 = vld [vmem:[%s5 + $0x10] sm:$0xff]
    %v2312 = vld [vmem:[%s5 + $0x18] sm:$0xff]
    %v2313 = vld [vmem:[%s5 + $0x20] sm:$0xff]
    %v2314 = vld [vmem:[%s5 + $0x28] sm:$0xff]
    %v2315 = vld [vmem:[%s5 + $0x30] sm:$0xff]
    %v2316 = vld [vmem:[%s5 + $0x38] sm:$0xff]
    %v2317 = vld [vmem:[%s5 + $0x40] sm:$0xff]
    %v2318 = vld [vmem:[%s5 + $0x48] sm:$0xff]
    %v2319 = vld [vmem:[%s5 + $0x50] sm:$0xff]
    %v2320 = vld [vmem:[%s5 + $0x58] sm:$0xff]
    %v2321 = vld [vmem:[%s5 + $0x60] sm:$0xff]
    %v2322 = vld [vmem:[%s5 + $0x68] sm:$0xff]
    %v2323 = vld [vmem:[%s5 + $0x70] sm:$0xff]
    %v2324 = vld [vmem:[%s5 + $0x78] sm:$0xff]
    %v2325 = vld [vmem:[%s6] sm:$0xf]
    %v2327 = vlaneseq
    %v2328 = vshrl.u32 %v2327, 7
    %v2329 = vsub.s32 0, %v2328
    %v2330 = vrot.slane %v2325, %v2329
    %v2331 = vlaneseq
    %v2332 = vshrl.u32 %v2331, 7
    %v2333 = vsub.s32 1, %v2332
    %v2334 = vrot.slane %v2325, %v2333
    %v2335 = vlaneseq
    %v2336 = vshrl.u32 %v2335, 7
    %v2337 = vsub.s32 2, %v2336
    %v2338 = vrot.slane %v2325, %v2337
    %v2339 = vlaneseq
    %v2340 = vshrl.u32 %v2339, 7
    %v2341 = vsub.s32 3, %v2340
    %v2342 = vrot.slane %v2325, %v2341
    %v2355 = vunpack.c.l.b16 %v2301
    %v2356 = vunpack.c.l.b16 %v2302
    %v2357 = vunpack.c.l.b16 %v2303
    %v2358 = vunpack.c.l.b16 %v2304
    %v2359 = vunpack.c.l.b16 %v2305
    %v2360 = vunpack.c.l.b16 %v2306
    %v2361 = vunpack.c.l.b16 %v2307
    %v2362 = vunpack.c.l.b16 %v2308
    %v2363 = vrot.slane %v2356, 7
    %vm2364 = vcmask 1041409
    %v2365 = vsel %vm2364, %v2363, %v2355
    %v2366 = vrot.slane %v2357, 6
    %vm2367 = vcmask 1042434
    %v2368 = vsel %vm2367, %v2366, %v2365
    %v2369 = vrot.slane %v2358, 5
    %vm2370 = vcmask 1043459
    %v2371 = vsel %vm2370, %v2369, %v2368
    %v2372 = vrot.slane %v2359, 4
    %vm2373 = vcmask 1044484
    %v2374 = vsel %vm2373, %v2372, %v2371
    %v2375 = vrot.slane %v2360, 3
    %vm2376 = vcmask 1045509
    %v2377 = vsel %vm2376, %v2375, %v2374
    %v2378 = vrot.slane %v2361, 2
    %vm2379 = vcmask 1046534
    %v2380 = vsel %vm2379, %v2378, %v2377
    %v2381 = vrot.slane %v2362, 1
    %vm2382 = vcmask 1047559
    %v2383 = vsel %vm2382, %v2381, %v2380
    %v2384 = vpack.c.b16 %v2383, %v2383
    %v2401 = vunpack.c.l.b16 %v2309
    %v2402 = vunpack.c.h.b16 %v2309
    %v2403 = vunpack.c.l.b16 %v2310
    %v2404 = vunpack.c.h.b16 %v2310
    %v2405 = vunpack.c.l.b16 %v2311
    %v2406 = vunpack.c.h.b16 %v2311
    %v2407 = vunpack.c.l.b16 %v2312
    %v2408 = vunpack.c.h.b16 %v2312
    %v2409 = vunpack.c.l.b16 %v2313
    %v2410 = vunpack.c.h.b16 %v2313
    %v2411 = vunpack.c.l.b16 %v2314
    %v2412 = vunpack.c.h.b16 %v2314
    %v2413 = vunpack.c.l.b16 %v2315
    %v2414 = vunpack.c.h.b16 %v2315
    %v2415 = vunpack.c.l.b16 %v2316
    %v2416 = vunpack.c.h.b16 %v2316
    %v2417 = vunpack.c.l.b16 %v2317
    %v2418 = vunpack.c.h.b16 %v2317
    %v2419 = vunpack.c.l.b16 %v2318
    %v2420 = vunpack.c.h.b16 %v2318
    %v2421 = vunpack.c.l.b16 %v2319
    %v2422 = vunpack.c.h.b16 %v2319
    %v2423 = vunpack.c.l.b16 %v2320
    %v2424 = vunpack.c.h.b16 %v2320
    %v2425 = vunpack.c.l.b16 %v2321
    %v2426 = vunpack.c.h.b16 %v2321
    %v2427 = vunpack.c.l.b16 %v2322
    %v2428 = vunpack.c.h.b16 %v2322
    %v2429 = vunpack.c.l.b16 %v2323
    %v2430 = vunpack.c.h.b16 %v2323
    %v2431 = vunpack.c.l.b16 %v2324
    %v2432 = vunpack.c.h.b16 %v2324
    %v2433 = vpack.c.b16 %v2405, %v2401
    %v2434 = vpack.c.b16 %v2406, %v2402
    %v2435 = vpack.c.b16 %v2407, %v2403
    %v2436 = vpack.c.b16 %v2408, %v2404
    %v2437 = vpack.c.b16 %v2413, %v2409
    %v2438 = vpack.c.b16 %v2414, %v2410
    %v2439 = vpack.c.b16 %v2415, %v2411
    %v2440 = vpack.c.b16 %v2416, %v2412
    %v2441 = vpack.c.b16 %v2421, %v2417
    %v2442 = vpack.c.b16 %v2422, %v2418
    %v2443 = vpack.c.b16 %v2423, %v2419
    %v2444 = vpack.c.b16 %v2424, %v2420
    %v2445 = vpack.c.b16 %v2429, %v2425
    %v2446 = vpack.c.b16 %v2430, %v2426
    %v2447 = vpack.c.b16 %v2431, %v2427
    %v2448 = vpack.c.b16 %v2432, %v2428
    %v2466 = vsel %vm1145, %v2384, 0
    %2468 = vmatprep.subr.bf16.mxu0 0
    %2469 = vmatpush1.bf16.msra.mxu0 0
    %2470 = vmatprep.subr.bf16.mxu0 0
    %2471 = vmatpush1.bf16.msra.mxu0 0
    %2472 = vmatprep.subr.bf16.mxu0 0
    %2473 = vmatpush1.bf16.msra.mxu0 0
    %2474 = vmatprep.subr.bf16.mxu0 0
    %2475 = vmatpush1.bf16.msra.mxu0 0
    %2476 = vmatprep.subr.bf16.mxu0 %v2446
    %2477 = vmatpush1.bf16.msra.mxu0 %v2445
    %2478 = vmatprep.subr.bf16.mxu0 %v2442
    %2479 = vmatpush1.bf16.msra.mxu0 %v2441
    %2480 = vmatprep.subr.bf16.mxu0 %v2438
    %2481 = vmatpush1.bf16.msra.mxu0 %v2437
    %2482 = vmatprep.subr.bf16.mxu0 %v2434
    %2483 = vmatpush1.bf16.msra.mxu0 %v2433
    %2484 = vmatprep.subr.bf16.mxu0 0
    %2485 = vmatpush2.bf16.msra.mxu0 0
    %2486 = vmatprep.subr.bf16.mxu0 0
    %2487 = vmatpush2.bf16.msra.mxu0 0
    %2488 = vmatprep.subr.bf16.mxu0 0
    %2489 = vmatpush2.bf16.msra.mxu0 0
    %2490 = vmatprep.subr.bf16.mxu0 0
    %2491 = vmatpush2.bf16.msra.mxu0 0
    %2492 = vmatprep.subr.bf16.mxu0 0
    %2493 = vmatpush2.bf16.msra.mxu0 0
    %2494 = vmatprep.subr.bf16.mxu0 0
    %2495 = vmatpush2.bf16.msra.mxu0 0
    %2496 = vmatprep.subr.bf16.mxu0 0
    %2497 = vmatpush2.bf16.msra.mxu0 0
    %2498 = vmatprep.subr.bf16.mxu0 0
    %2499 = vmatpush2.bf16.msra.mxu0 0
    %2500 = vmatprep.mubr.bf16.mxu0 0
    %2501 = vmatmul.mubr.bf16.gmra.mxu0 %v2466
    %v2502 = vpop.f32.mrf.mxu0
    %v2503 = vadd.f32 %v2330, %v2502
    %v2504 = vpop.f32.mrf.mxu0
    %v2505 = vadd.f32 %v2334, %v2504
    %v2506 = vpop.f32.mrf.mxu0
    %v2507 = vpop.f32.mrf.mxu0
    %2508 = vdwg.mxu0
    %2509 = vmatprep.subr.bf16.mxu0 0
    %2510 = vmatpush1.bf16.msra.mxu0 0
    %2511 = vmatprep.subr.bf16.mxu0 0
    %2512 = vmatpush1.bf16.msra.mxu0 0
    %2513 = vmatprep.subr.bf16.mxu0 0
    %2514 = vmatpush1.bf16.msra.mxu0 0
    %2515 = vmatprep.subr.bf16.mxu0 0
    %2516 = vmatpush1.bf16.msra.mxu0 0
    %2517 = vmatprep.subr.bf16.mxu0 %v2448
    %2518 = vmatpush1.bf16.msra.mxu0 %v2447
    %2519 = vmatprep.subr.bf16.mxu0 %v2444
    %2520 = vmatpush1.bf16.msra.mxu0 %v2443
    %2521 = vmatprep.subr.bf16.mxu0 %v2440
    %2522 = vmatpush1.bf16.msra.mxu0 %v2439
    %2523 = vmatprep.subr.bf16.mxu0 %v2436
    %2524 = vmatpush1.bf16.msra.mxu0 %v2435
    %2525 = vmatprep.subr.bf16.mxu0 0
    %2526 = vmatpush2.bf16.msra.mxu0 0
    %2527 = vmatprep.subr.bf16.mxu0 0
    %2528 = vmatpush2.bf16.msra.mxu0 0
    %2529 = vmatprep.subr.bf16.mxu0 0
    %2530 = vmatpush2.bf16.msra.mxu0 0
    %2531 = vmatprep.subr.bf16.mxu0 0
    %2532 = vmatpush2.bf16.msra.mxu0 0
    %2533 = vmatprep.subr.bf16.mxu0 0
    %2534 = vmatpush2.bf16.msra.mxu0 0
    %2535 = vmatprep.subr.bf16.mxu0 0
    %2536 = vmatpush2.bf16.msra.mxu0 0
    %2537 = vmatprep.subr.bf16.mxu0 0
    %2538 = vmatpush2.bf16.msra.mxu0 0
    %2539 = vmatprep.subr.bf16.mxu0 0
    %2540 = vmatpush2.bf16.msra.mxu0 0
    %2541 = vmatprep.mubr.bf16.mxu0 0
    %2542 = vmatmul.mubr.bf16.gmra.mxu0 %v2466
    %v2543 = vpop.f32.mrf.mxu0
    %v2544 = vadd.f32 %v2338, %v2543
    %v2545 = vpop.f32.mrf.mxu0
    %v2546 = vadd.f32 %v2342, %v2545
    %v2547 = vpop.f32.mrf.mxu0
    %v2548 = vpop.f32.mrf.mxu0
    %2549 = vdwg.mxu0
    %v2550 = vmax.f32 %v2503, 0.0
    %v2551 = vmax.f32 %v2505, 0.0
    %v2552 = vmax.f32 %v2544, 0.0
    %v2553 = vmax.f32 %v2546, 0.0
    %v2554 = vpack.c.bf16 %v2550, %v2550
    %v2555 = vpack.c.bf16 %v2551, %v2551
    %v2556 = vpack.c.bf16 %v2552, %v2552
    %v2557 = vpack.c.bf16 %v2553, %v2553
    %v2558 = vld [vmem:[#allocation5] sm:$0xff]
    %v2559 = vld [vmem:[#allocation5 + $0x8] sm:$0xff]
    %v2560 = vld [vmem:[#allocation5 + $0x10] sm:$0xff]
    %v2561 = vld [vmem:[#allocation5 + $0x18] sm:$0xff]
    %v2562 = vld [vmem:[#allocation5 + $0x20] sm:$0xff]
    %v2563 = vld [vmem:[#allocation5 + $0x28] sm:$0xff]
    %v2564 = vld [vmem:[#allocation5 + $0x30] sm:$0xff]
    %v2565 = vld [vmem:[#allocation5 + $0x38] sm:$0xff]
    %v2566 = vld [vmem:[#allocation5 + $0x40] sm:$0xff]
    %v2567 = vld [vmem:[#allocation5 + $0x48] sm:$0xff]
    %v2568 = vld [vmem:[#allocation5 + $0x50] sm:$0xff]
    %v2569 = vld [vmem:[#allocation5 + $0x58] sm:$0xff]
    %v2570 = vld [vmem:[#allocation5 + $0x60] sm:$0xff]
    %v2571 = vld [vmem:[#allocation5 + $0x68] sm:$0xff]
    %v2572 = vld [vmem:[#allocation5 + $0x70] sm:$0xff]
    %v2573 = vld [vmem:[#allocation5 + $0x78] sm:$0xff]
    %v2574 = vld [vmem:[#allocation5 + $0x80] sm:$0xff]
    %v2575 = vld [vmem:[#allocation5 + $0x88] sm:$0xff]
    %v2576 = vld [vmem:[#allocation5 + $0x90] sm:$0xff]
    %v2577 = vld [vmem:[#allocation5 + $0x98] sm:$0xff]
    %v2578 = vld [vmem:[#allocation5 + $0xa0] sm:$0xff]
    %v2579 = vld [vmem:[#allocation5 + $0xa8] sm:$0xff]
    %v2580 = vld [vmem:[#allocation5 + $0xb0] sm:$0xff]
    %v2581 = vld [vmem:[#allocation5 + $0xb8] sm:$0xff]
    %v2582 = vld [vmem:[#allocation5 + $0xc0] sm:$0xff]
    %v2583 = vld [vmem:[#allocation5 + $0xc8] sm:$0xff]
    %v2584 = vld [vmem:[#allocation5 + $0xd0] sm:$0xff]
    %v2585 = vld [vmem:[#allocation5 + $0xd8] sm:$0xff]
    %v2586 = vld [vmem:[#allocation5 + $0xe0] sm:$0xff]
    %v2587 = vld [vmem:[#allocation5 + $0xe8] sm:$0xff]
    %v2588 = vld [vmem:[#allocation5 + $0xf0] sm:$0xff]
    %v2589 = vld [vmem:[#allocation5 + $0xf8] sm:$0xff]
    %v2590 = vld [vmem:[#allocation5 + $0x100] sm:$0xff]
    %v2591 = vld [vmem:[#allocation5 + $0x108] sm:$0xff]
    %v2592 = vld [vmem:[#allocation5 + $0x110] sm:$0xff]
    %v2593 = vld [vmem:[#allocation5 + $0x118] sm:$0xff]
    %v2594 = vld [vmem:[#allocation5 + $0x120] sm:$0xff]
    %v2595 = vld [vmem:[#allocation5 + $0x128] sm:$0xff]
    %v2596 = vld [vmem:[#allocation5 + $0x130] sm:$0xff]
    %v2597 = vld [vmem:[#allocation5 + $0x138] sm:$0xff]
    %v2598 = vld [vmem:[#allocation5 + $0x140] sm:$0xff]
    %v2599 = vld [vmem:[#allocation5 + $0x148] sm:$0xff]
    %v2600 = vld [vmem:[#allocation5 + $0x150] sm:$0xff]
    %v2601 = vld [vmem:[#allocation5 + $0x158] sm:$0xff]
    %v2602 = vld [vmem:[#allocation5 + $0x160] sm:$0xff]
    %v2603 = vld [vmem:[#allocation5 + $0x168] sm:$0xff]
    %v2604 = vld [vmem:[#allocation5 + $0x170] sm:$0xff]
    %v2605 = vld [vmem:[#allocation5 + $0x178] sm:$0xff]
    %v2606 = vld [vmem:[#allocation5 + $0x180] sm:$0xff]
    %v2607 = vld [vmem:[#allocation5 + $0x188] sm:$0xff]
    %v2608 = vld [vmem:[#allocation5 + $0x190] sm:$0xff]
    %v2609 = vld [vmem:[#allocation5 + $0x198] sm:$0xff]
    %v2610 = vld [vmem:[#allocation5 + $0x1a0] sm:$0xff]
    %v2611 = vld [vmem:[#allocation5 + $0x1a8] sm:$0xff]
    %v2612 = vld [vmem:[#allocation5 + $0x1b0] sm:$0xff]
    %v2613 = vld [vmem:[#allocation5 + $0x1b8] sm:$0xff]
    %v2614 = vld [vmem:[#allocation5 + $0x1c0] sm:$0xff]
    %v2615 = vld [vmem:[#allocation5 + $0x1c8] sm:$0xff]
    %v2616 = vld [vmem:[#allocation5 + $0x1d0] sm:$0xff]
    %v2617 = vld [vmem:[#allocation5 + $0x1d8] sm:$0xff]
    %v2618 = vld [vmem:[#allocation5 + $0x1e0] sm:$0xff]
    %v2619 = vld [vmem:[#allocation5 + $0x1e8] sm:$0xff]
    %v2620 = vld [vmem:[#allocation5 + $0x1f0] sm:$0xff]
    %v2621 = vld [vmem:[#allocation5 + $0x1f8] sm:$0xff]
    %v2622 = vld [vmem:[#allocation5 + $0x200] sm:$0xff]
    %v2623 = vld [vmem:[#allocation5 + $0x208] sm:$0xff]
    %v2624 = vld [vmem:[#allocation5 + $0x210] sm:$0xff]
    %v2625 = vld [vmem:[#allocation5 + $0x218] sm:$0xff]
    %v2626 = vld [vmem:[#allocation5 + $0x220] sm:$0xff]
    %v2627 = vld [vmem:[#allocation5 + $0x228] sm:$0xff]
    %v2628 = vld [vmem:[#allocation5 + $0x230] sm:$0xff]
    %v2629 = vld [vmem:[#allocation5 + $0x238] sm:$0xff]
    %v2630 = vld [vmem:[#allocation5 + $0x240] sm:$0xff]
    %v2631 = vld [vmem:[#allocation5 + $0x248] sm:$0xff]
    %v2632 = vld [vmem:[#allocation5 + $0x250] sm:$0xff]
    %v2633 = vld [vmem:[#allocation5 + $0x258] sm:$0xff]
    %v2634 = vld [vmem:[#allocation5 + $0x260] sm:$0xff]
    %v2635 = vld [vmem:[#allocation5 + $0x268] sm:$0xff]
    %v2636 = vld [vmem:[#allocation5 + $0x270] sm:$0xff]
    %v2637 = vld [vmem:[#allocation5 + $0x278] sm:$0xff]
    %v2638 = vld [vmem:[#allocation5 + $0x280] sm:$0xff]
    %v2639 = vld [vmem:[#allocation5 + $0x288] sm:$0xff]
    %v2640 = vld [vmem:[#allocation5 + $0x290] sm:$0xff]
    %v2641 = vld [vmem:[#allocation5 + $0x298] sm:$0xff]
    %v2642 = vld [vmem:[#allocation5 + $0x2a0] sm:$0xff]
    %v2643 = vld [vmem:[#allocation5 + $0x2a8] sm:$0xff]
    %v2644 = vld [vmem:[#allocation5 + $0x2b0] sm:$0xff]
    %v2645 = vld [vmem:[#allocation5 + $0x2b8] sm:$0xff]
    %v2646 = vld [vmem:[#allocation5 + $0x2c0] sm:$0xff]
    %v2647 = vld [vmem:[#allocation5 + $0x2c8] sm:$0xff]
    %v2648 = vld [vmem:[#allocation5 + $0x2d0] sm:$0xff]
    %v2649 = vld [vmem:[#allocation5 + $0x2d8] sm:$0xff]
    %v2650 = vld [vmem:[#allocation5 + $0x2e0] sm:$0xff]
    %v2651 = vld [vmem:[#allocation5 + $0x2e8] sm:$0xff]
    %v2652 = vld [vmem:[#allocation5 + $0x2f0] sm:$0xff]
    %v2653 = vld [vmem:[#allocation5 + $0x2f8] sm:$0xff]
    %v2654 = vld [vmem:[#allocation5 + $0x300] sm:$0xff]
    %v2655 = vld [vmem:[#allocation5 + $0x308] sm:$0xff]
    %v2656 = vld [vmem:[#allocation5 + $0x310] sm:$0xff]
    %v2657 = vld [vmem:[#allocation5 + $0x318] sm:$0xff]
    %v2658 = vld [vmem:[#allocation5 + $0x320] sm:$0xff]
    %v2659 = vld [vmem:[#allocation5 + $0x328] sm:$0xff]
    %v2660 = vld [vmem:[#allocation5 + $0x330] sm:$0xff]
    %v2661 = vld [vmem:[#allocation5 + $0x338] sm:$0xff]
    %v2662 = vld [vmem:[#allocation5 + $0x340] sm:$0xff]
    %v2663 = vld [vmem:[#allocation5 + $0x348] sm:$0xff]
    %v2664 = vld [vmem:[#allocation5 + $0x350] sm:$0xff]
    %v2665 = vld [vmem:[#allocation5 + $0x358] sm:$0xff]
    %v2666 = vld [vmem:[#allocation5 + $0x360] sm:$0xff]
    %v2667 = vld [vmem:[#allocation5 + $0x368] sm:$0xff]
    %v2668 = vld [vmem:[#allocation5 + $0x370] sm:$0xff]
    %v2669 = vld [vmem:[#allocation5 + $0x378] sm:$0xff]
    %v2670 = vld [vmem:[#allocation5 + $0x380] sm:$0xff]
    %v2671 = vld [vmem:[#allocation5 + $0x388] sm:$0xff]
    %v2672 = vld [vmem:[#allocation5 + $0x390] sm:$0xff]
    %v2673 = vld [vmem:[#allocation5 + $0x398] sm:$0xff]
    %v2674 = vld [vmem:[#allocation5 + $0x3a0] sm:$0xff]
    %v2675 = vld [vmem:[#allocation5 + $0x3a8] sm:$0xff]
    %v2676 = vld [vmem:[#allocation5 + $0x3b0] sm:$0xff]
    %v2677 = vld [vmem:[#allocation5 + $0x3b8] sm:$0xff]
    %v2678 = vld [vmem:[#allocation5 + $0x3c0] sm:$0xff]
    %v2679 = vld [vmem:[#allocation5 + $0x3c8] sm:$0xff]
    %v2680 = vld [vmem:[#allocation5 + $0x3d0] sm:$0xff]
    %v2681 = vld [vmem:[#allocation5 + $0x3d8] sm:$0xff]
    %v2682 = vld [vmem:[#allocation5 + $0x3e0] sm:$0xff]
    %v2683 = vld [vmem:[#allocation5 + $0x3e8] sm:$0xff]
    %v2684 = vld [vmem:[#allocation5 + $0x3f0] sm:$0xff]
    %v2685 = vld [vmem:[#allocation5 + $0x3f8] sm:$0xff]
    %v2686 = vld [vmem:[%s8] sm:$0xf]
    %v2688 = vlaneseq
    %v2689 = vshrl.u32 %v2688, 7
    %v2690 = vsub.s32 0, %v2689
    %v2691 = vrot.slane %v2686, %v2690
    %v2692 = vlaneseq
    %v2693 = vshrl.u32 %v2692, 7
    %v2694 = vsub.s32 1, %v2693
    %v2695 = vrot.slane %v2686, %v2694
    %v2696 = vlaneseq
    %v2697 = vshrl.u32 %v2696, 7
    %v2698 = vsub.s32 2, %v2697
    %v2699 = vrot.slane %v2686, %v2698
    %v2700 = vlaneseq
    %v2701 = vshrl.u32 %v2700, 7
    %v2702 = vsub.s32 3, %v2701
    %v2703 = vrot.slane %v2686, %v2702
    %v2836 = vunpack.c.l.b16 %v2558
    %v2837 = vunpack.c.h.b16 %v2558
    %v2838 = vunpack.c.l.b16 %v2559
    %v2839 = vunpack.c.h.b16 %v2559
    %v2840 = vunpack.c.l.b16 %v2560
    %v2841 = vunpack.c.h.b16 %v2560
    %v2842 = vunpack.c.l.b16 %v2561
    %v2843 = vunpack.c.h.b16 %v2561
    %v2844 = vunpack.c.l.b16 %v2562
    %v2845 = vunpack.c.h.b16 %v2562
    %v2846 = vunpack.c.l.b16 %v2563
    %v2847 = vunpack.c.h.b16 %v2563
    %v2848 = vunpack.c.l.b16 %v2564
    %v2849 = vunpack.c.h.b16 %v2564
    %v2850 = vunpack.c.l.b16 %v2565
    %v2851 = vunpack.c.h.b16 %v2565
    %v2852 = vunpack.c.l.b16 %v2566
    %v2853 = vunpack.c.h.b16 %v2566
    %v2854 = vunpack.c.l.b16 %v2567
    %v2855 = vunpack.c.h.b16 %v2567
    %v2856 = vunpack.c.l.b16 %v2568
    %v2857 = vunpack.c.h.b16 %v2568
    %v2858 = vunpack.c.l.b16 %v2569
    %v2859 = vunpack.c.h.b16 %v2569
    %v2860 = vunpack.c.l.b16 %v2570
    %v2861 = vunpack.c.h.b16 %v2570
    %v2862 = vunpack.c.l.b16 %v2571
    %v2863 = vunpack.c.h.b16 %v2571
    %v2864 = vunpack.c.l.b16 %v2572
    %v2865 = vunpack.c.h.b16 %v2572
    %v2866 = vunpack.c.l.b16 %v2573
    %v2867 = vunpack.c.h.b16 %v2573
    %v2868 = vunpack.c.l.b16 %v2574
    %v2869 = vunpack.c.h.b16 %v2574
    %v2870 = vunpack.c.l.b16 %v2575
    %v2871 = vunpack.c.h.b16 %v2575
    %v2872 = vunpack.c.l.b16 %v2576
    %v2873 = vunpack.c.h.b16 %v2576
    %v2874 = vunpack.c.l.b16 %v2577
    %v2875 = vunpack.c.h.b16 %v2577
    %v2876 = vunpack.c.l.b16 %v2578
    %v2877 = vunpack.c.h.b16 %v2578
    %v2878 = vunpack.c.l.b16 %v2579
    %v2879 = vunpack.c.h.b16 %v2579
    %v2880 = vunpack.c.l.b16 %v2580
    %v2881 = vunpack.c.h.b16 %v2580
    %v2882 = vunpack.c.l.b16 %v2581
    %v2883 = vunpack.c.h.b16 %v2581
    %v2884 = vunpack.c.l.b16 %v2582
    %v2885 = vunpack.c.h.b16 %v2582
    %v2886 = vunpack.c.l.b16 %v2583
    %v2887 = vunpack.c.h.b16 %v2583
    %v2888 = vunpack.c.l.b16 %v2584
    %v2889 = vunpack.c.h.b16 %v2584
    %v2890 = vunpack.c.l.b16 %v2585
    %v2891 = vunpack.c.h.b16 %v2585
    %v2892 = vunpack.c.l.b16 %v2586
    %v2893 = vunpack.c.h.b16 %v2586
    %v2894 = vunpack.c.l.b16 %v2587
    %v2895 = vunpack.c.h.b16 %v2587
    %v2896 = vunpack.c.l.b16 %v2588
    %v2897 = vunpack.c.h.b16 %v2588
    %v2898 = vunpack.c.l.b16 %v2589
    %v2899 = vunpack.c.h.b16 %v2589
    %v2900 = vunpack.c.l.b16 %v2590
    %v2901 = vunpack.c.h.b16 %v2590
    %v2902 = vunpack.c.l.b16 %v2591
    %v2903 = vunpack.c.h.b16 %v2591
    %v2904 = vunpack.c.l.b16 %v2592
    %v2905 = vunpack.c.h.b16 %v2592
    %v2906 = vunpack.c.l.b16 %v2593
    %v2907 = vunpack.c.h.b16 %v2593
    %v2908 = vunpack.c.l.b16 %v2594
    %v2909 = vunpack.c.h.b16 %v2594
    %v2910 = vunpack.c.l.b16 %v2595
    %v2911 = vunpack.c.h.b16 %v2595
    %v2912 = vunpack.c.l.b16 %v2596
    %v2913 = vunpack.c.h.b16 %v2596
    %v2914 = vunpack.c.l.b16 %v2597
    %v2915 = vunpack.c.h.b16 %v2597
    %v2916 = vunpack.c.l.b16 %v2598
    %v2917 = vunpack.c.h.b16 %v2598
    %v2918 = vunpack.c.l.b16 %v2599
    %v2919 = vunpack.c.h.b16 %v2599
    %v2920 = vunpack.c.l.b16 %v2600
    %v2921 = vunpack.c.h.b16 %v2600
    %v2922 = vunpack.c.l.b16 %v2601
    %v2923 = vunpack.c.h.b16 %v2601
    %v2924 = vunpack.c.l.b16 %v2602
    %v2925 = vunpack.c.h.b16 %v2602
    %v2926 = vunpack.c.l.b16 %v2603
    %v2927 = vunpack.c.h.b16 %v2603
    %v2928 = vunpack.c.l.b16 %v2604
    %v2929 = vunpack.c.h.b16 %v2604
    %v2930 = vunpack.c.l.b16 %v2605
    %v2931 = vunpack.c.h.b16 %v2605
    %v2932 = vunpack.c.l.b16 %v2606
    %v2933 = vunpack.c.h.b16 %v2606
    %v2934 = vunpack.c.l.b16 %v2607
    %v2935 = vunpack.c.h.b16 %v2607
    %v2936 = vunpack.c.l.b16 %v2608
    %v2937 = vunpack.c.h.b16 %v2608
    %v2938 = vunpack.c.l.b16 %v2609
    %v2939 = vunpack.c.h.b16 %v2609
    %v2940 = vunpack.c.l.b16 %v2610
    %v2941 = vunpack.c.h.b16 %v2610
    %v2942 = vunpack.c.l.b16 %v2611
    %v2943 = vunpack.c.h.b16 %v2611
    %v2944 = vunpack.c.l.b16 %v2612
    %v2945 = vunpack.c.h.b16 %v2612
    %v2946 = vunpack.c.l.b16 %v2613
    %v2947 = vunpack.c.h.b16 %v2613
    %v2948 = vunpack.c.l.b16 %v2614
    %v2949 = vunpack.c.h.b16 %v2614
    %v2950 = vunpack.c.l.b16 %v2615
    %v2951 = vunpack.c.h.b16 %v2615
    %v2952 = vunpack.c.l.b16 %v2616
    %v2953 = vunpack.c.h.b16 %v2616
    %v2954 = vunpack.c.l.b16 %v2617
    %v2955 = vunpack.c.h.b16 %v2617
    %v2956 = vunpack.c.l.b16 %v2618
    %v2957 = vunpack.c.h.b16 %v2618
    %v2958 = vunpack.c.l.b16 %v2619
    %v2959 = vunpack.c.h.b16 %v2619
    %v2960 = vunpack.c.l.b16 %v2620
    %v2961 = vunpack.c.h.b16 %v2620
    %v2962 = vunpack.c.l.b16 %v2621
    %v2963 = vunpack.c.h.b16 %v2621
    %v2964 = vunpack.c.l.b16 %v2622
    %v2965 = vunpack.c.h.b16 %v2622
    %v2966 = vunpack.c.l.b16 %v2623
    %v2967 = vunpack.c.h.b16 %v2623
    %v2968 = vunpack.c.l.b16 %v2624
    %v2969 = vunpack.c.h.b16 %v2624
    %v2970 = vunpack.c.l.b16 %v2625
    %v2971 = vunpack.c.h.b16 %v2625
    %v2972 = vunpack.c.l.b16 %v2626
    %v2973 = vunpack.c.h.b16 %v2626
    %v2974 = vunpack.c.l.b16 %v2627
    %v2975 = vunpack.c.h.b16 %v2627
    %v2976 = vunpack.c.l.b16 %v2628
    %v2977 = vunpack.c.h.b16 %v2628
    %v2978 = vunpack.c.l.b16 %v2629
    %v2979 = vunpack.c.h.b16 %v2629
    %v2980 = vunpack.c.l.b16 %v2630
    %v2981 = vunpack.c.h.b16 %v2630
    %v2982 = vunpack.c.l.b16 %v2631
    %v2983 = vunpack.c.h.b16 %v2631
    %v2984 = vunpack.c.l.b16 %v2632
    %v2985 = vunpack.c.h.b16 %v2632
    %v2986 = vunpack.c.l.b16 %v2633
    %v2987 = vunpack.c.h.b16 %v2633
    %v2988 = vunpack.c.l.b16 %v2634
    %v2989 = vunpack.c.h.b16 %v2634
    %v2990 = vunpack.c.l.b16 %v2635
    %v2991 = vunpack.c.h.b16 %v2635
    %v2992 = vunpack.c.l.b16 %v2636
    %v2993 = vunpack.c.h.b16 %v2636
    %v2994 = vunpack.c.l.b16 %v2637
    %v2995 = vunpack.c.h.b16 %v2637
    %v2996 = vunpack.c.l.b16 %v2638
    %v2997 = vunpack.c.h.b16 %v2638
    %v2998 = vunpack.c.l.b16 %v2639
    %v2999 = vunpack.c.h.b16 %v2639
    %v3000 = vunpack.c.l.b16 %v2640
    %v3001 = vunpack.c.h.b16 %v2640
    %v3002 = vunpack.c.l.b16 %v2641
    %v3003 = vunpack.c.h.b16 %v2641
    %v3004 = vunpack.c.l.b16 %v2642
    %v3005 = vunpack.c.h.b16 %v2642
    %v3006 = vunpack.c.l.b16 %v2643
    %v3007 = vunpack.c.h.b16 %v2643
    %v3008 = vunpack.c.l.b16 %v2644
    %v3009 = vunpack.c.h.b16 %v2644
    %v3010 = vunpack.c.l.b16 %v2645
    %v3011 = vunpack.c.h.b16 %v2645
    %v3012 = vunpack.c.l.b16 %v2646
    %v3013 = vunpack.c.h.b16 %v2646
    %v3014 = vunpack.c.l.b16 %v2647
    %v3015 = vunpack.c.h.b16 %v2647
    %v3016 = vunpack.c.l.b16 %v2648
    %v3017 = vunpack.c.h.b16 %v2648
    %v3018 = vunpack.c.l.b16 %v2649
    %v3019 = vunpack.c.h.b16 %v2649
    %v3020 = vunpack.c.l.b16 %v2650
    %v3021 = vunpack.c.h.b16 %v2650
    %v3022 = vunpack.c.l.b16 %v2651
    %v3023 = vunpack.c.h.b16 %v2651
    %v3024 = vunpack.c.l.b16 %v2652
    %v3025 = vunpack.c.h.b16 %v2652
    %v3026 = vunpack.c.l.b16 %v2653
    %v3027 = vunpack.c.h.b16 %v2653
    %v3028 = vunpack.c.l.b16 %v2654
    %v3029 = vunpack.c.h.b16 %v2654
    %v3030 = vunpack.c.l.b16 %v2655
    %v3031 = vunpack.c.h.b16 %v2655
    %v3032 = vunpack.c.l.b16 %v2656
    %v3033 = vunpack.c.h.b16 %v2656
    %v3034 = vunpack.c.l.b16 %v2657
    %v3035 = vunpack.c.h.b16 %v2657
    %v3036 = vunpack.c.l.b16 %v2658
    %v3037 = vunpack.c.h.b16 %v2658
    %v3038 = vunpack.c.l.b16 %v2659
    %v3039 = vunpack.c.h.b16 %v2659
    %v3040 = vunpack.c.l.b16 %v2660
    %v3041 = vunpack.c.h.b16 %v2660
    %v3042 = vunpack.c.l.b16 %v2661
    %v3043 = vunpack.c.h.b16 %v2661
    %v3044 = vunpack.c.l.b16 %v2662
    %v3045 = vunpack.c.h.b16 %v2662
    %v3046 = vunpack.c.l.b16 %v2663
    %v3047 = vunpack.c.h.b16 %v2663
    %v3048 = vunpack.c.l.b16 %v2664
    %v3049 = vunpack.c.h.b16 %v2664
    %v3050 = vunpack.c.l.b16 %v2665
    %v3051 = vunpack.c.h.b16 %v2665
    %v3052 = vunpack.c.l.b16 %v2666
    %v3053 = vunpack.c.h.b16 %v2666
    %v3054 = vunpack.c.l.b16 %v2667
    %v3055 = vunpack.c.h.b16 %v2667
    %v3056 = vunpack.c.l.b16 %v2668
    %v3057 = vunpack.c.h.b16 %v2668
    %v3058 = vunpack.c.l.b16 %v2669
    %v3059 = vunpack.c.h.b16 %v2669
    %v3060 = vunpack.c.l.b16 %v2670
    %v3061 = vunpack.c.h.b16 %v2670
    %v3062 = vunpack.c.l.b16 %v2671
    %v3063 = vunpack.c.h.b16 %v2671
    %v3064 = vunpack.c.l.b16 %v2672
    %v3065 = vunpack.c.h.b16 %v2672
    %v3066 = vunpack.c.l.b16 %v2673
    %v3067 = vunpack.c.h.b16 %v2673
    %v3068 = vunpack.c.l.b16 %v2674
    %v3069 = vunpack.c.h.b16 %v2674
    %v3070 = vunpack.c.l.b16 %v2675
    %v3071 = vunpack.c.h.b16 %v2675
    %v3072 = vunpack.c.l.b16 %v2676
    %v3073 = vunpack.c.h.b16 %v2676
    %v3074 = vunpack.c.l.b16 %v2677
    %v3075 = vunpack.c.h.b16 %v2677
    %v3076 = vunpack.c.l.b16 %v2678
    %v3077 = vunpack.c.h.b16 %v2678
    %v3078 = vunpack.c.l.b16 %v2679
    %v3079 = vunpack.c.h.b16 %v2679
    %v3080 = vunpack.c.l.b16 %v2680
    %v3081 = vunpack.c.h.b16 %v2680
    %v3082 = vunpack.c.l.b16 %v2681
    %v3083 = vunpack.c.h.b16 %v2681
    %v3084 = vunpack.c.l.b16 %v2682
    %v3085 = vunpack.c.h.b16 %v2682
    %v3086 = vunpack.c.l.b16 %v2683
    %v3087 = vunpack.c.h.b16 %v2683
    %v3088 = vunpack.c.l.b16 %v2684
    %v3089 = vunpack.c.h.b16 %v2684
    %v3090 = vunpack.c.l.b16 %v2685
    %v3091 = vunpack.c.h.b16 %v2685
    %v3092 = vpack.c.b16 %v2840, %v2836
    %v3093 = vpack.c.b16 %v2841, %v2837
    %v3094 = vpack.c.b16 %v2842, %v2838
    %v3095 = vpack.c.b16 %v2843, %v2839
    %v3096 = vpack.c.b16 %v2848, %v2844
    %v3097 = vpack.c.b16 %v2849, %v2845
    %v3098 = vpack.c.b16 %v2850, %v2846
    %v3099 = vpack.c.b16 %v2851, %v2847
    %v3100 = vpack.c.b16 %v2856, %v2852
    %v3101 = vpack.c.b16 %v2857, %v2853
    %v3102 = vpack.c.b16 %v2858, %v2854
    %v3103 = vpack.c.b16 %v2859, %v2855
    %v3104 = vpack.c.b16 %v2864, %v2860
    %v3105 = vpack.c.b16 %v2865, %v2861
    %v3106 = vpack.c.b16 %v2866, %v2862
    %v3107 = vpack.c.b16 %v2867, %v2863
    %v3108 = vpack.c.b16 %v2872, %v2868
    %v3109 = vpack.c.b16 %v2873, %v2869
    %v3110 = vpack.c.b16 %v2874, %v2870
    %v3111 = vpack.c.b16 %v2875, %v2871
    %v3112 = vpack.c.b16 %v2880, %v2876
    %v3113 = vpack.c.b16 %v2881, %v2877
    %v3114 = vpack.c.b16 %v2882, %v2878
    %v3115 = vpack.c.b16 %v2883, %v2879
    %v3116 = vpack.c.b16 %v2888, %v2884
    %v3117 = vpack.c.b16 %v2889, %v2885
    %v3118 = vpack.c.b16 %v2890, %v2886
    %v3119 = vpack.c.b16 %v2891, %v2887
    %v3120 = vpack.c.b16 %v2896, %v2892
    %v3121 = vpack.c.b16 %v2897, %v2893
    %v3122 = vpack.c.b16 %v2898, %v2894
    %v3123 = vpack.c.b16 %v2899, %v2895
    %v3124 = vpack.c.b16 %v2904, %v2900
    %v3125 = vpack.c.b16 %v2905, %v2901
    %v3126 = vpack.c.b16 %v2906, %v2902
    %v3127 = vpack.c.b16 %v2907, %v2903
    %v3128 = vpack.c.b16 %v2912, %v2908
    %v3129 = vpack.c.b16 %v2913, %v2909
    %v3130 = vpack.c.b16 %v2914, %v2910
    %v3131 = vpack.c.b16 %v2915, %v2911
    %v3132 = vpack.c.b16 %v2920, %v2916
    %v3133 = vpack.c.b16 %v2921, %v2917
    %v3134 = vpack.c.b16 %v2922, %v2918
    %v3135 = vpack.c.b16 %v2923, %v2919
    %v3136 = vpack.c.b16 %v2928, %v2924
    %v3137 = vpack.c.b16 %v2929, %v2925
    %v3138 = vpack.c.b16 %v2930, %v2926
    %v3139 = vpack.c.b16 %v2931, %v2927
    %v3140 = vpack.c.b16 %v2936, %v2932
    %v3141 = vpack.c.b16 %v2937, %v2933
    %v3142 = vpack.c.b16 %v2938, %v2934
    %v3143 = vpack.c.b16 %v2939, %v2935
    %v3144 = vpack.c.b16 %v2944, %v2940
    %v3145 = vpack.c.b16 %v2945, %v2941
    %v3146 = vpack.c.b16 %v2946, %v2942
    %v3147 = vpack.c.b16 %v2947, %v2943
    %v3148 = vpack.c.b16 %v2952, %v2948
    %v3149 = vpack.c.b16 %v2953, %v2949
    %v3150 = vpack.c.b16 %v2954, %v2950
    %v3151 = vpack.c.b16 %v2955, %v2951
    %v3152 = vpack.c.b16 %v2960, %v2956
    %v3153 = vpack.c.b16 %v2961, %v2957
    %v3154 = vpack.c.b16 %v2962, %v2958
    %v3155 = vpack.c.b16 %v2963, %v2959
    %v3156 = vpack.c.b16 %v2968, %v2964
    %v3157 = vpack.c.b16 %v2969, %v2965
    %v3158 = vpack.c.b16 %v2970, %v2966
    %v3159 = vpack.c.b16 %v2971, %v2967
    %v3160 = vpack.c.b16 %v2976, %v2972
    %v3161 = vpack.c.b16 %v2977, %v2973
    %v3162 = vpack.c.b16 %v2978, %v2974
    %v3163 = vpack.c.b16 %v2979, %v2975
    %v3164 = vpack.c.b16 %v2984, %v2980
    %v3165 = vpack.c.b16 %v2985, %v2981
    %v3166 = vpack.c.b16 %v2986, %v2982
    %v3167 = vpack.c.b16 %v2987, %v2983
    %v3168 = vpack.c.b16 %v2992, %v2988
    %v3169 = vpack.c.b16 %v2993, %v2989
    %v3170 = vpack.c.b16 %v2994, %v2990
    %v3171 = vpack.c.b16 %v2995, %v2991
    %v3172 = vpack.c.b16 %v3000, %v2996
    %v3173 = vpack.c.b16 %v3001, %v2997
    %v3174 = vpack.c.b16 %v3002, %v2998
    %v3175 = vpack.c.b16 %v3003, %v2999
    %v3176 = vpack.c.b16 %v3008, %v3004
    %v3177 = vpack.c.b16 %v3009, %v3005
    %v3178 = vpack.c.b16 %v3010, %v3006
    %v3179 = vpack.c.b16 %v3011, %v3007
    %v3180 = vpack.c.b16 %v3016, %v3012
    %v3181 = vpack.c.b16 %v3017, %v3013
    %v3182 = vpack.c.b16 %v3018, %v3014
    %v3183 = vpack.c.b16 %v3019, %v3015
    %v3184 = vpack.c.b16 %v3024, %v3020
    %v3185 = vpack.c.b16 %v3025, %v3021
    %v3186 = vpack.c.b16 %v3026, %v3022
    %v3187 = vpack.c.b16 %v3027, %v3023
    %v3188 = vpack.c.b16 %v3032, %v3028
    %v3189 = vpack.c.b16 %v3033, %v3029
    %v3190 = vpack.c.b16 %v3034, %v3030
    %v3191 = vpack.c.b16 %v3035, %v3031
    %v3192 = vpack.c.b16 %v3040, %v3036
    %v3193 = vpack.c.b16 %v3041, %v3037
    %v3194 = vpack.c.b16 %v3042, %v3038
    %v3195 = vpack.c.b16 %v3043, %v3039
    %v3196 = vpack.c.b16 %v3048, %v3044
    %v3197 = vpack.c.b16 %v3049, %v3045
    %v3198 = vpack.c.b16 %v3050, %v3046
    %v3199 = vpack.c.b16 %v3051, %v3047
    %v3200 = vpack.c.b16 %v3056, %v3052
    %v3201 = vpack.c.b16 %v3057, %v3053
    %v3202 = vpack.c.b16 %v3058, %v3054
    %v3203 = vpack.c.b16 %v3059, %v3055
    %v3204 = vpack.c.b16 %v3064, %v3060
    %v3205 = vpack.c.b16 %v3065, %v3061
    %v3206 = vpack.c.b16 %v3066, %v3062
    %v3207 = vpack.c.b16 %v3067, %v3063
    %v3208 = vpack.c.b16 %v3072, %v3068
    %v3209 = vpack.c.b16 %v3073, %v3069
    %v3210 = vpack.c.b16 %v3074, %v3070
    %v3211 = vpack.c.b16 %v3075, %v3071
    %v3212 = vpack.c.b16 %v3080, %v3076
    %v3213 = vpack.c.b16 %v3081, %v3077
    %v3214 = vpack.c.b16 %v3082, %v3078
    %v3215 = vpack.c.b16 %v3083, %v3079
    %v3216 = vpack.c.b16 %v3088, %v3084
    %v3217 = vpack.c.b16 %v3089, %v3085
    %v3218 = vpack.c.b16 %v3090, %v3086
    %v3219 = vpack.c.b16 %v3091, %v3087
    %3348 = vmatprep.subr.bf16.mxu0 %v3121
    %3349 = vmatpush1.bf16.msra.mxu0 %v3120
    %3350 = vmatprep.subr.bf16.mxu0 %v3117
    %3351 = vmatpush1.bf16.msra.mxu0 %v3116
    %3352 = vmatprep.subr.bf16.mxu0 %v3113
    %3353 = vmatpush1.bf16.msra.mxu0 %v3112
    %3354 = vmatprep.subr.bf16.mxu0 %v3109
    %3355 = vmatpush1.bf16.msra.mxu0 %v3108
    %3356 = vmatprep.subr.bf16.mxu0 %v3105
    %3357 = vmatpush1.bf16.msra.mxu0 %v3104
    %3358 = vmatprep.subr.bf16.mxu0 %v3101
    %3359 = vmatpush1.bf16.msra.mxu0 %v3100
    %3360 = vmatprep.subr.bf16.mxu0 %v3097
    %3361 = vmatpush1.bf16.msra.mxu0 %v3096
    %3362 = vmatprep.subr.bf16.mxu0 %v3093
    %3363 = vmatpush1.bf16.msra.mxu0 %v3092
    %3364 = vmatprep.subr.bf16.mxu0 %v3153
    %3365 = vmatpush2.bf16.msra.mxu0 %v3152
    %3366 = vmatprep.subr.bf16.mxu0 %v3149
    %3367 = vmatpush2.bf16.msra.mxu0 %v3148
    %3368 = vmatprep.subr.bf16.mxu0 %v3145
    %3369 = vmatpush2.bf16.msra.mxu0 %v3144
    %3370 = vmatprep.subr.bf16.mxu0 %v3141
    %3371 = vmatpush2.bf16.msra.mxu0 %v3140
    %3372 = vmatprep.subr.bf16.mxu0 %v3137
    %3373 = vmatpush2.bf16.msra.mxu0 %v3136
    %3374 = vmatprep.subr.bf16.mxu0 %v3133
    %3375 = vmatpush2.bf16.msra.mxu0 %v3132
    %3376 = vmatprep.subr.bf16.mxu0 %v3129
    %3377 = vmatpush2.bf16.msra.mxu0 %v3128
    %3378 = vmatprep.subr.bf16.mxu0 %v3125
    %3379 = vmatpush2.bf16.msra.mxu0 %v3124
    %3380 = vmatprep.mubr.bf16.mxu0 %v2555
    %3381 = vmatmul.mubr.bf16.gmra.mxu0 %v2554
    %v3382 = vpop.f32.mrf.mxu0
    %v3383 = vadd.f32 %v2691, %v3382
    %v3384 = vpop.f32.mrf.mxu0
    %v3385 = vadd.f32 %v2695, %v3384
    %v3386 = vpop.f32.mrf.mxu0
    %v3387 = vpop.f32.mrf.mxu0
    %3388 = vdwg.mxu0
    %3389 = vmatprep.subr.bf16.mxu0 %v3185
    %3390 = vmatpush1.bf16.msra.mxu0 %v3184
    %3391 = vmatprep.subr.bf16.mxu0 %v3181
    %3392 = vmatpush1.bf16.msra.mxu0 %v3180
    %3393 = vmatprep.subr.bf16.mxu0 %v3177
    %3394 = vmatpush1.bf16.msra.mxu0 %v3176
    %3395 = vmatprep.subr.bf16.mxu0 %v3173
    %3396 = vmatpush1.bf16.msra.mxu0 %v3172
    %3397 = vmatprep.subr.bf16.mxu0 %v3169
    %3398 = vmatpush1.bf16.msra.mxu0 %v3168
    %3399 = vmatprep.subr.bf16.mxu0 %v3165
    %3400 = vmatpush1.bf16.msra.mxu0 %v3164
    %3401 = vmatprep.subr.bf16.mxu0 %v3161
    %3402 = vmatpush1.bf16.msra.mxu0 %v3160
    %3403 = vmatprep.subr.bf16.mxu0 %v3157
    %3404 = vmatpush1.bf16.msra.mxu0 %v3156
    %3405 = vmatprep.subr.bf16.mxu0 %v3217
    %3406 = vmatpush2.bf16.msra.mxu0 %v3216
    %3407 = vmatprep.subr.bf16.mxu0 %v3213
    %3408 = vmatpush2.bf16.msra.mxu0 %v3212
    %3409 = vmatprep.subr.bf16.mxu0 %v3209
    %3410 = vmatpush2.bf16.msra.mxu0 %v3208
    %3411 = vmatprep.subr.bf16.mxu0 %v3205
    %3412 = vmatpush2.bf16.msra.mxu0 %v3204
    %3413 = vmatprep.subr.bf16.mxu0 %v3201
    %3414 = vmatpush2.bf16.msra.mxu0 %v3200
    %3415 = vmatprep.subr.bf16.mxu0 %v3197
    %3416 = vmatpush2.bf16.msra.mxu0 %v3196
    %3417 = vmatprep.subr.bf16.mxu0 %v3193
    %3418 = vmatpush2.bf16.msra.mxu0 %v3192
    %3419 = vmatprep.subr.bf16.mxu0 %v3189
    %3420 = vmatpush2.bf16.msra.mxu0 %v3188
    %3421 = vmatprep.mubr.bf16.mxu0 %v2557
    %3422 = vmatmul.mubr.bf16.gmra.mxu0 %v2556
    %v3423 = vpop.f32.mrf.mxu0
    %v3424 = vadd.f32 %v3383, %v3423
    %v3425 = vpop.f32.mrf.mxu0
    %v3426 = vadd.f32 %v3385, %v3425
    %v3427 = vpop.f32.mrf.mxu0
    %v3428 = vpop.f32.mrf.mxu0
    %3429 = vdwg.mxu0
    %3430 = vmatprep.subr.bf16.mxu0 %v3123
    %3431 = vmatpush1.bf16.msra.mxu0 %v3122
    %3432 = vmatprep.subr.bf16.mxu0 %v3119
    %3433 = vmatpush1.bf16.msra.mxu0 %v3118
    %3434 = vmatprep.subr.bf16.mxu0 %v3115
    %3435 = vmatpush1.bf16.msra.mxu0 %v3114
    %3436 = vmatprep.subr.bf16.mxu0 %v3111
    %3437 = vmatpush1.bf16.msra.mxu0 %v3110
    %3438 = vmatprep.subr.bf16.mxu0 %v3107
    %3439 = vmatpush1.bf16.msra.mxu0 %v3106
    %3440 = vmatprep.subr.bf16.mxu0 %v3103
    %3441 = vmatpush1.bf16.msra.mxu0 %v3102
    %3442 = vmatprep.subr.bf16.mxu0 %v3099
    %3443 = vmatpush1.bf16.msra.mxu0 %v3098
    %3444 = vmatprep.subr.bf16.mxu0 %v3095
    %3445 = vmatpush1.bf16.msra.mxu0 %v3094
    %3446 = vmatprep.subr.bf16.mxu0 %v3155
    %3447 = vmatpush2.bf16.msra.mxu0 %v3154
    %3448 = vmatprep.subr.bf16.mxu0 %v3151
    %3449 = vmatpush2.bf16.msra.mxu0 %v3150
    %3450 = vmatprep.subr.bf16.mxu0 %v3147
    %3451 = vmatpush2.bf16.msra.mxu0 %v3146
    %3452 = vmatprep.subr.bf16.mxu0 %v3143
    %3453 = vmatpush2.bf16.msra.mxu0 %v3142
    %3454 = vmatprep.subr.bf16.mxu0 %v3139
    %3455 = vmatpush2.bf16.msra.mxu0 %v3138
    %3456 = vmatprep.subr.bf16.mxu0 %v3135
    %3457 = vmatpush2.bf16.msra.mxu0 %v3134
    %3458 = vmatprep.subr.bf16.mxu0 %v3131
    %3459 = vmatpush2.bf16.msra.mxu0 %v3130
    %3460 = vmatprep.subr.bf16.mxu0 %v3127
    %3461 = vmatpush2.bf16.msra.mxu0 %v3126
    %3462 = vmatprep.mubr.bf16.mxu0 %v2555
    %3463 = vmatmul.mubr.bf16.gmra.mxu0 %v2554
    %v3464 = vpop.f32.mrf.mxu0
    %v3465 = vadd.f32 %v2699, %v3464
    %v3466 = vpop.f32.mrf.mxu0
    %v3467 = vadd.f32 %v2703, %v3466
    %v3468 = vpop.f32.mrf.mxu0
    %v3469 = vpop.f32.mrf.mxu0
    %3470 = vdwg.mxu0
    %3471 = vmatprep.subr.bf16.mxu0 %v3187
    %3472 = vmatpush1.bf16.msra.mxu0 %v3186
    %3473 = vmatprep.subr.bf16.mxu0 %v3183
    %3474 = vmatpush1.bf16.msra.mxu0 %v3182
    %3475 = vmatprep.subr.bf16.mxu0 %v3179
    %3476 = vmatpush1.bf16.msra.mxu0 %v3178
    %3477 = vmatprep.subr.bf16.mxu0 %v3175
    %3478 = vmatpush1.bf16.msra.mxu0 %v3174
    %3479 = vmatprep.subr.bf16.mxu0 %v3171
    %3480 = vmatpush1.bf16.msra.mxu0 %v3170
    %3481 = vmatprep.subr.bf16.mxu0 %v3167
    %3482 = vmatpush1.bf16.msra.mxu0 %v3166
    %3483 = vmatprep.subr.bf16.mxu0 %v3163
    %3484 = vmatpush1.bf16.msra.mxu0 %v3162
    %3485 = vmatprep.subr.bf16.mxu0 %v3159
    %3486 = vmatpush1.bf16.msra.mxu0 %v3158
    %3487 = vmatprep.subr.bf16.mxu0 %v3219
    %3488 = vmatpush2.bf16.msra.mxu0 %v3218
    %3489 = vmatprep.subr.bf16.mxu0 %v3215
    %3490 = vmatpush2.bf16.msra.mxu0 %v3214
    %3491 = vmatprep.subr.bf16.mxu0 %v3211
    %3492 = vmatpush2.bf16.msra.mxu0 %v3210
    %3493 = vmatprep.subr.bf16.mxu0 %v3207
    %3494 = vmatpush2.bf16.msra.mxu0 %v3206
    %3495 = vmatprep.subr.bf16.mxu0 %v3203
    %3496 = vmatpush2.bf16.msra.mxu0 %v3202
    %3497 = vmatprep.subr.bf16.mxu0 %v3199
    %3498 = vmatpush2.bf16.msra.mxu0 %v3198
    %3499 = vmatprep.subr.bf16.mxu0 %v3195
    %3500 = vmatpush2.bf16.msra.mxu0 %v3194
    %3501 = vmatprep.subr.bf16.mxu0 %v3191
    %3502 = vmatpush2.bf16.msra.mxu0 %v3190
    %3503 = vmatprep.mubr.bf16.mxu0 %v2557
    %3504 = vmatmul.mubr.bf16.gmra.mxu0 %v2556
    %v3505 = vpop.f32.mrf.mxu0
    %v3506 = vadd.f32 %v3465, %v3505
    %v3507 = vpop.f32.mrf.mxu0
    %v3508 = vadd.f32 %v3467, %v3507
    %v3509 = vpop.f32.mrf.mxu0
    %v3510 = vpop.f32.mrf.mxu0
    %3511 = vdwg.mxu0
    %v3512 = vmax.f32 %v3424, 0.0
    %v3513 = vmax.f32 %v3426, 0.0
    %v3514 = vmax.f32 %v3506, 0.0
    %v3515 = vmax.f32 %v3508, 0.0
    %v3516 = vpack.c.bf16 %v3512, %v3512
    %v3517 = vpack.c.bf16 %v3513, %v3513
    %v3518 = vpack.c.bf16 %v3514, %v3514
    %v3519 = vpack.c.bf16 %v3515, %v3515
    %v3520 = vld [vmem:[#allocation7] sm:$0xf]
    %v3521 = vld [vmem:[#allocation7 + $0x4] sm:$0xf]
    %v3522 = vld [vmem:[#allocation7 + $0x8] sm:$0xf]
    %v3523 = vld [vmem:[#allocation7 + $0xc] sm:$0xf]
    %v3524 = vld [vmem:[#allocation7 + $0x10] sm:$0xf]
    %v3525 = vld [vmem:[#allocation7 + $0x14] sm:$0xf]
    %v3526 = vld [vmem:[#allocation7 + $0x18] sm:$0xf]
    %v3527 = vld [vmem:[#allocation7 + $0x1c] sm:$0xf]
    %v3528 = vld [vmem:[#allocation7 + $0x20] sm:$0xf]
    %v3529 = vld [vmem:[#allocation7 + $0x24] sm:$0xf]
    %v3530 = vld [vmem:[#allocation7 + $0x28] sm:$0xf]
    %v3531 = vld [vmem:[#allocation7 + $0x2c] sm:$0xf]
    %v3532 = vld [vmem:[#allocation7 + $0x30] sm:$0xf]
    %v3533 = vld [vmem:[#allocation7 + $0x34] sm:$0xf]
    %v3534 = vld [vmem:[#allocation7 + $0x38] sm:$0xf]
    %v3535 = vld [vmem:[#allocation7 + $0x3c] sm:$0xf]
    %v3536 = vld [vmem:[#allocation7 + $0x40] sm:$0xf]
    %v3537 = vld [vmem:[#allocation7 + $0x44] sm:$0xf]
    %v3538 = vld [vmem:[#allocation7 + $0x48] sm:$0xf]
    %v3539 = vld [vmem:[#allocation7 + $0x4c] sm:$0xf]
    %v3540 = vld [vmem:[#allocation7 + $0x50] sm:$0xf]
    %v3541 = vld [vmem:[#allocation7 + $0x54] sm:$0xf]
    %v3542 = vld [vmem:[#allocation7 + $0x58] sm:$0xf]
    %v3543 = vld [vmem:[#allocation7 + $0x5c] sm:$0xf]
    %v3544 = vld [vmem:[#allocation7 + $0x60] sm:$0xf]
    %v3545 = vld [vmem:[#allocation7 + $0x64] sm:$0xf]
    %v3546 = vld [vmem:[#allocation7 + $0x68] sm:$0xf]
    %v3547 = vld [vmem:[#allocation7 + $0x6c] sm:$0xf]
    %v3548 = vld [vmem:[#allocation7 + $0x70] sm:$0xf]
    %v3549 = vld [vmem:[#allocation7 + $0x74] sm:$0xf]
    %v3550 = vld [vmem:[#allocation7 + $0x78] sm:$0xf]
    %v3551 = vld [vmem:[#allocation7 + $0x7c] sm:$0xf]
    %v3552 = vld [vmem:[#allocation7 + $0x80] sm:$0xf]
    %v3553 = vld [vmem:[#allocation7 + $0x84] sm:$0xf]
    %v3554 = vld [vmem:[#allocation7 + $0x88] sm:$0xf]
    %v3555 = vld [vmem:[#allocation7 + $0x8c] sm:$0xf]
    %v3556 = vld [vmem:[#allocation7 + $0x90] sm:$0xf]
    %v3557 = vld [vmem:[#allocation7 + $0x94] sm:$0xf]
    %v3558 = vld [vmem:[#allocation7 + $0x98] sm:$0xf]
    %v3559 = vld [vmem:[#allocation7 + $0x9c] sm:$0xf]
    %v3560 = vld [vmem:[#allocation7 + $0xa0] sm:$0xf]
    %v3561 = vld [vmem:[#allocation7 + $0xa4] sm:$0xf]
    %v3562 = vld [vmem:[#allocation7 + $0xa8] sm:$0xf]
    %v3563 = vld [vmem:[#allocation7 + $0xac] sm:$0xf]
    %v3564 = vld [vmem:[#allocation7 + $0xb0] sm:$0xf]
    %v3565 = vld [vmem:[#allocation7 + $0xb4] sm:$0xf]
    %v3566 = vld [vmem:[#allocation7 + $0xb8] sm:$0xf]
    %v3567 = vld [vmem:[#allocation7 + $0xbc] sm:$0xf]
    %v3568 = vld [vmem:[#allocation7 + $0xc0] sm:$0xf]
    %v3569 = vld [vmem:[#allocation7 + $0xc4] sm:$0xf]
    %v3570 = vld [vmem:[#allocation7 + $0xc8] sm:$0xf]
    %v3571 = vld [vmem:[#allocation7 + $0xcc] sm:$0xf]
    %v3572 = vld [vmem:[#allocation7 + $0xd0] sm:$0xf]
    %v3573 = vld [vmem:[#allocation7 + $0xd4] sm:$0xf]
    %v3574 = vld [vmem:[#allocation7 + $0xd8] sm:$0xf]
    %v3575 = vld [vmem:[#allocation7 + $0xdc] sm:$0xf]
    %v3576 = vld [vmem:[#allocation7 + $0xe0] sm:$0xf]
    %v3577 = vld [vmem:[#allocation7 + $0xe4] sm:$0xf]
    %v3578 = vld [vmem:[#allocation7 + $0xe8] sm:$0xf]
    %v3579 = vld [vmem:[#allocation7 + $0xec] sm:$0xf]
    %v3580 = vld [vmem:[#allocation7 + $0xf0] sm:$0xf]
    %v3581 = vld [vmem:[#allocation7 + $0xf4] sm:$0xf]
    %v3582 = vld [vmem:[#allocation7 + $0xf8] sm:$0xf]
    %v3583 = vld [vmem:[#allocation7 + $0xfc] sm:$0xf]
    %v3584 = vld [vmem:[%s10] sm:$0x1]
    %v3586 = vlaneseq
    %v3587 = vshrl.u32 %v3586, 7
    %v3588 = vsub.s32 0, %v3587
    %v3589 = vrot.slane %v3584, %v3588
    %v3655 = vunpack.c.l.b16 %v3520
    %v3656 = vunpack.c.l.b16 %v3521
    %v3657 = vunpack.c.l.b16 %v3522
    %v3658 = vunpack.c.l.b16 %v3523
    %v3659 = vunpack.c.l.b16 %v3524
    %v3660 = vunpack.c.l.b16 %v3525
    %v3661 = vunpack.c.l.b16 %v3526
    %v3662 = vunpack.c.l.b16 %v3527
    %v3663 = vunpack.c.l.b16 %v3528
    %v3664 = vunpack.c.l.b16 %v3529
    %v3665 = vunpack.c.l.b16 %v3530
    %v3666 = vunpack.c.l.b16 %v3531
    %v3667 = vunpack.c.l.b16 %v3532
    %v3668 = vunpack.c.l.b16 %v3533
    %v3669 = vunpack.c.l.b16 %v3534
    %v3670 = vunpack.c.l.b16 %v3535
    %v3671 = vunpack.c.l.b16 %v3536
    %v3672 = vunpack.c.l.b16 %v3537
    %v3673 = vunpack.c.l.b16 %v3538
    %v3674 = vunpack.c.l.b16 %v3539
    %v3675 = vunpack.c.l.b16 %v3540
    %v3676 = vunpack.c.l.b16 %v3541
    %v3677 = vunpack.c.l.b16 %v3542
    %v3678 = vunpack.c.l.b16 %v3543
    %v3679 = vunpack.c.l.b16 %v3544
    %v3680 = vunpack.c.l.b16 %v3545
    %v3681 = vunpack.c.l.b16 %v3546
    %v3682 = vunpack.c.l.b16 %v3547
    %v3683 = vunpack.c.l.b16 %v3548
    %v3684 = vunpack.c.l.b16 %v3549
    %v3685 = vunpack.c.l.b16 %v3550
    %v3686 = vunpack.c.l.b16 %v3551
    %v3687 = vunpack.c.l.b16 %v3552
    %v3688 = vunpack.c.l.b16 %v3553
    %v3689 = vunpack.c.l.b16 %v3554
    %v3690 = vunpack.c.l.b16 %v3555
    %v3691 = vunpack.c.l.b16 %v3556
    %v3692 = vunpack.c.l.b16 %v3557
    %v3693 = vunpack.c.l.b16 %v3558
    %v3694 = vunpack.c.l.b16 %v3559
    %v3695 = vunpack.c.l.b16 %v3560
    %v3696 = vunpack.c.l.b16 %v3561
    %v3697 = vunpack.c.l.b16 %v3562
    %v3698 = vunpack.c.l.b16 %v3563
    %v3699 = vunpack.c.l.b16 %v3564
    %v3700 = vunpack.c.l.b16 %v3565
    %v3701 = vunpack.c.l.b16 %v3566
    %v3702 = vunpack.c.l.b16 %v3567
    %v3703 = vunpack.c.l.b16 %v3568
    %v3704 = vunpack.c.l.b16 %v3569
    %v3705 = vunpack.c.l.b16 %v3570
    %v3706 = vunpack.c.l.b16 %v3571
    %v3707 = vunpack.c.l.b16 %v3572
    %v3708 = vunpack.c.l.b16 %v3573
    %v3709 = vunpack.c.l.b16 %v3574
    %v3710 = vunpack.c.l.b16 %v3575
    %v3711 = vunpack.c.l.b16 %v3576
    %v3712 = vunpack.c.l.b16 %v3577
    %v3713 = vunpack.c.l.b16 %v3578
    %v3714 = vunpack.c.l.b16 %v3579
    %v3715 = vunpack.c.l.b16 %v3580
    %v3716 = vunpack.c.l.b16 %v3581
    %v3717 = vunpack.c.l.b16 %v3582
    %v3718 = vunpack.c.l.b16 %v3583
    %v3719 = vpack.c.b16 %v3656, %v3655
    %v3720 = vpack.c.b16 %v3658, %v3657
    %v3721 = vpack.c.b16 %v3660, %v3659
    %v3722 = vpack.c.b16 %v3662, %v3661
    %v3723 = vpack.c.b16 %v3664, %v3663
    %v3724 = vpack.c.b16 %v3666, %v3665
    %v3725 = vpack.c.b16 %v3668, %v3667
    %v3726 = vpack.c.b16 %v3670, %v3669
    %v3727 = vpack.c.b16 %v3672, %v3671
    %v3728 = vpack.c.b16 %v3674, %v3673
    %v3729 = vpack.c.b16 %v3676, %v3675
    %v3730 = vpack.c.b16 %v3678, %v3677
    %v3731 = vpack.c.b16 %v3680, %v3679
    %v3732 = vpack.c.b16 %v3682, %v3681
    %v3733 = vpack.c.b16 %v3684, %v3683
    %v3734 = vpack.c.b16 %v3686, %v3685
    %v3735 = vpack.c.b16 %v3688, %v3687
    %v3736 = vpack.c.b16 %v3690, %v3689
    %v3737 = vpack.c.b16 %v3692, %v3691
    %v3738 = vpack.c.b16 %v3694, %v3693
    %v3739 = vpack.c.b16 %v3696, %v3695
    %v3740 = vpack.c.b16 %v3698, %v3697
    %v3741 = vpack.c.b16 %v3700, %v3699
    %v3742 = vpack.c.b16 %v3702, %v3701
    %v3743 = vpack.c.b16 %v3704, %v3703
    %v3744 = vpack.c.b16 %v3706, %v3705
    %v3745 = vpack.c.b16 %v3708, %v3707
    %v3746 = vpack.c.b16 %v3710, %v3709
    %v3747 = vpack.c.b16 %v3712, %v3711
    %v3748 = vpack.c.b16 %v3714, %v3713
    %v3749 = vpack.c.b16 %v3716, %v3715
    %v3750 = vpack.c.b16 %v3718, %v3717
    %3783 = vmatprep.subr.bf16.mxu0 0
    %3784 = vmatpush1.bf16.msra.mxu0 %v3726
    %3785 = vmatprep.subr.bf16.mxu0 0
    %3786 = vmatpush1.bf16.msra.mxu0 %v3725
    %3787 = vmatprep.subr.bf16.mxu0 0
    %3788 = vmatpush1.bf16.msra.mxu0 %v3724
    %3789 = vmatprep.subr.bf16.mxu0 0
    %3790 = vmatpush1.bf16.msra.mxu0 %v3723
    %3791 = vmatprep.subr.bf16.mxu0 0
    %3792 = vmatpush1.bf16.msra.mxu0 %v3722
    %3793 = vmatprep.subr.bf16.mxu0 0
    %3794 = vmatpush1.bf16.msra.mxu0 %v3721
    %3795 = vmatprep.subr.bf16.mxu0 0
    %3796 = vmatpush1.bf16.msra.mxu0 %v3720
    %3797 = vmatprep.subr.bf16.mxu0 0
    %3798 = vmatpush1.bf16.msra.mxu0 %v3719
    %3799 = vmatprep.subr.bf16.mxu0 0
    %3800 = vmatpush2.bf16.msra.mxu0 %v3734
    %3801 = vmatprep.subr.bf16.mxu0 0
    %3802 = vmatpush2.bf16.msra.mxu0 %v3733
    %3803 = vmatprep.subr.bf16.mxu0 0
    %3804 = vmatpush2.bf16.msra.mxu0 %v3732
    %3805 = vmatprep.subr.bf16.mxu0 0
    %3806 = vmatpush2.bf16.msra.mxu0 %v3731
    %3807 = vmatprep.subr.bf16.mxu0 0
    %3808 = vmatpush2.bf16.msra.mxu0 %v3730
    %3809 = vmatprep.subr.bf16.mxu0 0
    %3810 = vmatpush2.bf16.msra.mxu0 %v3729
    %3811 = vmatprep.subr.bf16.mxu0 0
    %3812 = vmatpush2.bf16.msra.mxu0 %v3728
    %3813 = vmatprep.subr.bf16.mxu0 0
    %3814 = vmatpush2.bf16.msra.mxu0 %v3727
    %3815 = vmatprep.mubr.bf16.mxu0 %v3517
    %3816 = vmatmul.mubr.bf16.gmra.mxu0 %v3516
    %v3817 = vpop.f32.mrf.mxu0
    %v3818 = vadd.f32 %v3589, %v3817
    %v3819 = vpop.f32.mrf.mxu0
    %v3820 = vpop.f32.mrf.mxu0
    %v3821 = vpop.f32.mrf.mxu0
    %3822 = vdwg.mxu0
    %3823 = vmatprep.subr.bf16.mxu0 0
    %3824 = vmatpush1.bf16.msra.mxu0 %v3742
    %3825 = vmatprep.subr.bf16.mxu0 0
    %3826 = vmatpush1.bf16.msra.mxu0 %v3741
    %3827 = vmatprep.subr.bf16.mxu0 0
    %3828 = vmatpush1.bf16.msra.mxu0 %v3740
    %3829 = vmatprep.subr.bf16.mxu0 0
    %3830 = vmatpush1.bf16.msra.mxu0 %v3739
    %3831 = vmatprep.subr.bf16.mxu0 0
    %3832 = vmatpush1.bf16.msra.mxu0 %v3738
    %3833 = vmatprep.subr.bf16.mxu0 0
    %3834 = vmatpush1.bf16.msra.mxu0 %v3737
    %3835 = vmatprep.subr.bf16.mxu0 0
    %3836 = vmatpush1.bf16.msra.mxu0 %v3736
    %3837 = vmatprep.subr.bf16.mxu0 0
    %3838 = vmatpush1.bf16.msra.mxu0 %v3735
    %3839 = vmatprep.subr.bf16.mxu0 0
    %3840 = vmatpush2.bf16.msra.mxu0 %v3750
    %3841 = vmatprep.subr.bf16.mxu0 0
    %3842 = vmatpush2.bf16.msra.mxu0 %v3749
    %3843 = vmatprep.subr.bf16.mxu0 0
    %3844 = vmatpush2.bf16.msra.mxu0 %v3748
    %3845 = vmatprep.subr.bf16.mxu0 0
    %3846 = vmatpush2.bf16.msra.mxu0 %v3747
    %3847 = vmatprep.subr.bf16.mxu0 0
    %3848 = vmatpush2.bf16.msra.mxu0 %v3746
    %3849 = vmatprep.subr.bf16.mxu0 0
    %3850 = vmatpush2.bf16.msra.mxu0 %v3745
    %3851 = vmatprep.subr.bf16.mxu0 0
    %3852 = vmatpush2.bf16.msra.mxu0 %v3744
    %3853 = vmatprep.subr.bf16.mxu0 0
    %3854 = vmatpush2.bf16.msra.mxu0 %v3743
    %3855 = vmatprep.mubr.bf16.mxu0 %v3519
    %3856 = vmatmul.mubr.bf16.gmra.mxu0 %v3518
    %v3857 = vpop.f32.mrf.mxu0
    %v3858 = vadd.f32 %v3818, %v3857
    %v3859 = vpop.f32.mrf.mxu0
    %v3860 = vpop.f32.mrf.mxu0
    %v3861 = vpop.f32.mrf.mxu0
    %3862 = vdwg.mxu0
    %3863 = vst [vmem:[#allocation8] sm:$0xff] %v3858
    // Predicated region
    $region58: #{tpu_custom_call.1} parent=1 // pred_check
      _
    $region59: #{tpu_custom_call.1} parent=1 // pred_check_branch
      %3865 = sbr.rel (0) target = $region61
    $region60: #{tpu_custom_call.1} parent=1 // pred_region
      %s3867 = ssub.s32 128, 128
      %3868 = vsyncadd [#allocation4], %s3867
      %s3870 = sshll.u32 [#allocation8], 4
      %s3871 = int_to_ptr.vmem [resolvable:$true] %s3870
      %3873 = dma.vmem_to_hbm [thread:$0]  %s3871, 128, %s11, [#allocation4]
    $region61: #{tpu_custom_call.1} parent=1 // pred_fallthru
      _
    // Predicated region
    $region62: #{tpu_custom_call.1} parent=1 // pred_check
      _
    $region63: #{tpu_custom_call.1} parent=1 // pred_check_branch
      %3875 = sbr.rel (0) target = $region65
    $region64: #{tpu_custom_call.1} parent=1 // pred_region
      %3876 = dma.done [#allocation4], 128
    $region65: #{tpu_custom_call.1} parent=1 // pred_fallthru
      _
    %3877 = vsyncpa [#allocation3], 1
    %3878 = vsyncpa [#allocation6], 1
    %3879 = vsyncpa [#allocation4], 1

</llo_original>
